<compile_context>
chip_gen: v7x
topology: tpu7x:2x2x1
jax: 0.10.0
libtpu: 0.0.40
codegen_flags: <defaults>
</compile_context>

<pallas_src>
import jax
import jax.numpy as jnp
from jax import lax
from jax.experimental import pallas as pl
from jax.experimental.pallas import tpu as pltpu

LANE = 128      # vreg lane width
SUBLANE = 8     # vreg sublane count


def _round_up(n, m):
    return ((n + m - 1) // m) * m


def _pad2(a, rows, cols, dtype=jnp.float32):
    """Zero-pad a 2-D array up to (rows, cols) in the given dtype (zero fill is exact)."""
    out = jnp.zeros((rows, cols), dtype)
    return out.at[: a.shape[0], : a.shape[1]].set(a.astype(dtype))


# --------------------------------- kernel ------------------------------------ #
def _build_kernel(S, B_shard, H_pad, DH_pad, Tc):
    """One grid step = one (batch_shard, layer) pair.

    Ref order: x, wi, wh, bi, bhn, w_out, b_out, out, seq_scr, xproj_scr.
      x      (S*B_shard, DH_pad)      bf16  time-major rows: row = t*B_shard + b_local
      wi     (DH_pad, 3*H_pad)        bf16  [r | z | n] columns, zero-padded rows
      wh     (H_pad, 3*H_pad)         bf16
      bi     (1, 3*H_pad)             f32   (b_ir+b_hr | b_iz+b_hz | b_in)
      bhn    (1, H_pad)               f32
      seq    (S*B_shard, DH_pad)      bf16  layer input / output (updated in place)
      xproj  (2, Tc*B_shard, 3*H_pad) f32   2-slot chunked input projection
    """
    G = H_pad
    nc = -(-S // Tc)                                # number of time chunks (static)
    chunk_len = [min(Tc, S - c * Tc) for c in range(nc)]

    def kernel(x_ref, wi_ref, wh_ref, bi_ref, bhn_ref, wout_ref, bout_ref,
               out_ref, seq_ref, xproj_ref):
        layer = pl.program_id(1)
        n_layer = pl.num_programs(1)

        # Hoisted once per layer (off the serial critical path).
        bhn = jnp.broadcast_to(bhn_ref[...], (B_shard, G))

        # Layer 0 reads the padded input; deeper layers read the previous layer's hidden
        # sequence.  Both live in seq_ref so the projection below is layer-uniform.
        # (Stale x columns beyond H_pad are killed by the zero rows of deeper-layer W_i.)
        @pl.when(layer == 0)
        def _():
            seq_ref[...] = x_ref[...]

        def project(c):
            # Hoisted input projection for time-chunk c -> slot c % 2.  One big MXU
            # matmul per chunk, independent of the h-dependence chain.
            rows = chunk_len[c] * B_shard
            src = seq_ref[pl.ds(c * Tc * B_shard, rows), :]
            xproj_ref[c % 2, pl.ds(0, rows), :] = (
                jnp.dot(src, wi_ref[...], preferred_element_type=jnp.float32)
                + bi_ref[...])

        # Prime chunk 0; inside the loop, chunk c+1's projection is issued before the
        # recurrence of chunk c.  It reads seq rows of chunk c+1 strictly before the
        # recurrence overwrites them (WAR-safe), and only touches xproj slot (c+1)%2
        # while the recurrence reads slot c%2.
        project(0)
        h = jnp.zeros((B_shard, G), jnp.float32)

        for c in range(nc):                          # static chunk loop
            if c + 1 < nc:
                project(c + 1)
            slot = c % 2
            seq_base = c * Tc * B_shard

            def step(t, h_prev, slot=slot, seq_base=seq_base):
                row = t * B_shard
                if not isinstance(row, int):
                    row = pl.multiple_of(row, SUBLANE)
                xp = xproj_ref[slot, pl.ds(row, B_shard), :]             # (B, 3H) f32
                hp = jnp.dot(h_prev.astype(jnp.bfloat16), wh_ref[...],
                             preferred_element_type=jnp.float32)         # (B, 3H) f32
                r = jax.nn.sigmoid(xp[:, :G] + hp[:, :G])
                z = jax.nn.sigmoid(xp[:, G:2 * G] + hp[:, G:2 * G])
                n = jnp.tanh(xp[:, 2 * G:] + r * (hp[:, 2 * G:] + bhn))
                h_new = (1.0 - z) * n + z * h_prev
                srow = seq_base + row
                if not isinstance(srow, int):
                    srow = pl.multiple_of(srow, SUBLANE)
                seq_ref[pl.ds(srow, B_shard), :G] = h_new.astype(jnp.bfloat16)
                return h_new

            clen = chunk_len[c]
            if clen <= 16:
                for t in range(clen):                # fully static unroll
                    h = step(t, h)
            else:
                h = lax.fori_loop(0, clen, step, h, unroll=8)

        # Final Linear on the last layer's h_T (Dropout is eval-mode identity).
        @pl.when(layer == n_layer - 1)
        def _():
            out_ref[...] = (jnp.dot(h.astype(jnp.bfloat16), wout_ref[...],
                                    preferred_element_type=jnp.float32)
                            + bout_ref[...]).astype(out_ref.dtype)

    return kernel


# ------------------------------ param handling ------------------------------- #
def init_params(key, input_dim, hidden_dim, num_layers, output_dim):
    """PyTorch-layout params: per layer w_ih (3H, D_in), w_hh (3H, H), b_ih (3H,),
    b_hh (3H,) with gate order [r, z, n]; Linear weight (O, H) and bias (O,)."""
    H = hidden_dim
    bound = 1.0 / (H ** 0.5)
    layers = []
    for l in range(num_layers):
        d_in = input_dim if l == 0 else hidden_dim
        key, k1, k2, k3, k4 = jax.random.split(key, 5)
        w_ih = jax.random.uniform(k1, (3 * H, d_in), jnp.float32, -bound, bound)
        w_hh = jax.random.uniform(k2, (3 * H, H), jnp.float32, -bound, bound)
        b_ih = jax.random.uniform(k3, (3 * H,), jnp.float32, -bound, bound)
        b_hh = jax.random.uniform(k4, (3 * H,), jnp.float32, -bound, bound)
        layers.append((w_ih, w_hh, b_ih, b_hh))
    key, kw, kb = jax.random.split(key, 3)
    w_out = jax.random.uniform(kw, (output_dim, H), jnp.float32, -bound, bound)
    b_out = jax.random.uniform(kb, (output_dim,), jnp.float32, -bound, bound)
    return {"layers": layers, "w_out": w_out, "b_out": b_out}


def _pack_layer(w_ih, w_hh, b_ih, b_hh, DH_pad, H_pad):
    """Fuse gates (r,z,n) into lane-padded bf16 W_i (DH_pad, 3H_pad), W_h (H_pad, 3H_pad);
    fold r/z biases + b_in into one f32 projection bias; keep b_hn separate."""
    H = w_hh.shape[1]
    wir, wiz, win = w_ih[:H], w_ih[H:2 * H], w_ih[2 * H:]
    whr, whz, whn = w_hh[:H], w_hh[H:2 * H], w_hh[2 * H:]
    bir, biz, bin_ = b_ih[:H], b_ih[H:2 * H], b_ih[2 * H:]
    bhr, bhz, bhn = b_hh[:H], b_hh[H:2 * H], b_hh[2 * H:]
    bf = jnp.bfloat16
    wi = jnp.concatenate([_pad2(wir.T, DH_pad, H_pad, bf),
                          _pad2(wiz.T, DH_pad, H_pad, bf),
                          _pad2(win.T, DH_pad, H_pad, bf)], axis=1)
    wh = jnp.concatenate([_pad2(whr.T, H_pad, H_pad, bf),
                          _pad2(whz.T, H_pad, H_pad, bf),
                          _pad2(whn.T, H_pad, H_pad, bf)], axis=1)
    bi = jnp.concatenate([_pad2((bir + bhr)[None, :], 1, H_pad),
                          _pad2((biz + bhz)[None, :], 1, H_pad),
                          _pad2(bin_[None, :], 1, H_pad)], axis=1)
    bhn_p = _pad2(bhn[None, :], 1, H_pad)
    return wi, wh, bi, bhn_p


# ------------------------------ model forward -------------------------------- #
@jax.jit
def gru_model_forward(x, params):
    """x: (B, S, input_dim), batch_first.  Returns (B, output_dim)."""
    B, S, D = x.shape
    num_layers = len(params["layers"])
    H = params["layers"][0][1].shape[1]
    O = params["w_out"].shape[0]

    H_pad = _round_up(H, LANE)
    DH_pad = max(_round_up(D, LANE), H_pad)      # uniform layer-input width
    O_pad = _round_up(O, LANE)

    B_pad = _round_up(max(B, SUBLANE), SUBLANE)
    n_bshards = 2 if B_pad >= 2 * SUBLANE else 1  # feed both v7x TensorCores for B >= 16
    if n_bshards == 2:
        B_pad = _round_up(B_pad, 2 * SUBLANE)
    B_shard = B_pad // n_bshards

    Tc = min(S, 32)                               # time-chunk length

    # --- pack weights (bf16 MXU inputs, f32 biases), stacked per layer for streaming.
    wi_l, wh_l, bi_l, bhn_l = [], [], [], []
    for (w_ih, w_hh, b_ih, b_hh) in params["layers"]:
        wi, wh, bi, bhn = _pack_layer(w_ih, w_hh, b_ih, b_hh, DH_pad, H_pad)
        wi_l.append(wi); wh_l.append(wh); bi_l.append(bi); bhn_l.append(bhn)
    wi_s = jnp.stack(wi_l)                        # (L, DH_pad, 3H_pad) bf16
    wh_s = jnp.stack(wh_l)                        # (L, H_pad, 3H_pad)  bf16
    bi_s = jnp.stack(bi_l)                        # (L, 1, 3H_pad)      f32
    bhn_s = jnp.stack(bhn_l)                      # (L, 1, H_pad)       f32
    w_out = _pad2(params["w_out"].T, H_pad, O_pad, jnp.bfloat16)
    b_out = _pad2(params["b_out"][None, :], 1, O_pad)

    # --- input: time-major, padded, batch-sharded, 2-D rows (row = t*B_shard + b_local).
    # (Under jit this pad/transpose chain fuses; bf16 halves the resident x block.)
    x_tm = jnp.zeros((S, B_pad, DH_pad), jnp.float32).at[:, :B, :D].set(
        jnp.transpose(x, (1, 0, 2)).astype(jnp.float32))
    x2 = (x_tm.reshape(S, n_bshards, B_shard, DH_pad)
              .transpose(1, 0, 2, 3)
              .reshape(n_bshards, S * B_shard, DH_pad)
              .astype(jnp.bfloat16))

    # --- scoped-VMEM limit sized from the actual resident set (double-buffered inputs).
    resident = (
        2 * S * B_shard * DH_pad * 2                 # x block (bf16, 2 buffers)
        + 2 * DH_pad * 3 * H_pad * 2                 # W_i (2 layers in flight)
        + 2 * H_pad * 3 * H_pad * 2                  # W_h
        + 2 * 4 * H_pad * 4 + 2 * O_pad * 4          # biases
        + 2 * H_pad * O_pad * 2                      # W_out
        + 2 * B_shard * O_pad * 4                    # out block
        + S * B_shard * DH_pad * 2                   # seq scratch (bf16)
        + 2 * Tc * B_shard * 3 * H_pad * 4           # xproj scratch (2 slots, f32)
    )
    vmem_limit = int(min(max(resident * 5 // 4, 32 << 20), 112 << 20))

    kernel = _build_kernel(S, B_shard, H_pad, DH_pad, Tc)
    grid_spec = pltpu.PrefetchScalarGridSpec(
        num_scalar_prefetch=0,
        grid=(n_bshards, num_layers),                # layers innermost (serial carry in seq)
        in_specs=[
            pl.BlockSpec((None, S * B_shard, DH_pad), lambda b, l: (b, 0, 0)),   # x
            pl.BlockSpec((None, DH_pad, 3 * H_pad), lambda b, l: (l, 0, 0)),      # W_i[l]
            pl.BlockSpec((None, H_pad, 3 * H_pad), lambda b, l: (l, 0, 0)),       # W_h[l]
            pl.BlockSpec((None, 1, 3 * H_pad), lambda b, l: (l, 0, 0)),           # b_i[l]
            pl.BlockSpec((None, 1, H_pad), lambda b, l: (l, 0, 0)),               # b_hn[l]
            pl.BlockSpec((H_pad, O_pad), lambda b, l: (0, 0)),                    # W_out
            pl.BlockSpec((1, O_pad), lambda b, l: (0, 0)),                        # b_out
        ],
        out_specs=pl.BlockSpec((None, B_shard, O_pad), lambda b, l: (b, 0, 0)),
        scratch_shapes=[
            pltpu.VMEM((S * B_shard, DH_pad), jnp.bfloat16),          # seq (inter-layer)
            pltpu.VMEM((2, Tc * B_shard, 3 * H_pad), jnp.float32),    # xproj, 2 slots
        ],
    )
    y_pad = pl.pallas_call(
        kernel,
        grid_spec=grid_spec,
        out_shape=jax.ShapeDtypeStruct((n_bshards, B_shard, O_pad), jnp.float32),
        compiler_params=pltpu.CompilerParams(
            dimension_semantics=("parallel", "arbitrary"),
            vmem_limit_bytes=vmem_limit),
    )(x2, wi_s, wh_s, bi_s, bhn_s, w_out, b_out)
    return y_pad.reshape(B_pad, O_pad)[:B, :O]


# ----------------------------- pure-JAX reference ---------------------------- #
def gru_reference(x, params):
    seq = x.astype(jnp.float32)
    for (w_ih, w_hh, b_ih, b_hh) in params["layers"]:
        H = w_hh.shape[1]

        def cell(h, x_t):
            gi = x_t @ w_ih.T + b_ih
            gh = h @ w_hh.T + b_hh
            ir, iz, in_ = jnp.split(gi, 3, axis=-1)
            hr, hz, hn = jnp.split(gh, 3, axis=-1)
            r = jax.nn.sigmoid(ir + hr)
            z = jax.nn.sigmoid(iz + hz)
            n = jnp.tanh(in_ + r * hn)
            h_new = (1.0 - z) * n + z * h
            return h_new, h_new

        h0 = jnp.zeros((x.shape[0], H), jnp.float32)
        _, hs = jax.lax.scan(cell, h0, jnp.transpose(seq, (1, 0, 2)))
        seq = jnp.transpose(hs, (1, 0, 2))
    return seq[:, -1, :] @ params["w_out"].T + params["b_out"]


if __name__ == "__main__":
    batch, seq_len, input_dim = 2, 8, 16
    hidden_dim, num_layers, output_dim = 32, 2, 4

    key = jax.random.PRNGKey(0)
    key, kx = jax.random.split(key)
    x = jax.random.normal(kx, (batch, seq_len, input_dim), jnp.float32)
    params = init_params(key, input_dim, hidden_dim, num_layers, output_dim)

    y = gru_model_forward(x, params)
    y = jax.block_until_ready(y)
    assert y.shape == (batch, output_dim), y.shape
    assert bool(jnp.all(jnp.isfinite(y)))

    # Check against a pure-f32 reference.  Tolerance derived from bf16 dot inputs
    # (~0.2% per element, RSS over <=32-term dots, 2 layers, 8 steps => ~1e-2 worst),
    # tighter than the previous 5e-2 while leaving margin.
    y_ref = gru_reference(x, params)
    err = float(jnp.max(jnp.abs(y - y_ref)))
    assert bool(jnp.allclose(y, y_ref, rtol=3e-2, atol=3e-2)), err

    print("KERNEL_OK")
</pallas_src>

<mosaic_0001>
module attributes {stable_mosaic.version = 11 : i64} {
  func.func @kernel(%arg0: i32, %arg1: i32, %arg2: memref<1x64x128xbf16, #tpu.memory_space<vmem>>, %arg3: memref<1x128x384xbf16, #tpu.memory_space<vmem>>, %arg4: memref<1x128x384xbf16, #tpu.memory_space<vmem>>, %arg5: memref<1x1x384xf32, #tpu.memory_space<vmem>>, %arg6: memref<1x1x128xf32, #tpu.memory_space<vmem>>, %arg7: memref<128x128xbf16, #tpu.memory_space<vmem>>, %arg8: memref<1x128xf32, #tpu.memory_space<vmem>>, %arg9: memref<1x8x128xf32, #tpu.memory_space<vmem>>, %arg10: memref<64x128xbf16, #tpu.memory_space<vmem>>, %arg11: memref<2x64x384xf32, #tpu.memory_space<vmem>>) attributes {dimension_semantics = [#tpu.dimension_semantics<parallel>, #tpu.dimension_semantics<arbitrary>], iteration_bounds = array<i64: 1, 2>, scalar_prefetch = 0 : i64, scratch_operands = 2 : i64, tpu.core_type = #tpu.core_type<tc>, window_params = [{transform_indices = @transform_0, window_bounds = array<i64: 1, 64, 128>}, {transform_indices = @transform_1, window_bounds = array<i64: 1, 128, 384>}, {transform_indices = @transform_2, window_bounds = array<i64: 1, 128, 384>}, {transform_indices = @transform_3, window_bounds = array<i64: 1, 1, 384>}, {transform_indices = @transform_4, window_bounds = array<i64: 1, 1, 128>}, {pipeline_mode = #tpu.pipeline_mode<synchronous>, transform_indices = @transform_5, window_bounds = array<i64: 128, 128>}, {pipeline_mode = #tpu.pipeline_mode<synchronous>, transform_indices = @transform_6, window_bounds = array<i64: 1, 128>}, {transform_indices = @transform_7, window_bounds = array<i64: 1, 8, 128>}]} {
    %c0 = arith.constant 0 : index
    %c0_0 = arith.constant 0 : index
    %c0_1 = arith.constant 0 : index
    %0 = vector.load %arg6[%c0, %c0_0, %c0_1] : memref<1x1x128xf32, #tpu.memory_space<vmem>>, vector<1x1x128xf32>
    %1 = vector.shape_cast %0 : vector<1x1x128xf32> to vector<1x128xf32>
    %2 = vector.shape_cast %1 : vector<1x128xf32> to vector<1x128xf32>
    %3 = vector.broadcast %2 : vector<1x128xf32> to vector<8x128xf32>
    %c0_i32 = arith.constant 0 : i32
    %4 = arith.cmpi eq, %arg1, %c0_i32 : i32
    %5 = arith.extui %4 : i1 to i32
    %c0_i32_2 = arith.constant 0 : i32
    %6 = arith.cmpi ne, %5, %c0_i32_2 : i32
    scf.if %6 {
      %c0_105 = arith.constant 0 : index
      %c0_106 = arith.constant 0 : index
      %c0_107 = arith.constant 0 : index
      %302 = vector.load %arg2[%c0_105, %c0_106, %c0_107] : memref<1x64x128xbf16, #tpu.memory_space<vmem>>, vector<1x64x128xbf16>
      %303 = vector.shape_cast %302 : vector<1x64x128xbf16> to vector<64x128xbf16>
      %c0_108 = arith.constant 0 : index
      %c0_109 = arith.constant 0 : index
      %304 = vector.load %arg10[%c0_108, %c0_109] : memref<64x128xbf16, #tpu.memory_space<vmem>>, vector<64x128xbf16>
      tpu.vector_store %arg10[%c0_108, %c0_109], %303 {strides = array<i32>} : memref<64x128xbf16, #tpu.memory_space<vmem>>, vector<64x128xbf16>,
    } else {
    }
    %c0_3 = arith.constant 0 : index
    %c0_4 = arith.constant 0 : index
    %7 = vector.load %arg10[%c0_3, %c0_4] : memref<64x128xbf16, #tpu.memory_space<vmem>>, vector<64x128xbf16>
    %c0_5 = arith.constant 0 : index
    %c0_6 = arith.constant 0 : index
    %c0_7 = arith.constant 0 : index
    %8 = vector.load %arg3[%c0_5, %c0_6, %c0_7] : memref<1x128x384xbf16, #tpu.memory_space<vmem>>, vector<1x128x384xbf16>
    %9 = vector.shape_cast %8 : vector<1x128x384xbf16> to vector<128x384xbf16>
    %cst = arith.constant dense<0.000000e+00> : vector<64x384xf32>
    %10 = tpu.matmul %7, %9, %cst {dimension_numbers = #tpu.dot_dimension_numbers<[1], [0], [0], [1], [0, 0, 1, 1], [], []>} : vector<64x128xbf16>, vector<128x384xbf16>, vector<64x384xf32> -> vector<64x384xf32>
    %c0_8 = arith.constant 0 : index
    %c0_9 = arith.constant 0 : index
    %c0_10 = arith.constant 0 : index
    %11 = vector.load %arg5[%c0_8, %c0_9, %c0_10] : memref<1x1x384xf32, #tpu.memory_space<vmem>>, vector<1x1x384xf32>
    %12 = vector.shape_cast %11 : vector<1x1x384xf32> to vector<1x384xf32>
    %13 = vector.broadcast %12 : vector<1x384xf32> to vector<64x384xf32>
    %14 = arith.addf %10, %13 : vector<64x384xf32>
    %c0_11 = arith.constant 0 : index
    %c0_12 = arith.constant 0 : index
    %c0_13 = arith.constant 0 : index
    %15 = vector.load %arg11[%c0_11, %c0_12, %c0_13] : memref<2x64x384xf32, #tpu.memory_space<vmem>>, vector<1x64x384xf32>
    %16 = vector.shape_cast %15 : vector<1x64x384xf32> to vector<64x384xf32>
    %17 = vector.shape_cast %14 : vector<64x384xf32> to vector<1x64x384xf32>
    tpu.vector_store %arg11[%c0_11, %c0_12, %c0_13], %17 {strides = array<i32>} : memref<2x64x384xf32, #tpu.memory_space<vmem>>, vector<1x64x384xf32>,
    %cst_14 = arith.constant 0.000000e+00 : f32
    %18 = vector.broadcast %cst_14 : f32 to vector<8x128xf32>
    %c0_15 = arith.constant 0 : index
    %c0_16 = arith.constant 0 : index
    %c0_17 = arith.constant 0 : index
    %19 = vector.load %arg11[%c0_15, %c0_16, %c0_17] : memref<2x64x384xf32, #tpu.memory_space<vmem>>, vector<1x8x384xf32>
    %20 = vector.shape_cast %19 : vector<1x8x384xf32> to vector<8x384xf32>
    %21 = arith.truncf %18 : vector<8x128xf32> to vector<8x128xbf16>
    %c0_18 = arith.constant 0 : index
    %c0_19 = arith.constant 0 : index
    %c0_20 = arith.constant 0 : index
    %22 = vector.load %arg4[%c0_18, %c0_19, %c0_20] : memref<1x128x384xbf16, #tpu.memory_space<vmem>>, vector<1x128x384xbf16>
    %23 = vector.shape_cast %22 : vector<1x128x384xbf16> to vector<128x384xbf16>
    %cst_21 = arith.constant dense<0.000000e+00> : vector<8x384xf32>
    %24 = tpu.matmul %21, %23, %cst_21 {dimension_numbers = #tpu.dot_dimension_numbers<[1], [0], [0], [1], [0, 0, 1, 1], [], []>} : vector<8x128xbf16>, vector<128x384xbf16>, vector<8x384xf32> -> vector<8x384xf32>
    %25 = vector.extract_strided_slice %20 {offsets = [0, 0], sizes = [8, 128], strides = [1, 1]} : vector<8x384xf32> to vector<8x128xf32>
    %26 = vector.extract_strided_slice %24 {offsets = [0, 0], sizes = [8, 128], strides = [1, 1]} : vector<8x384xf32> to vector<8x128xf32>
    %27 = arith.addf %25, %26 : vector<8x128xf32>
    %28 = arith.negf %27 : vector<8x128xf32>
    %29 = math.exp %28 : vector<8x128xf32>
    %cst_22 = arith.constant 1.000000e+00 : f32
    %30 = vector.broadcast %cst_22 : f32 to vector<8x128xf32>
    %31 = arith.addf %30, %29 : vector<8x128xf32>
    %32 = arith.divf %30, %31 : vector<8x128xf32>
    %33 = vector.extract_strided_slice %20 {offsets = [0, 128], sizes = [8, 128], strides = [1, 1]} : vector<8x384xf32> to vector<8x128xf32>
    %34 = vector.extract_strided_slice %24 {offsets = [0, 128], sizes = [8, 128], strides = [1, 1]} : vector<8x384xf32> to vector<8x128xf32>
    %35 = arith.addf %33, %34 : vector<8x128xf32>
    %36 = arith.negf %35 : vector<8x128xf32>
    %37 = math.exp %36 : vector<8x128xf32>
    %cst_23 = arith.constant 1.000000e+00 : f32
    %38 = vector.broadcast %cst_23 : f32 to vector<8x128xf32>
    %39 = arith.addf %38, %37 : vector<8x128xf32>
    %40 = arith.divf %38, %39 : vector<8x128xf32>
    %41 = vector.extract_strided_slice %20 {offsets = [0, 256], sizes = [8, 128], strides = [1, 1]} : vector<8x384xf32> to vector<8x128xf32>
    %42 = vector.extract_strided_slice %24 {offsets = [0, 256], sizes = [8, 128], strides = [1, 1]} : vector<8x384xf32> to vector<8x128xf32>
    %43 = arith.addf %42, %3 : vector<8x128xf32>
    %44 = arith.mulf %32, %43 : vector<8x128xf32>
    %45 = arith.addf %41, %44 : vector<8x128xf32>
    %46 = math.tanh %45 : vector<8x128xf32>
    %cst_24 = arith.constant 1.000000e+00 : f32
    %47 = vector.broadcast %cst_24 : f32 to vector<8x128xf32>
    %48 = arith.subf %47, %40 : vector<8x128xf32>
    %49 = arith.mulf %48, %46 : vector<8x128xf32>
    %50 = arith.mulf %40, %18 : vector<8x128xf32>
    %51 = arith.addf %49, %50 : vector<8x128xf32>
    %52 = arith.truncf %51 : vector<8x128xf32> to vector<8x128xbf16>
    %c0_25 = arith.constant 0 : index
    %c0_26 = arith.constant 0 : index
    %53 = vector.load %arg10[%c0_25, %c0_26] : memref<64x128xbf16, #tpu.memory_space<vmem>>, vector<8x128xbf16>
    tpu.vector_store %arg10[%c0_25, %c0_26], %52 {strides = array<i32>} : memref<64x128xbf16, #tpu.memory_space<vmem>>, vector<8x128xbf16>,
    %c0_27 = arith.constant 0 : index
    %c8 = arith.constant 8 : index
    %c0_28 = arith.constant 0 : index
    %54 = vector.load %arg11[%c0_27, %c8, %c0_28] : memref<2x64x384xf32, #tpu.memory_space<vmem>>, vector<1x8x384xf32>
    %55 = vector.shape_cast %54 : vector<1x8x384xf32> to vector<8x384xf32>
    %56 = arith.truncf %51 : vector<8x128xf32> to vector<8x128xbf16>
    %c0_29 = arith.constant 0 : index
    %c0_30 = arith.constant 0 : index
    %c0_31 = arith.constant 0 : index
    %57 = vector.load %arg4[%c0_29, %c0_30, %c0_31] : memref<1x128x384xbf16, #tpu.memory_space<vmem>>, vector<1x128x384xbf16>
    %58 = vector.shape_cast %57 : vector<1x128x384xbf16> to vector<128x384xbf16>
    %cst_32 = arith.constant dense<0.000000e+00> : vector<8x384xf32>
    %59 = tpu.matmul %56, %58, %cst_32 {dimension_numbers = #tpu.dot_dimension_numbers<[1], [0], [0], [1], [0, 0, 1, 1], [], []>} : vector<8x128xbf16>, vector<128x384xbf16>, vector<8x384xf32> -> vector<8x384xf32>
    %60 = vector.extract_strided_slice %55 {offsets = [0, 0], sizes = [8, 128], strides = [1, 1]} : vector<8x384xf32> to vector<8x128xf32>
    %61 = vector.extract_strided_slice %59 {offsets = [0, 0], sizes = [8, 128], strides = [1, 1]} : vector<8x384xf32> to vector<8x128xf32>
    %62 = arith.addf %60, %61 : vector<8x128xf32>
    %63 = arith.negf %62 : vector<8x128xf32>
    %64 = math.exp %63 : vector<8x128xf32>
    %cst_33 = arith.constant 1.000000e+00 : f32
    %65 = vector.broadcast %cst_33 : f32 to vector<8x128xf32>
    %66 = arith.addf %65, %64 : vector<8x128xf32>
    %67 = arith.divf %65, %66 : vector<8x128xf32>
    %68 = vector.extract_strided_slice %55 {offsets = [0, 128], sizes = [8, 128], strides = [1, 1]} : vector<8x384xf32> to vector<8x128xf32>
    %69 = vector.extract_strided_slice %59 {offsets = [0, 128], sizes = [8, 128], strides = [1, 1]} : vector<8x384xf32> to vector<8x128xf32>
    %70 = arith.addf %68, %69 : vector<8x128xf32>
    %71 = arith.negf %70 : vector<8x128xf32>
    %72 = math.exp %71 : vector<8x128xf32>
    %cst_34 = arith.constant 1.000000e+00 : f32
    %73 = vector.broadcast %cst_34 : f32 to vector<8x128xf32>
    %74 = arith.addf %73, %72 : vector<8x128xf32>
    %75 = arith.divf %73, %74 : vector<8x128xf32>
    %76 = vector.extract_strided_slice %55 {offsets = [0, 256], sizes = [8, 128], strides = [1, 1]} : vector<8x384xf32> to vector<8x128xf32>
    %77 = vector.extract_strided_slice %59 {offsets = [0, 256], sizes = [8, 128], strides = [1, 1]} : vector<8x384xf32> to vector<8x128xf32>
    %78 = arith.addf %77, %3 : vector<8x128xf32>
    %79 = arith.mulf %67, %78 : vector<8x128xf32>
    %80 = arith.addf %76, %79 : vector<8x128xf32>
    %81 = math.tanh %80 : vector<8x128xf32>
    %cst_35 = arith.constant 1.000000e+00 : f32
    %82 = vector.broadcast %cst_35 : f32 to vector<8x128xf32>
    %83 = arith.subf %82, %75 : vector<8x128xf32>
    %84 = arith.mulf %83, %81 : vector<8x128xf32>
    %85 = arith.mulf %75, %51 : vector<8x128xf32>
    %86 = arith.addf %84, %85 : vector<8x128xf32>
    %87 = arith.truncf %86 : vector<8x128xf32> to vector<8x128xbf16>
    %c8_36 = arith.constant 8 : index
    %c0_37 = arith.constant 0 : index
    %88 = vector.load %arg10[%c8_36, %c0_37] : memref<64x128xbf16, #tpu.memory_space<vmem>>, vector<8x128xbf16>
    tpu.vector_store %arg10[%c8_36, %c0_37], %87 {strides = array<i32>} : memref<64x128xbf16, #tpu.memory_space<vmem>>, vector<8x128xbf16>,
    %c0_38 = arith.constant 0 : index
    %c16 = arith.constant 16 : index
    %c0_39 = arith.constant 0 : index
    %89 = vector.load %arg11[%c0_38, %c16, %c0_39] : memref<2x64x384xf32, #tpu.memory_space<vmem>>, vector<1x8x384xf32>
    %90 = vector.shape_cast %89 : vector<1x8x384xf32> to vector<8x384xf32>
    %91 = arith.truncf %86 : vector<8x128xf32> to vector<8x128xbf16>
    %c0_40 = arith.constant 0 : index
    %c0_41 = arith.constant 0 : index
    %c0_42 = arith.constant 0 : index
    %92 = vector.load %arg4[%c0_40, %c0_41, %c0_42] : memref<1x128x384xbf16, #tpu.memory_space<vmem>>, vector<1x128x384xbf16>
    %93 = vector.shape_cast %92 : vector<1x128x384xbf16> to vector<128x384xbf16>
    %cst_43 = arith.constant dense<0.000000e+00> : vector<8x384xf32>
    %94 = tpu.matmul %91, %93, %cst_43 {dimension_numbers = #tpu.dot_dimension_numbers<[1], [0], [0], [1], [0, 0, 1, 1], [], []>} : vector<8x128xbf16>, vector<128x384xbf16>, vector<8x384xf32> -> vector<8x384xf32>
    %95 = vector.extract_strided_slice %90 {offsets = [0, 0], sizes = [8, 128], strides = [1, 1]} : vector<8x384xf32> to vector<8x128xf32>
    %96 = vector.extract_strided_slice %94 {offsets = [0, 0], sizes = [8, 128], strides = [1, 1]} : vector<8x384xf32> to vector<8x128xf32>
    %97 = arith.addf %95, %96 : vector<8x128xf32>
    %98 = arith.negf %97 : vector<8x128xf32>
    %99 = math.exp %98 : vector<8x128xf32>
    %cst_44 = arith.constant 1.000000e+00 : f32
    %100 = vector.broadcast %cst_44 : f32 to vector<8x128xf32>
    %101 = arith.addf %100, %99 : vector<8x128xf32>
    %102 = arith.divf %100, %101 : vector<8x128xf32>
    %103 = vector.extract_strided_slice %90 {offsets = [0, 128], sizes = [8, 128], strides = [1, 1]} : vector<8x384xf32> to vector<8x128xf32>
    %104 = vector.extract_strided_slice %94 {offsets = [0, 128], sizes = [8, 128], strides = [1, 1]} : vector<8x384xf32> to vector<8x128xf32>
    %105 = arith.addf %103, %104 : vector<8x128xf32>
    %106 = arith.negf %105 : vector<8x128xf32>
    %107 = math.exp %106 : vector<8x128xf32>
    %cst_45 = arith.constant 1.000000e+00 : f32
    %108 = vector.broadcast %cst_45 : f32 to vector<8x128xf32>
    %109 = arith.addf %108, %107 : vector<8x128xf32>
    %110 = arith.divf %108, %109 : vector<8x128xf32>
    %111 = vector.extract_strided_slice %90 {offsets = [0, 256], sizes = [8, 128], strides = [1, 1]} : vector<8x384xf32> to vector<8x128xf32>
    %112 = vector.extract_strided_slice %94 {offsets = [0, 256], sizes = [8, 128], strides = [1, 1]} : vector<8x384xf32> to vector<8x128xf32>
    %113 = arith.addf %112, %3 : vector<8x128xf32>
    %114 = arith.mulf %102, %113 : vector<8x128xf32>
    %115 = arith.addf %111, %114 : vector<8x128xf32>
    %116 = math.tanh %115 : vector<8x128xf32>
    %cst_46 = arith.constant 1.000000e+00 : f32
    %117 = vector.broadcast %cst_46 : f32 to vector<8x128xf32>
    %118 = arith.subf %117, %110 : vector<8x128xf32>
    %119 = arith.mulf %118, %116 : vector<8x128xf32>
    %120 = arith.mulf %110, %86 : vector<8x128xf32>
    %121 = arith.addf %119, %120 : vector<8x128xf32>
    %122 = arith.truncf %121 : vector<8x128xf32> to vector<8x128xbf16>
    %c16_47 = arith.constant 16 : index
    %c0_48 = arith.constant 0 : index
    %123 = vector.load %arg10[%c16_47, %c0_48] : memref<64x128xbf16, #tpu.memory_space<vmem>>, vector<8x128xbf16>
    tpu.vector_store %arg10[%c16_47, %c0_48], %122 {strides = array<i32>} : memref<64x128xbf16, #tpu.memory_space<vmem>>, vector<8x128xbf16>,
    %c0_49 = arith.constant 0 : index
    %c24 = arith.constant 24 : index
    %c0_50 = arith.constant 0 : index
    %124 = vector.load %arg11[%c0_49, %c24, %c0_50] : memref<2x64x384xf32, #tpu.memory_space<vmem>>, vector<1x8x384xf32>
    %125 = vector.shape_cast %124 : vector<1x8x384xf32> to vector<8x384xf32>
    %126 = arith.truncf %121 : vector<8x128xf32> to vector<8x128xbf16>
    %c0_51 = arith.constant 0 : index
    %c0_52 = arith.constant 0 : index
    %c0_53 = arith.constant 0 : index
    %127 = vector.load %arg4[%c0_51, %c0_52, %c0_53] : memref<1x128x384xbf16, #tpu.memory_space<vmem>>, vector<1x128x384xbf16>
    %128 = vector.shape_cast %127 : vector<1x128x384xbf16> to vector<128x384xbf16>
    %cst_54 = arith.constant dense<0.000000e+00> : vector<8x384xf32>
    %129 = tpu.matmul %126, %128, %cst_54 {dimension_numbers = #tpu.dot_dimension_numbers<[1], [0], [0], [1], [0, 0, 1, 1], [], []>} : vector<8x128xbf16>, vector<128x384xbf16>, vector<8x384xf32> -> vector<8x384xf32>
    %130 = vector.extract_strided_slice %125 {offsets = [0, 0], sizes = [8, 128], strides = [1, 1]} : vector<8x384xf32> to vector<8x128xf32>
    %131 = vector.extract_strided_slice %129 {offsets = [0, 0], sizes = [8, 128], strides = [1, 1]} : vector<8x384xf32> to vector<8x128xf32>
    %132 = arith.addf %130, %131 : vector<8x128xf32>
    %133 = arith.negf %132 : vector<8x128xf32>
    %134 = math.exp %133 : vector<8x128xf32>
    %cst_55 = arith.constant 1.000000e+00 : f32
    %135 = vector.broadcast %cst_55 : f32 to vector<8x128xf32>
    %136 = arith.addf %135, %134 : vector<8x128xf32>
    %137 = arith.divf %135, %136 : vector<8x128xf32>
    %138 = vector.extract_strided_slice %125 {offsets = [0, 128], sizes = [8, 128], strides = [1, 1]} : vector<8x384xf32> to vector<8x128xf32>
    %139 = vector.extract_strided_slice %129 {offsets = [0, 128], sizes = [8, 128], strides = [1, 1]} : vector<8x384xf32> to vector<8x128xf32>
    %140 = arith.addf %138, %139 : vector<8x128xf32>
    %141 = arith.negf %140 : vector<8x128xf32>
    %142 = math.exp %141 : vector<8x128xf32>
    %cst_56 = arith.constant 1.000000e+00 : f32
    %143 = vector.broadcast %cst_56 : f32 to vector<8x128xf32>
    %144 = arith.addf %143, %142 : vector<8x128xf32>
    %145 = arith.divf %143, %144 : vector<8x128xf32>
    %146 = vector.extract_strided_slice %125 {offsets = [0, 256], sizes = [8, 128], strides = [1, 1]} : vector<8x384xf32> to vector<8x128xf32>
    %147 = vector.extract_strided_slice %129 {offsets = [0, 256], sizes = [8, 128], strides = [1, 1]} : vector<8x384xf32> to vector<8x128xf32>
    %148 = arith.addf %147, %3 : vector<8x128xf32>
    %149 = arith.mulf %137, %148 : vector<8x128xf32>
    %150 = arith.addf %146, %149 : vector<8x128xf32>
    %151 = math.tanh %150 : vector<8x128xf32>
    %cst_57 = arith.constant 1.000000e+00 : f32
    %152 = vector.broadcast %cst_57 : f32 to vector<8x128xf32>
    %153 = arith.subf %152, %145 : vector<8x128xf32>
    %154 = arith.mulf %153, %151 : vector<8x128xf32>
    %155 = arith.mulf %145, %121 : vector<8x128xf32>
    %156 = arith.addf %154, %155 : vector<8x128xf32>
    %157 = arith.truncf %156 : vector<8x128xf32> to vector<8x128xbf16>
    %c24_58 = arith.constant 24 : index
    %c0_59 = arith.constant 0 : index
    %158 = vector.load %arg10[%c24_58, %c0_59] : memref<64x128xbf16, #tpu.memory_space<vmem>>, vector<8x128xbf16>
    tpu.vector_store %arg10[%c24_58, %c0_59], %157 {strides = array<i32>} : memref<64x128xbf16, #tpu.memory_space<vmem>>, vector<8x128xbf16>,
    %c0_60 = arith.constant 0 : index
    %c32 = arith.constant 32 : index
    %c0_61 = arith.constant 0 : index
    %159 = vector.load %arg11[%c0_60, %c32, %c0_61] : memref<2x64x384xf32, #tpu.memory_space<vmem>>, vector<1x8x384xf32>
    %160 = vector.shape_cast %159 : vector<1x8x384xf32> to vector<8x384xf32>
    %161 = arith.truncf %156 : vector<8x128xf32> to vector<8x128xbf16>
    %c0_62 = arith.constant 0 : index
    %c0_63 = arith.constant 0 : index
    %c0_64 = arith.constant 0 : index
    %162 = vector.load %arg4[%c0_62, %c0_63, %c0_64] : memref<1x128x384xbf16, #tpu.memory_space<vmem>>, vector<1x128x384xbf16>
    %163 = vector.shape_cast %162 : vector<1x128x384xbf16> to vector<128x384xbf16>
    %cst_65 = arith.constant dense<0.000000e+00> : vector<8x384xf32>
    %164 = tpu.matmul %161, %163, %cst_65 {dimension_numbers = #tpu.dot_dimension_numbers<[1], [0], [0], [1], [0, 0, 1, 1], [], []>} : vector<8x128xbf16>, vector<128x384xbf16>, vector<8x384xf32> -> vector<8x384xf32>
    %165 = vector.extract_strided_slice %160 {offsets = [0, 0], sizes = [8, 128], strides = [1, 1]} : vector<8x384xf32> to vector<8x128xf32>
    %166 = vector.extract_strided_slice %164 {offsets = [0, 0], sizes = [8, 128], strides = [1, 1]} : vector<8x384xf32> to vector<8x128xf32>
    %167 = arith.addf %165, %166 : vector<8x128xf32>
    %168 = arith.negf %167 : vector<8x128xf32>
    %169 = math.exp %168 : vector<8x128xf32>
    %cst_66 = arith.constant 1.000000e+00 : f32
    %170 = vector.broadcast %cst_66 : f32 to vector<8x128xf32>
    %171 = arith.addf %170, %169 : vector<8x128xf32>
    %172 = arith.divf %170, %171 : vector<8x128xf32>
    %173 = vector.extract_strided_slice %160 {offsets = [0, 128], sizes = [8, 128], strides = [1, 1]} : vector<8x384xf32> to vector<8x128xf32>
    %174 = vector.extract_strided_slice %164 {offsets = [0, 128], sizes = [8, 128], strides = [1, 1]} : vector<8x384xf32> to vector<8x128xf32>
    %175 = arith.addf %173, %174 : vector<8x128xf32>
    %176 = arith.negf %175 : vector<8x128xf32>
    %177 = math.exp %176 : vector<8x128xf32>
    %cst_67 = arith.constant 1.000000e+00 : f32
    %178 = vector.broadcast %cst_67 : f32 to vector<8x128xf32>
    %179 = arith.addf %178, %177 : vector<8x128xf32>
    %180 = arith.divf %178, %179 : vector<8x128xf32>
    %181 = vector.extract_strided_slice %160 {offsets = [0, 256], sizes = [8, 128], strides = [1, 1]} : vector<8x384xf32> to vector<8x128xf32>
    %182 = vector.extract_strided_slice %164 {offsets = [0, 256], sizes = [8, 128], strides = [1, 1]} : vector<8x384xf32> to vector<8x128xf32>
    %183 = arith.addf %182, %3 : vector<8x128xf32>
    %184 = arith.mulf %172, %183 : vector<8x128xf32>
    %185 = arith.addf %181, %184 : vector<8x128xf32>
    %186 = math.tanh %185 : vector<8x128xf32>
    %cst_68 = arith.constant 1.000000e+00 : f32
    %187 = vector.broadcast %cst_68 : f32 to vector<8x128xf32>
    %188 = arith.subf %187, %180 : vector<8x128xf32>
    %189 = arith.mulf %188, %186 : vector<8x128xf32>
    %190 = arith.mulf %180, %156 : vector<8x128xf32>
    %191 = arith.addf %189, %190 : vector<8x128xf32>
    %192 = arith.truncf %191 : vector<8x128xf32> to vector<8x128xbf16>
    %c32_69 = arith.constant 32 : index
    %c0_70 = arith.constant 0 : index
    %193 = vector.load %arg10[%c32_69, %c0_70] : memref<64x128xbf16, #tpu.memory_space<vmem>>, vector<8x128xbf16>
    tpu.vector_store %arg10[%c32_69, %c0_70], %192 {strides = array<i32>} : memref<64x128xbf16, #tpu.memory_space<vmem>>, vector<8x128xbf16>,
    %c0_71 = arith.constant 0 : index
    %c40 = arith.constant 40 : index
    %c0_72 = arith.constant 0 : index
    %194 = vector.load %arg11[%c0_71, %c40, %c0_72] : memref<2x64x384xf32, #tpu.memory_space<vmem>>, vector<1x8x384xf32>
    %195 = vector.shape_cast %194 : vector<1x8x384xf32> to vector<8x384xf32>
    %196 = arith.truncf %191 : vector<8x128xf32> to vector<8x128xbf16>
    %c0_73 = arith.constant 0 : index
    %c0_74 = arith.constant 0 : index
    %c0_75 = arith.constant 0 : index
    %197 = vector.load %arg4[%c0_73, %c0_74, %c0_75] : memref<1x128x384xbf16, #tpu.memory_space<vmem>>, vector<1x128x384xbf16>
    %198 = vector.shape_cast %197 : vector<1x128x384xbf16> to vector<128x384xbf16>
    %cst_76 = arith.constant dense<0.000000e+00> : vector<8x384xf32>
    %199 = tpu.matmul %196, %198, %cst_76 {dimension_numbers = #tpu.dot_dimension_numbers<[1], [0], [0], [1], [0, 0, 1, 1], [], []>} : vector<8x128xbf16>, vector<128x384xbf16>, vector<8x384xf32> -> vector<8x384xf32>
    %200 = vector.extract_strided_slice %195 {offsets = [0, 0], sizes = [8, 128], strides = [1, 1]} : vector<8x384xf32> to vector<8x128xf32>
    %201 = vector.extract_strided_slice %199 {offsets = [0, 0], sizes = [8, 128], strides = [1, 1]} : vector<8x384xf32> to vector<8x128xf32>
    %202 = arith.addf %200, %201 : vector<8x128xf32>
    %203 = arith.negf %202 : vector<8x128xf32>
    %204 = math.exp %203 : vector<8x128xf32>
    %cst_77 = arith.constant 1.000000e+00 : f32
    %205 = vector.broadcast %cst_77 : f32 to vector<8x128xf32>
    %206 = arith.addf %205, %204 : vector<8x128xf32>
    %207 = arith.divf %205, %206 : vector<8x128xf32>
    %208 = vector.extract_strided_slice %195 {offsets = [0, 128], sizes = [8, 128], strides = [1, 1]} : vector<8x384xf32> to vector<8x128xf32>
    %209 = vector.extract_strided_slice %199 {offsets = [0, 128], sizes = [8, 128], strides = [1, 1]} : vector<8x384xf32> to vector<8x128xf32>
    %210 = arith.addf %208, %209 : vector<8x128xf32>
    %211 = arith.negf %210 : vector<8x128xf32>
    %212 = math.exp %211 : vector<8x128xf32>
    %cst_78 = arith.constant 1.000000e+00 : f32
    %213 = vector.broadcast %cst_78 : f32 to vector<8x128xf32>
    %214 = arith.addf %213, %212 : vector<8x128xf32>
    %215 = arith.divf %213, %214 : vector<8x128xf32>
    %216 = vector.extract_strided_slice %195 {offsets = [0, 256], sizes = [8, 128], strides = [1, 1]} : vector<8x384xf32> to vector<8x128xf32>
    %217 = vector.extract_strided_slice %199 {offsets = [0, 256], sizes = [8, 128], strides = [1, 1]} : vector<8x384xf32> to vector<8x128xf32>
    %218 = arith.addf %217, %3 : vector<8x128xf32>
    %219 = arith.mulf %207, %218 : vector<8x128xf32>
    %220 = arith.addf %216, %219 : vector<8x128xf32>
    %221 = math.tanh %220 : vector<8x128xf32>
    %cst_79 = arith.constant 1.000000e+00 : f32
    %222 = vector.broadcast %cst_79 : f32 to vector<8x128xf32>
    %223 = arith.subf %222, %215 : vector<8x128xf32>
    %224 = arith.mulf %223, %221 : vector<8x128xf32>
    %225 = arith.mulf %215, %191 : vector<8x128xf32>
    %226 = arith.addf %224, %225 : vector<8x128xf32>
    %227 = arith.truncf %226 : vector<8x128xf32> to vector<8x128xbf16>
    %c40_80 = arith.constant 40 : index
    %c0_81 = arith.constant 0 : index
    %228 = vector.load %arg10[%c40_80, %c0_81] : memref<64x128xbf16, #tpu.memory_space<vmem>>, vector<8x128xbf16>
    tpu.vector_store %arg10[%c40_80, %c0_81], %227 {strides = array<i32>} : memref<64x128xbf16, #tpu.memory_space<vmem>>, vector<8x128xbf16>,
    %c0_82 = arith.constant 0 : index
    %c48 = arith.constant 48 : index
    %c0_83 = arith.constant 0 : index
    %229 = vector.load %arg11[%c0_82, %c48, %c0_83] : memref<2x64x384xf32, #tpu.memory_space<vmem>>, vector<1x8x384xf32>
    %230 = vector.shape_cast %229 : vector<1x8x384xf32> to vector<8x384xf32>
    %231 = arith.truncf %226 : vector<8x128xf32> to vector<8x128xbf16>
    %c0_84 = arith.constant 0 : index
    %c0_85 = arith.constant 0 : index
    %c0_86 = arith.constant 0 : index
    %232 = vector.load %arg4[%c0_84, %c0_85, %c0_86] : memref<1x128x384xbf16, #tpu.memory_space<vmem>>, vector<1x128x384xbf16>
    %233 = vector.shape_cast %232 : vector<1x128x384xbf16> to vector<128x384xbf16>
    %cst_87 = arith.constant dense<0.000000e+00> : vector<8x384xf32>
    %234 = tpu.matmul %231, %233, %cst_87 {dimension_numbers = #tpu.dot_dimension_numbers<[1], [0], [0], [1], [0, 0, 1, 1], [], []>} : vector<8x128xbf16>, vector<128x384xbf16>, vector<8x384xf32> -> vector<8x384xf32>
    %235 = vector.extract_strided_slice %230 {offsets = [0, 0], sizes = [8, 128], strides = [1, 1]} : vector<8x384xf32> to vector<8x128xf32>
    %236 = vector.extract_strided_slice %234 {offsets = [0, 0], sizes = [8, 128], strides = [1, 1]} : vector<8x384xf32> to vector<8x128xf32>
    %237 = arith.addf %235, %236 : vector<8x128xf32>
    %238 = arith.negf %237 : vector<8x128xf32>
    %239 = math.exp %238 : vector<8x128xf32>
    %cst_88 = arith.constant 1.000000e+00 : f32
    %240 = vector.broadcast %cst_88 : f32 to vector<8x128xf32>
    %241 = arith.addf %240, %239 : vector<8x128xf32>
    %242 = arith.divf %240, %241 : vector<8x128xf32>
    %243 = vector.extract_strided_slice %230 {offsets = [0, 128], sizes = [8, 128], strides = [1, 1]} : vector<8x384xf32> to vector<8x128xf32>
    %244 = vector.extract_strided_slice %234 {offsets = [0, 128], sizes = [8, 128], strides = [1, 1]} : vector<8x384xf32> to vector<8x128xf32>
    %245 = arith.addf %243, %244 : vector<8x128xf32>
    %246 = arith.negf %245 : vector<8x128xf32>
    %247 = math.exp %246 : vector<8x128xf32>
    %cst_89 = arith.constant 1.000000e+00 : f32
    %248 = vector.broadcast %cst_89 : f32 to vector<8x128xf32>
    %249 = arith.addf %248, %247 : vector<8x128xf32>
    %250 = arith.divf %248, %249 : vector<8x128xf32>
    %251 = vector.extract_strided_slice %230 {offsets = [0, 256], sizes = [8, 128], strides = [1, 1]} : vector<8x384xf32> to vector<8x128xf32>
    %252 = vector.extract_strided_slice %234 {offsets = [0, 256], sizes = [8, 128], strides = [1, 1]} : vector<8x384xf32> to vector<8x128xf32>
    %253 = arith.addf %252, %3 : vector<8x128xf32>
    %254 = arith.mulf %242, %253 : vector<8x128xf32>
    %255 = arith.addf %251, %254 : vector<8x128xf32>
    %256 = math.tanh %255 : vector<8x128xf32>
    %cst_90 = arith.constant 1.000000e+00 : f32
    %257 = vector.broadcast %cst_90 : f32 to vector<8x128xf32>
    %258 = arith.subf %257, %250 : vector<8x128xf32>
    %259 = arith.mulf %258, %256 : vector<8x128xf32>
    %260 = arith.mulf %250, %226 : vector<8x128xf32>
    %261 = arith.addf %259, %260 : vector<8x128xf32>
    %262 = arith.truncf %261 : vector<8x128xf32> to vector<8x128xbf16>
    %c48_91 = arith.constant 48 : index
    %c0_92 = arith.constant 0 : index
    %263 = vector.load %arg10[%c48_91, %c0_92] : memref<64x128xbf16, #tpu.memory_space<vmem>>, vector<8x128xbf16>
    tpu.vector_store %arg10[%c48_91, %c0_92], %262 {strides = array<i32>} : memref<64x128xbf16, #tpu.memory_space<vmem>>, vector<8x128xbf16>,
    %c0_93 = arith.constant 0 : index
    %c56 = arith.constant 56 : index
    %c0_94 = arith.constant 0 : index
    %264 = vector.load %arg11[%c0_93, %c56, %c0_94] : memref<2x64x384xf32, #tpu.memory_space<vmem>>, vector<1x8x384xf32>
    %265 = vector.shape_cast %264 : vector<1x8x384xf32> to vector<8x384xf32>
    %266 = arith.truncf %261 : vector<8x128xf32> to vector<8x128xbf16>
    %c0_95 = arith.constant 0 : index
    %c0_96 = arith.constant 0 : index
    %c0_97 = arith.constant 0 : index
    %267 = vector.load %arg4[%c0_95, %c0_96, %c0_97] : memref<1x128x384xbf16, #tpu.memory_space<vmem>>, vector<1x128x384xbf16>
    %268 = vector.shape_cast %267 : vector<1x128x384xbf16> to vector<128x384xbf16>
    %cst_98 = arith.constant dense<0.000000e+00> : vector<8x384xf32>
    %269 = tpu.matmul %266, %268, %cst_98 {dimension_numbers = #tpu.dot_dimension_numbers<[1], [0], [0], [1], [0, 0, 1, 1], [], []>} : vector<8x128xbf16>, vector<128x384xbf16>, vector<8x384xf32> -> vector<8x384xf32>
    %270 = vector.extract_strided_slice %265 {offsets = [0, 0], sizes = [8, 128], strides = [1, 1]} : vector<8x384xf32> to vector<8x128xf32>
    %271 = vector.extract_strided_slice %269 {offsets = [0, 0], sizes = [8, 128], strides = [1, 1]} : vector<8x384xf32> to vector<8x128xf32>
    %272 = arith.addf %270, %271 : vector<8x128xf32>
    %273 = arith.negf %272 : vector<8x128xf32>
    %274 = math.exp %273 : vector<8x128xf32>
    %cst_99 = arith.constant 1.000000e+00 : f32
    %275 = vector.broadcast %cst_99 : f32 to vector<8x128xf32>
    %276 = arith.addf %275, %274 : vector<8x128xf32>
    %277 = arith.divf %275, %276 : vector<8x128xf32>
    %278 = vector.extract_strided_slice %265 {offsets = [0, 128], sizes = [8, 128], strides = [1, 1]} : vector<8x384xf32> to vector<8x128xf32>
    %279 = vector.extract_strided_slice %269 {offsets = [0, 128], sizes = [8, 128], strides = [1, 1]} : vector<8x384xf32> to vector<8x128xf32>
    %280 = arith.addf %278, %279 : vector<8x128xf32>
    %281 = arith.negf %280 : vector<8x128xf32>
    %282 = math.exp %281 : vector<8x128xf32>
    %cst_100 = arith.constant 1.000000e+00 : f32
    %283 = vector.broadcast %cst_100 : f32 to vector<8x128xf32>
    %284 = arith.addf %283, %282 : vector<8x128xf32>
    %285 = arith.divf %283, %284 : vector<8x128xf32>
    %286 = vector.extract_strided_slice %265 {offsets = [0, 256], sizes = [8, 128], strides = [1, 1]} : vector<8x384xf32> to vector<8x128xf32>
    %287 = vector.extract_strided_slice %269 {offsets = [0, 256], sizes = [8, 128], strides = [1, 1]} : vector<8x384xf32> to vector<8x128xf32>
    %288 = arith.addf %287, %3 : vector<8x128xf32>
    %289 = arith.mulf %277, %288 : vector<8x128xf32>
    %290 = arith.addf %286, %289 : vector<8x128xf32>
    %291 = math.tanh %290 : vector<8x128xf32>
    %cst_101 = arith.constant 1.000000e+00 : f32
    %292 = vector.broadcast %cst_101 : f32 to vector<8x128xf32>
    %293 = arith.subf %292, %285 : vector<8x128xf32>
    %294 = arith.mulf %293, %291 : vector<8x128xf32>
    %295 = arith.mulf %285, %261 : vector<8x128xf32>
    %296 = arith.addf %294, %295 : vector<8x128xf32>
    %297 = arith.truncf %296 : vector<8x128xf32> to vector<8x128xbf16>
    %c56_102 = arith.constant 56 : index
    %c0_103 = arith.constant 0 : index
    %298 = vector.load %arg10[%c56_102, %c0_103] : memref<64x128xbf16, #tpu.memory_space<vmem>>, vector<8x128xbf16>
    tpu.vector_store %arg10[%c56_102, %c0_103], %297 {strides = array<i32>} : memref<64x128xbf16, #tpu.memory_space<vmem>>, vector<8x128xbf16>,
    %c1_i32 = arith.constant 1 : i32
    %299 = arith.cmpi eq, %arg1, %c1_i32 : i32
    %300 = arith.extui %299 : i1 to i32
    %c0_i32_104 = arith.constant 0 : i32
    %301 = arith.cmpi ne, %300, %c0_i32_104 : i32
    scf.if %301 {
      %302 = arith.truncf %296 : vector<8x128xf32> to vector<8x128xbf16>
      %c0_105 = arith.constant 0 : index
      %c0_106 = arith.constant 0 : index
      %303 = vector.load %arg7[%c0_105, %c0_106] : memref<128x128xbf16, #tpu.memory_space<vmem>>, vector<128x128xbf16>
      %cst_107 = arith.constant dense<0.000000e+00> : vector<8x128xf32>
      %304 = tpu.matmul %302, %303, %cst_107 {dimension_numbers = #tpu.dot_dimension_numbers<[1], [0], [0], [1], [0, 0, 1, 1], [], []>} : vector<8x128xbf16>, vector<128x128xbf16>, vector<8x128xf32> -> vector<8x128xf32>
      %c0_108 = arith.constant 0 : index
      %c0_109 = arith.constant 0 : index
      %305 = vector.load %arg8[%c0_108, %c0_109] : memref<1x128xf32, #tpu.memory_space<vmem>>, vector<1x128xf32>
      %306 = vector.broadcast %305 : vector<1x128xf32> to vector<8x128xf32>
      %307 = arith.addf %304, %306 : vector<8x128xf32>
      %c0_110 = arith.constant 0 : index
      %c0_111 = arith.constant 0 : index
      %c0_112 = arith.constant 0 : index
      %308 = vector.load %arg9[%c0_110, %c0_111, %c0_112] : memref<1x8x128xf32, #tpu.memory_space<vmem>>, vector<1x8x128xf32>
      %309 = vector.shape_cast %308 : vector<1x8x128xf32> to vector<8x128xf32>
      %310 = vector.shape_cast %307 : vector<8x128xf32> to vector<1x8x128xf32>
      tpu.vector_store %arg9[%c0_110, %c0_111, %c0_112], %310 {strides = array<i32>} : memref<1x8x128xf32, #tpu.memory_space<vmem>>, vector<1x8x128xf32>,
    } else {
    }
    return
  }
  func.func @transform_0(%arg0: i32, %arg1: i32) -> (i32, i32, i32) {
    %c0_i32 = arith.constant 0 : i32
    %c0_i32_0 = arith.constant 0 : i32
    %c0_i32_1 = arith.constant 0 : i32
    return %arg0, %c0_i32, %c0_i32_0 : i32, i32, i32
  }
  func.func @transform_1(%arg0: i32, %arg1: i32) -> (i32, i32, i32) {
    %c0_i32 = arith.constant 0 : i32
    %c0_i32_0 = arith.constant 0 : i32
    %c0_i32_1 = arith.constant 0 : i32
    return %arg1, %c0_i32, %c0_i32_0 : i32, i32, i32
  }
  func.func @transform_2(%arg0: i32, %arg1: i32) -> (i32, i32, i32) {
    %c0_i32 = arith.constant 0 : i32
    %c0_i32_0 = arith.constant 0 : i32
    %c0_i32_1 = arith.constant 0 : i32
    return %arg1, %c0_i32, %c0_i32_0 : i32, i32, i32
  }
  func.func @transform_3(%arg0: i32, %arg1: i32) -> (i32, i32, i32) {
    %c0_i32 = arith.constant 0 : i32
    %c0_i32_0 = arith.constant 0 : i32
    %c0_i32_1 = arith.constant 0 : i32
    return %arg1, %c0_i32, %c0_i32_0 : i32, i32, i32
  }
  func.func @transform_4(%arg0: i32, %arg1: i32) -> (i32, i32, i32) {
    %c0_i32 = arith.constant 0 : i32
    %c0_i32_0 = arith.constant 0 : i32
    %c0_i32_1 = arith.constant 0 : i32
    return %arg1, %c0_i32, %c0_i32_0 : i32, i32, i32
  }
  func.func @transform_5(%arg0: i32, %arg1: i32) -> (i32, i32) {
    %c0_i32 = arith.constant 0 : i32
    %c0_i32_0 = arith.constant 0 : i32
    %c0_i32_1 = arith.constant 0 : i32
    return %c0_i32, %c0_i32_0 : i32, i32
  }
  func.func @transform_6(%arg0: i32, %arg1: i32) -> (i32, i32) {
    %c0_i32 = arith.constant 0 : i32
    %c0_i32_0 = arith.constant 0 : i32
    %c0_i32_1 = arith.constant 0 : i32
    return %c0_i32, %c0_i32_0 : i32, i32
  }
  func.func @transform_7(%arg0: i32, %arg1: i32) -> (i32, i32, i32) {
    %c0_i32 = arith.constant 0 : i32
    %c0_i32_0 = arith.constant 0 : i32
    %c0_i32_1 = arith.constant 0 : i32
    return %arg0, %c0_i32, %c0_i32_0 : i32, i32, i32
  }
}

</mosaic_0001>

<llo_original>
// kernel: gru_model_forward.1
$region0: #{gru_model_forward.1}
  #allocation0 [shape = 'u32[]', space=smem, size = 0x4, offset = 0x4, fixed_abs, tag = 'smem constant byte address 0x4 - core index']
  #allocation1 [shape = 'u32[144,128]{1,0:T(1,128)}', space=vmem, size = 0x12000, scoped, tag = 'internal scratch']
  #allocation2 [shape = 'bf16[64,128]{1,0:T(16,128)(2,1)}', space=vmem, size = 0x4000, scoped, tag = 'scratch operand']
  #allocation3 [shape = 'f32[2,64,384]{2,1,0:T(8,128)}', space=vmem, size = 0x30000, scoped, tag = 'scratch operand']
  %s0 = inlined_call_operand.vmem [shape: bf16[1,64,128], index: 0, kind: input, shape index: {}]
  %s1 = inlined_call_operand.vmem [shape: bf16[2,128,384], index: 1, kind: input, shape index: {}]
  %s2 = inlined_call_operand.vmem [shape: bf16[2,128,384], index: 2, kind: input, shape index: {}]
  %s3 = inlined_call_operand.vmem [shape: f32[2,1,384], index: 3, kind: input, shape index: {}]
  %s4 = inlined_call_operand.vmem [shape: f32[2,1,128], index: 4, kind: input, shape index: {}]
  %s5 = inlined_call_operand.vmem [shape: bf16[128,128], index: 5, kind: input, shape index: {}]
  %s6 = inlined_call_operand.vmem [shape: f32[1,128], index: 6, kind: input, shape index: {}]
  %s7 = inlined_call_operand.vmem [shape: f32[1,8,128], index: 7, kind: output, shape index: {}]
  %s8 = sld [smem:[#allocation0]]
  $region69: #{gru_model_forward.1} parent=0
    _
  %s10 = ssub.s32 1, %s8
  %s11 = scalar_select 0, %s10, %s8
  loop: start=0, step=1, limit=4
  $region2: #{gru_model_forward.1} parent=0 // loop_pre_header
    _
  $region3: #{gru_model_forward.1} parent=0 // loop_header
    %s13 = sphi 0, %s17
    %p14 = scmp.ge.s32.totalorder %s13, 4
    %s20 = sphi 0, %s32
    %s21 = sphi 0, %s28
    %s22 = sphi 0, %s20
    %s23 = sphi 0, %s21
    %s24 = sphi 0, %s22
    %s25 = sphi 0, %s23
    %s35 = sphi 0, %s37
    %s38 = sphi 0, %s35
    %s39 = sphi 0, %s38
    %s55 = sphi 0, %s39
    %s61 = sphi 0, %s63
    %s64 = sphi 0, %s61
    %s65 = sphi 0, %s64
    %s81 = sphi 0, %s65
    %s87 = sphi 0, %s89
    %s90 = sphi 0, %s87
    %s91 = sphi 0, %s90
    %s107 = sphi 0, %s91
    %s113 = sphi 0, %s115
    %s116 = sphi 0, %s113
    %s117 = sphi 0, %s116
    %s133 = sphi 0, %s117
    %s139 = sphi 0, %s141
    %s142 = sphi 0, %s139
    %s143 = sphi 0, %s142
    %s159 = sphi 0, %s143
    %s163 = sphi 0, %s163
    %s165 = sphi 0, %s163
    %s166 = sphi 0, %s165
    %s180 = sphi 0, %s166
    %s184 = sphi 0, %s184
    %s186 = sphi 0, %s184
    %s187 = sphi 0, %s186
    %s201 = sphi 0, %s187
    %s207 = sphi 0, %s209
    %s210 = sphi 0, %s207
    %s211 = sphi 0, %s210
    %s227 = sphi 0, %s211
  $region4: #{gru_model_forward.1} parent=0 // loop_header_branch
    %16 = sbr.rel (%p14) target = $region8
  $region5: #{gru_model_forward.1} parent=0 // loop_body
    %s18 = ssub.s32 %s13, 1
    %s19 = ssub.s32 %s13, 2
    %s26 = sadd.s32 1, %s21
    %p27 = scmp.ge.s32.totalorder %s26, 2
    %s28 = scalar_select %p27, 0, %s26
    %s29 = sadd.s32 1, %s20
    %s30 = scalar_select %p27, %s29, %s20
    %p31 = scmp.ge.s32.totalorder %s30, 1
    %s32 = scalar_select %p31, 0, %s30
    %s33 = ssub.s32 %s20, %s32
    %p34 = scmp.eq.s32.totalorder %s33, 0
    %s36 = sadd.s32 %s35, 1
    %s37 = scalar_select %p34, %s35, %s36
    %p40 = pneg %p34
    %p41 = scmp.eq.s32.totalorder %s13, 1
    %p42 = por %p40, %p41
    %p43 = scmp.ne.s32.totalorder %s35, %s38
    %p44 = scmp.eq.s32.totalorder %s13, 0
    %p45 = por %p43, %p44
    %p46 = scmp.ne.s32.totalorder %s35, %s38
    %p47 = scmp.eq.s32.totalorder %s18, 1
    %p48 = por %p46, %p47
    %p49 = scmp.ne.s32.totalorder %s38, %s39
    %p50 = scmp.eq.s32.totalorder %s18, 0
    %p51 = por %p49, %p50
    %p52 = scmp.ne.s32.totalorder %s38, %s39
    %p53 = scmp.eq.s32.totalorder %s19, 1
    %p54 = por %p52, %p53
    %p56 = scmp.ne.s32.totalorder %s39, %s55
    %p57 = scmp.eq.s32.totalorder %s19, 0
    %p58 = por %p56, %p57
    %s59 = ssub.s32 %s21, %s28
    %p60 = scmp.eq.s32.totalorder %s59, 0
    %s62 = sadd.s32 %s61, 1
    %s63 = scalar_select %p60, %s61, %s62
    %p66 = pneg %p60
    %p67 = scmp.eq.s32.totalorder %s13, 1
    %p68 = por %p66, %p67
    %p69 = scmp.ne.s32.totalorder %s61, %s64
    %p70 = scmp.eq.s32.totalorder %s13, 0
    %p71 = por %p69, %p70
    %p72 = scmp.ne.s32.totalorder %s61, %s64
    %p73 = scmp.eq.s32.totalorder %s18, 1
    %p74 = por %p72, %p73
    %p75 = scmp.ne.s32.totalorder %s64, %s65
    %p76 = scmp.eq.s32.totalorder %s18, 0
    %p77 = por %p75, %p76
    %p78 = scmp.ne.s32.totalorder %s64, %s65
    %p79 = scmp.eq.s32.totalorder %s19, 1
    %p80 = por %p78, %p79
    %p82 = scmp.ne.s32.totalorder %s65, %s81
    %p83 = scmp.eq.s32.totalorder %s19, 0
    %p84 = por %p82, %p83
    %s85 = ssub.s32 %s21, %s28
    %p86 = scmp.eq.s32.totalorder %s85, 0
    %s88 = sadd.s32 %s87, 1
    %s89 = scalar_select %p86, %s87, %s88
    %p92 = pneg %p86
    %p93 = scmp.eq.s32.totalorder %s13, 1
    %p94 = por %p92, %p93
    %p95 = scmp.ne.s32.totalorder %s87, %s90
    %p96 = scmp.eq.s32.totalorder %s13, 0
    %p97 = por %p95, %p96
    %p98 = scmp.ne.s32.totalorder %s87, %s90
    %p99 = scmp.eq.s32.totalorder %s18, 1
    %p100 = por %p98, %p99
    %p101 = scmp.ne.s32.totalorder %s90, %s91
    %p102 = scmp.eq.s32.totalorder %s18, 0
    %p103 = por %p101, %p102
    %p104 = scmp.ne.s32.totalorder %s90, %s91
    %p105 = scmp.eq.s32.totalorder %s19, 1
    %p106 = por %p104, %p105
    %p108 = scmp.ne.s32.totalorder %s91, %s107
    %p109 = scmp.eq.s32.totalorder %s19, 0
    %p110 = por %p108, %p109
    %s111 = ssub.s32 %s21, %s28
    %p112 = scmp.eq.s32.totalorder %s111, 0
    %s114 = sadd.s32 %s113, 1
    %s115 = scalar_select %p112, %s113, %s114
    %p118 = pneg %p112
    %p119 = scmp.eq.s32.totalorder %s13, 1
    %p120 = por %p118, %p119
    %p121 = scmp.ne.s32.totalorder %s113, %s116
    %p122 = scmp.eq.s32.totalorder %s13, 0
    %p123 = por %p121, %p122
    %p124 = scmp.ne.s32.totalorder %s113, %s116
    %p125 = scmp.eq.s32.totalorder %s18, 1
    %p126 = por %p124, %p125
    %p127 = scmp.ne.s32.totalorder %s116, %s117
    %p128 = scmp.eq.s32.totalorder %s18, 0
    %p129 = por %p127, %p128
    %p130 = scmp.ne.s32.totalorder %s116, %s117
    %p131 = scmp.eq.s32.totalorder %s19, 1
    %p132 = por %p130, %p131
    %p134 = scmp.ne.s32.totalorder %s117, %s133
    %p135 = scmp.eq.s32.totalorder %s19, 0
    %p136 = por %p134, %p135
    %s137 = ssub.s32 %s21, %s28
    %p138 = scmp.eq.s32.totalorder %s137, 0
    %s140 = sadd.s32 %s139, 1
    %s141 = scalar_select %p138, %s139, %s140
    %p144 = pneg %p138
    %p145 = scmp.eq.s32.totalorder %s13, 1
    %p146 = por %p144, %p145
    %p147 = scmp.ne.s32.totalorder %s139, %s142
    %p148 = scmp.eq.s32.totalorder %s13, 0
    %p149 = por %p147, %p148
    %p150 = scmp.ne.s32.totalorder %s139, %s142
    %p151 = scmp.eq.s32.totalorder %s18, 1
    %p152 = por %p150, %p151
    %p153 = scmp.ne.s32.totalorder %s142, %s143
    %p154 = scmp.eq.s32.totalorder %s18, 0
    %p155 = por %p153, %p154
    %p156 = scmp.ne.s32.totalorder %s142, %s143
    %p157 = scmp.eq.s32.totalorder %s19, 1
    %p158 = por %p156, %p157
    %p160 = scmp.ne.s32.totalorder %s143, %s159
    %p161 = scmp.eq.s32.totalorder %s19, 0
    %p162 = por %p160, %p161
    %s164 = sadd.s32 %s163, 1
    %p167 = scmp.eq.s32.totalorder %s13, 1
    %p168 = scmp.ne.s32.totalorder %s163, %s165
    %p169 = scmp.eq.s32.totalorder %s13, 0
    %p170 = por %p168, %p169
    %p171 = scmp.ne.s32.totalorder %s163, %s165
    %p172 = scmp.eq.s32.totalorder %s18, 1
    %p173 = por %p171, %p172
    %p174 = scmp.ne.s32.totalorder %s165, %s166
    %p175 = scmp.eq.s32.totalorder %s18, 0
    %p176 = por %p174, %p175
    %p177 = scmp.ne.s32.totalorder %s165, %s166
    %p178 = scmp.eq.s32.totalorder %s19, 1
    %p179 = por %p177, %p178
    %p181 = scmp.ne.s32.totalorder %s166, %s180
    %p182 = scmp.eq.s32.totalorder %s19, 0
    %p183 = por %p181, %p182
    %s185 = sadd.s32 %s184, 1
    %p188 = scmp.eq.s32.totalorder %s13, 1
    %p189 = scmp.ne.s32.totalorder %s184, %s186
    %p190 = scmp.eq.s32.totalorder %s13, 0
    %p191 = por %p189, %p190
    %p192 = scmp.ne.s32.totalorder %s184, %s186
    %p193 = scmp.eq.s32.totalorder %s18, 1
    %p194 = por %p192, %p193
    %p195 = scmp.ne.s32.totalorder %s186, %s187
    %p196 = scmp.eq.s32.totalorder %s18, 0
    %p197 = por %p195, %p196
    %p198 = scmp.ne.s32.totalorder %s186, %s187
    %p199 = scmp.eq.s32.totalorder %s19, 1
    %p200 = por %p198, %p199
    %p202 = scmp.ne.s32.totalorder %s187, %s201
    %p203 = scmp.eq.s32.totalorder %s19, 0
    %p204 = por %p202, %p203
    %s205 = ssub.s32 %s20, %s32
    %p206 = scmp.eq.s32.totalorder %s205, 0
    %s208 = sadd.s32 %s207, 1
    %s209 = scalar_select %p206, %s207, %s208
    %p212 = pneg %p206
    %p213 = scmp.eq.s32.totalorder %s13, 1
    %p214 = por %p212, %p213
    %p215 = scmp.ne.s32.totalorder %s207, %s210
    %p216 = scmp.eq.s32.totalorder %s13, 0
    %p217 = por %p215, %p216
    %p218 = scmp.ne.s32.totalorder %s207, %s210
    %p219 = scmp.eq.s32.totalorder %s18, 1
    %p220 = por %p218, %p219
    %p221 = scmp.ne.s32.totalorder %s210, %s211
    %p222 = scmp.eq.s32.totalorder %s18, 0
    %p223 = por %p221, %p222
    %p224 = scmp.ne.s32.totalorder %s210, %s211
    %p225 = scmp.eq.s32.totalorder %s19, 1
    %p226 = por %p224, %p225
    %p228 = scmp.ne.s32.totalorder %s211, %s227
    %p229 = scmp.eq.s32.totalorder %s19, 0
    %p230 = por %p228, %p229
    %p231 = scmp.le.s32.totalorder 1, %s13
    %p232 = scmp.lt.s32.totalorder %s13, 3
    %p233 = pnand %p231, %p232
    %p234 = pneg %p233
    // Predicated region
    $region9: #{gru_model_forward.1} parent=5 // pred_check
      _
    $region10: #{gru_model_forward.1} parent=5 // pred_check_branch
      %236 = sbr.rel (%p233) target = $region12
    $region11: #{gru_model_forward.1} parent=5 // pred_region
      %s237 = ssub.s32 %s13, 1
      // Predicated region
      $region13: #{gru_model_forward.1} parent=11 // pred_check
        %p238 = pneg %p51
      $region14: #{gru_model_forward.1} parent=11 // pred_check_branch
        %240 = sbr.rel (%p238) target = $region16
      $region15: #{gru_model_forward.1} parent=11 // pred_region
        %p241 = scmp.lt.s32.totalorder %s22, 0
        %s242 = scalar_select %p241, %s22, 0
        %s243 = smul.addr %s242, 8
        %s244 = smul.addr %s243, 4
        %s245 = scalar_lea.vmem %s0, %s244
      $region16: #{gru_model_forward.1} parent=11 // pred_fallthru
        _
      // Predicated region
      $region17: #{gru_model_forward.1} parent=11 // pred_check
        %p246 = pneg %p176
      $region18: #{gru_model_forward.1} parent=11 // pred_check_branch
        %248 = sbr.rel (%p246) target = $region20
      $region19: #{gru_model_forward.1} parent=11 // pred_region
        _
      $region20: #{gru_model_forward.1} parent=11 // pred_fallthru
        _
      // Predicated region
      $region21: #{gru_model_forward.1} parent=11 // pred_check
        %p249 = pneg %p197
      $region22: #{gru_model_forward.1} parent=11 // pred_check_branch
        %251 = sbr.rel (%p249) target = $region24
      $region23: #{gru_model_forward.1} parent=11 // pred_region
        _
      $region24: #{gru_model_forward.1} parent=11 // pred_fallthru
        _
    $region12: #{gru_model_forward.1} parent=5 // pred_fallthru
      _
    %p252 = scmp.lt.s32.totalorder %s13, 2
    // Predicated region
    $region25: #{gru_model_forward.1} parent=5 // pred_check
      %p253 = pneg %p252
    $region26: #{gru_model_forward.1} parent=5 // pred_check_branch
      %255 = sbr.rel (%p253) target = $region28
    $region27: #{gru_model_forward.1} parent=5 // pred_region
      // Predicated region
      $region29: #{gru_model_forward.1} parent=27 // pred_check
        %p256 = pneg %p71
      $region30: #{gru_model_forward.1} parent=27 // pred_check_branch
        %258 = sbr.rel (%p256) target = $region32
      $region31: #{gru_model_forward.1} parent=27 // pred_region
        %p259 = scmp.lt.s32.totalorder %s21, 1
        %s260 = scalar_select %p259, %s21, 1
        %s261 = smul.addr %s260, 48
        %s262 = smul.addr %s261, 4
        %s263 = scalar_lea.vmem %s1, %s262
      $region32: #{gru_model_forward.1} parent=27 // pred_fallthru
        _
      // Predicated region
      $region33: #{gru_model_forward.1} parent=27 // pred_check
        %p264 = pneg %p97
      $region34: #{gru_model_forward.1} parent=27 // pred_check_branch
        %266 = sbr.rel (%p264) target = $region36
      $region35: #{gru_model_forward.1} parent=27 // pred_region
        %p267 = scmp.lt.s32.totalorder %s21, 1
        %s268 = scalar_select %p267, %s21, 1
        %s269 = smul.addr %s268, 48
        %s270 = smul.addr %s269, 4
        %s271 = scalar_lea.vmem %s2, %s270
      $region36: #{gru_model_forward.1} parent=27 // pred_fallthru
        _
      // Predicated region
      $region37: #{gru_model_forward.1} parent=27 // pred_check
        %p272 = pneg %p123
      $region38: #{gru_model_forward.1} parent=27 // pred_check_branch
        %274 = sbr.rel (%p272) target = $region40
      $region39: #{gru_model_forward.1} parent=27 // pred_region
        %p275 = scmp.lt.s32.totalorder %s21, 1
        %s276 = scalar_select %p275, %s21, 1
        %s277 = smul.addr %s276, 3
        %s278 = scalar_lea.vmem %s3, %s277
      $region40: #{gru_model_forward.1} parent=27 // pred_fallthru
        _
      // Predicated region
      $region41: #{gru_model_forward.1} parent=27 // pred_check
        %p279 = pneg %p149
      $region42: #{gru_model_forward.1} parent=27 // pred_check_branch
        %281 = sbr.rel (%p279) target = $region44
      $region43: #{gru_model_forward.1} parent=27 // pred_region
        %p282 = scmp.lt.s32.totalorder %s21, 1
        %s283 = scalar_select %p282, %s21, 1
        %s284 = scalar_lea.vmem %s4, %s283
      $region44: #{gru_model_forward.1} parent=27 // pred_fallthru
        _
    $region28: #{gru_model_forward.1} parent=5 // pred_fallthru
      _
    %p285 = scmp.le.s32.totalorder 1, %s13
    %p286 = scmp.lt.s32.totalorder %s13, 3
    %p287 = pnand %p285, %p286
    %p288 = pneg %p287
    // Predicated region
    $region45: #{gru_model_forward.1} parent=5 // pred_check
      _
    $region46: #{gru_model_forward.1} parent=5 // pred_check_branch
      %290 = sbr.rel (%p287) target = $region48
    $region47: #{gru_model_forward.1} parent=5 // pred_region
      %s291 = ssub.s32 %s13, 1
      %p292 = scmp.lt.s32.totalorder %s22, 0
      %s293 = scalar_select %p292, %s22, 0
      %s294 = smul.addr %s293, 8
      %s295 = smul.addr %s294, 4
      %s296 = scalar_lea.vmem %s0, %s295
      %p297 = pneg %p51
      %p298 = pneg %p48
      %p299 = scmp.lt.s32.totalorder %s23, 1
      %s300 = scalar_select %p299, %s23, 1
      %s301 = smul.addr %s300, 48
      %s302 = smul.addr %s301, 4
      %s303 = scalar_lea.vmem %s1, %s302
      %p304 = pneg %p77
      %p305 = pneg %p74
      %p306 = scmp.lt.s32.totalorder %s23, 1
      %s307 = scalar_select %p306, %s23, 1
      %s308 = smul.addr %s307, 48
      %s309 = smul.addr %s308, 4
      %s310 = scalar_lea.vmem %s2, %s309
      %p311 = pneg %p103
      %p312 = pneg %p100
      %p313 = scmp.lt.s32.totalorder %s23, 1
      %s314 = scalar_select %p313, %s23, 1
      %s315 = smul.addr %s314, 3
      %s316 = scalar_lea.vmem %s3, %s315
      %p317 = pneg %p129
      %p318 = pneg %p126
      %p319 = scmp.lt.s32.totalorder %s23, 1
      %s320 = scalar_select %p319, %s23, 1
      %s321 = scalar_lea.vmem %s4, %s320
      %p322 = pneg %p155
      %p323 = pneg %p152
      %p324 = pneg %p176
      %p325 = pneg %p173
      %p326 = pneg %p197
      %p327 = pneg %p194
      %p328 = pneg %p223
      %p329 = pneg %p220
      %p330 = scmp.lt.s32.totalorder %s22, 0
      %s331 = scalar_select %p330, %s22, 0
      %s332 = smul.addr %s331, 8
      %s333 = scalar_lea.vmem %s7, %s332
      %p334 = scmp.lt.s32.totalorder %s22, 0
      %s335 = scalar_select %p334, %s22, 0
      %s336 = smul.addr %s335, 8
      %s337 = smul.addr %s336, 4
      %s338 = scalar_lea.vmem %s0, %s337
      %p339 = scmp.lt.s32.totalorder %s23, 1
      %s340 = scalar_select %p339, %s23, 1
      %s341 = smul.addr %s340, 48
      %s342 = smul.addr %s341, 4
      %s343 = scalar_lea.vmem %s1, %s342
      %p344 = scmp.lt.s32.totalorder %s23, 1
      %s345 = scalar_select %p344, %s23, 1
      %s346 = smul.addr %s345, 48
      %s347 = smul.addr %s346, 4
      %s348 = scalar_lea.vmem %s2, %s347
      %p349 = scmp.lt.s32.totalorder %s23, 1
      %s350 = scalar_select %p349, %s23, 1
      %s351 = smul.addr %s350, 3
      %s352 = scalar_lea.vmem %s3, %s351
      %p353 = scmp.lt.s32.totalorder %s23, 1
      %s354 = scalar_select %p353, %s23, 1
      %s355 = scalar_lea.vmem %s4, %s354
      %p356 = scmp.lt.s32.totalorder %s22, 0
      %s357 = scalar_select %p356, %s22, 0
      %s358 = smul.addr %s357, 8
      %s359 = scalar_lea.vmem %s7, %s358
      %v361 = vld [vmem:[%s355] sm:$0x1]
      %v363 = vlaneseq
      %v364 = vshrl.u32 %v363, 7
      %v365 = vsub.s32 0, %v364
      %v366 = vrot.slane %v361, %v365
      %p368 = scmp.eq.s32.totalorder %s23, 0
      // Predicated region
      $region49: #{gru_model_forward.1} parent=47 // pred_check
        %p369 = pneg %p368
      $region50: #{gru_model_forward.1} parent=47 // pred_check_branch
        %371 = sbr.rel (%p369) target = $region52
      $region51: #{gru_model_forward.1} parent=47 // pred_region
        %v372 = vld [vmem:[%s338] sm:$0xf]
        %v373 = vld [vmem:[%s338 + $0x4] sm:$0xf]
        %v374 = vld [vmem:[%s338 + $0x8] sm:$0xf]
        %v375 = vld [vmem:[%s338 + $0xc] sm:$0xf]
        %v376 = vld [vmem:[%s338 + $0x10] sm:$0xf]
        %v377 = vld [vmem:[%s338 + $0x14] sm:$0xf]
        %v378 = vld [vmem:[%s338 + $0x18] sm:$0xf]
        %v379 = vld [vmem:[%s338 + $0x1c] sm:$0xf]
        %v388 = vunpack.c.l.b16 %v372
        %v389 = vunpack.c.l.b16 %v373
        %v390 = vunpack.c.l.b16 %v374
        %v391 = vunpack.c.l.b16 %v375
        %v392 = vunpack.c.l.b16 %v376
        %v393 = vunpack.c.l.b16 %v377
        %v394 = vunpack.c.l.b16 %v378
        %v395 = vunpack.c.l.b16 %v379
        %v396 = vpack.c.b16 %v389, %v388
        %v397 = vpack.c.b16 %v391, %v390
        %v398 = vpack.c.b16 %v393, %v392
        %v399 = vpack.c.b16 %v395, %v394
        %404 = vst [vmem:[#allocation2] sm:$0xff] %v396
        %405 = vst [vmem:[#allocation2 + $0x8] sm:$0xff] %v397
        %406 = vst [vmem:[#allocation2 + $0x10] sm:$0xff] %v398
        %407 = vst [vmem:[#allocation2 + $0x18] sm:$0xff] %v399
      $region52: #{gru_model_forward.1} parent=47 // pred_fallthru
        _
      %v408 = vld [vmem:[#allocation2] sm:$0xff]
      %v409 = vld [vmem:[#allocation2 + $0x8] sm:$0xff]
      %v410 = vld [vmem:[#allocation2 + $0x10] sm:$0xff]
      %v411 = vld [vmem:[#allocation2 + $0x18] sm:$0xff]
      %v412 = vld [vmem:[%s343] sm:$0xff]
      %v413 = vld [vmem:[%s343 + $0x8] sm:$0xf]
      %v414 = vld [vmem:[%s343 + $0xc] sm:$0xff]
      %v415 = vld [vmem:[%s343 + $0x14] sm:$0xf]
      %v416 = vld [vmem:[%s343 + $0x18] sm:$0xff]
      %v417 = vld [vmem:[%s343 + $0x20] sm:$0xf]
      %v418 = vld [vmem:[%s343 + $0x24] sm:$0xff]
      %v419 = vld [vmem:[%s343 + $0x2c] sm:$0xf]
      %v420 = vld [vmem:[%s343 + $0x30] sm:$0xff]
      %v421 = vld [vmem:[%s343 + $0x38] sm:$0xf]
      %v422 = vld [vmem:[%s343 + $0x3c] sm:$0xff]
      %v423 = vld [vmem:[%s343 + $0x44] sm:$0xf]
      %v424 = vld [vmem:[%s343 + $0x48] sm:$0xff]
      %v425 = vld [vmem:[%s343 + $0x50] sm:$0xf]
      %v426 = vld [vmem:[%s343 + $0x54] sm:$0xff]
      %v427 = vld [vmem:[%s343 + $0x5c] sm:$0xf]
      %v428 = vld [vmem:[%s343 + $0x60] sm:$0xff]
      %v429 = vld [vmem:[%s343 + $0x68] sm:$0xf]
      %v430 = vld [vmem:[%s343 + $0x6c] sm:$0xff]
      %v431 = vld [vmem:[%s343 + $0x74] sm:$0xf]
      %v432 = vld [vmem:[%s343 + $0x78] sm:$0xff]
      %v433 = vld [vmem:[%s343 + $0x80] sm:$0xf]
      %v434 = vld [vmem:[%s343 + $0x84] sm:$0xff]
      %v435 = vld [vmem:[%s343 + $0x8c] sm:$0xf]
      %v436 = vld [vmem:[%s343 + $0x90] sm:$0xff]
      %v437 = vld [vmem:[%s343 + $0x98] sm:$0xf]
      %v438 = vld [vmem:[%s343 + $0x9c] sm:$0xff]
      %v439 = vld [vmem:[%s343 + $0xa4] sm:$0xf]
      %v440 = vld [vmem:[%s343 + $0xa8] sm:$0xff]
      %v441 = vld [vmem:[%s343 + $0xb0] sm:$0xf]
      %v442 = vld [vmem:[%s343 + $0xb4] sm:$0xff]
      %v443 = vld [vmem:[%s343 + $0xbc] sm:$0xf]
      %v444 = vld [vmem:[%s352] sm:$0x7]
      %v446 = vlaneseq
      %v447 = vshrl.u32 %v446, 7
      %v448 = vsub.s32 0, %v447
      %v449 = vrot.slane %v444, %v448
      %v450 = vlaneseq
      %v451 = vshrl.u32 %v450, 7
      %v452 = vsub.s32 1, %v451
      %v453 = vrot.slane %v444, %v452
      %v454 = vlaneseq
      %v455 = vshrl.u32 %v454, 7
      %v456 = vsub.s32 2, %v455
      %v457 = vrot.slane %v444, %v456
      %v493 = vunpack.c.l.b16 %v412
      %v494 = vunpack.c.h.b16 %v412
      %v495 = vunpack.c.l.b16 %v413
      %v496 = vunpack.c.l.b16 %v414
      %v497 = vunpack.c.h.b16 %v414
      %v498 = vunpack.c.l.b16 %v415
      %v499 = vunpack.c.l.b16 %v416
      %v500 = vunpack.c.h.b16 %v416
      %v501 = vunpack.c.l.b16 %v417
      %v502 = vunpack.c.l.b16 %v418
      %v503 = vunpack.c.h.b16 %v418
      %v504 = vunpack.c.l.b16 %v419
      %v505 = vunpack.c.l.b16 %v420
      %v506 = vunpack.c.h.b16 %v420
      %v507 = vunpack.c.l.b16 %v421
      %v508 = vunpack.c.l.b16 %v422
      %v509 = vunpack.c.h.b16 %v422
      %v510 = vunpack.c.l.b16 %v423
      %v511 = vunpack.c.l.b16 %v424
      %v512 = vunpack.c.h.b16 %v424
      %v513 = vunpack.c.l.b16 %v425
      %v514 = vunpack.c.l.b16 %v426
      %v515 = vunpack.c.h.b16 %v426
      %v516 = vunpack.c.l.b16 %v427
      %v517 = vunpack.c.l.b16 %v428
      %v518 = vunpack.c.h.b16 %v428
      %v519 = vunpack.c.l.b16 %v429
      %v520 = vunpack.c.l.b16 %v430
      %v521 = vunpack.c.h.b16 %v430
      %v522 = vunpack.c.l.b16 %v431
      %v523 = vunpack.c.l.b16 %v432
      %v524 = vunpack.c.h.b16 %v432
      %v525 = vunpack.c.l.b16 %v433
      %v526 = vunpack.c.l.b16 %v434
      %v527 = vunpack.c.h.b16 %v434
      %v528 = vunpack.c.l.b16 %v435
      %v529 = vunpack.c.l.b16 %v436
      %v530 = vunpack.c.h.b16 %v436
      %v531 = vunpack.c.l.b16 %v437
      %v532 = vunpack.c.l.b16 %v438
      %v533 = vunpack.c.h.b16 %v438
      %v534 = vunpack.c.l.b16 %v439
      %v535 = vunpack.c.l.b16 %v440
      %v536 = vunpack.c.h.b16 %v440
      %v537 = vunpack.c.l.b16 %v441
      %v538 = vunpack.c.l.b16 %v442
      %v539 = vunpack.c.h.b16 %v442
      %v540 = vunpack.c.l.b16 %v443
      %v541 = vpack.c.b16 %v496, %v493
      %v542 = vpack.c.b16 %v497, %v494
      %v543 = vpack.c.b16 %v498, %v495
      %v544 = vpack.c.b16 %v502, %v499
      %v545 = vpack.c.b16 %v503, %v500
      %v546 = vpack.c.b16 %v504, %v501
      %v547 = vpack.c.b16 %v508, %v505
      %v548 = vpack.c.b16 %v509, %v506
      %v549 = vpack.c.b16 %v510, %v507
      %v550 = vpack.c.b16 %v514, %v511
      %v551 = vpack.c.b16 %v515, %v512
      %v552 = vpack.c.b16 %v516, %v513
      %v553 = vpack.c.b16 %v520, %v517
      %v554 = vpack.c.b16 %v521, %v518
      %v555 = vpack.c.b16 %v522, %v519
      %v556 = vpack.c.b16 %v526, %v523
      %v557 = vpack.c.b16 %v527, %v524
      %v558 = vpack.c.b16 %v528, %v525
      %v559 = vpack.c.b16 %v532, %v529
      %v560 = vpack.c.b16 %v533, %v530
      %v561 = vpack.c.b16 %v534, %v531
      %v562 = vpack.c.b16 %v538, %v535
      %v563 = vpack.c.b16 %v539, %v536
      %v564 = vpack.c.b16 %v540, %v537
      %589 = vmatprep.subr.bf16.mxu0 %v542
      %590 = vmatpush1.bf16.msra.mxu0 %v541
      %591 = vmatprep.subr.bf16.mxu0 %v545
      %592 = vmatpush1.bf16.msra.mxu0 %v544
      %593 = vmatprep.subr.bf16.mxu0 %v548
      %594 = vmatpush1.bf16.msra.mxu0 %v547
      %595 = vmatprep.subr.bf16.mxu0 %v551
      %596 = vmatpush1.bf16.msra.mxu0 %v550
      %597 = vmatprep.subr.bf16.mxu0 %v554
      %598 = vmatpush1.bf16.msra.mxu0 %v553
      %599 = vmatprep.subr.bf16.mxu0 %v557
      %600 = vmatpush1.bf16.msra.mxu0 %v556
      %601 = vmatprep.subr.bf16.mxu0 %v560
      %602 = vmatpush1.bf16.msra.mxu0 %v559
      %603 = vmatprep.subr.bf16.mxu0 %v563
      %604 = vmatpush1.bf16.msra.mxu0 %v562
      %605 = vmatprep.subr.bf16.mxu0 0
      %606 = vmatpush1.bf16.msra.mxu0 0
      %607 = vmatprep.subr.bf16.mxu0 0
      %608 = vmatpush1.bf16.msra.mxu0 0
      %609 = vmatprep.subr.bf16.mxu0 0
      %610 = vmatpush1.bf16.msra.mxu0 0
      %611 = vmatprep.subr.bf16.mxu0 0
      %612 = vmatpush1.bf16.msra.mxu0 0
      %613 = vmatprep.subr.bf16.mxu0 0
      %614 = vmatpush1.bf16.msra.mxu0 0
      %615 = vmatprep.subr.bf16.mxu0 0
      %616 = vmatpush1.bf16.msra.mxu0 0
      %617 = vmatprep.subr.bf16.mxu0 0
      %618 = vmatpush1.bf16.msra.mxu0 0
      %619 = vmatprep.subr.bf16.mxu0 0
      %620 = vmatpush1.bf16.msra.mxu0 0
      %621 = vmatprep.mubr.bf16.mxu0 0
      %622 = vmatmul.mubr.bf16.gmra.mrb[0].mxu0 %v408
      %v623 = vpop.f32.mrb[0].mxu0
      %v624 = vadd.f32 %v449, %v623
      %v625 = vpop.f32.mrb[0].mxu0
      %v626 = vadd.f32 %v453, %v625
      %v627 = vpop.f32.mrb[0].mxu0
      %v628 = vadd.f32 %v449, %v627
      %v629 = vpop.f32.mrb[0].mxu0
      %v630 = vadd.f32 %v453, %v629
      %631 = vmatprep.mubr.bf16.mxu0 0
      %632 = vmatmul.mubr.bf16.gmra.mrb[0].mxu0 %v409
      %v633 = vpop.f32.mrb[0].mxu0
      %v634 = vadd.f32 %v449, %v633
      %v635 = vpop.f32.mrb[0].mxu0
      %v636 = vadd.f32 %v453, %v635
      %v637 = vpop.f32.mrb[0].mxu0
      %v638 = vadd.f32 %v449, %v637
      %v639 = vpop.f32.mrb[0].mxu0
      %v640 = vadd.f32 %v453, %v639
      %641 = vmatprep.mubr.bf16.mxu0 0
      %642 = vmatmul.mubr.bf16.gmra.mrb[0].mxu0 %v410
      %v643 = vpop.f32.mrb[0].mxu0
      %v644 = vadd.f32 %v449, %v643
      %v645 = vpop.f32.mrb[0].mxu0
      %v646 = vadd.f32 %v453, %v645
      %v647 = vpop.f32.mrb[0].mxu0
      %v648 = vadd.f32 %v449, %v647
      %v649 = vpop.f32.mrb[0].mxu0
      %v650 = vadd.f32 %v453, %v649
      %651 = vmatprep.mubr.bf16.mxu0 0
      %652 = vmatmul.mubr.bf16.gmra.mrb[0].mxu0 %v411
      %v653 = vpop.f32.mrb[0].mxu0
      %v654 = vadd.f32 %v449, %v653
      %v655 = vpop.f32.mrb[0].mxu0
      %v656 = vadd.f32 %v453, %v655
      %v657 = vpop.f32.mrb[0].mxu0
      %v658 = vadd.f32 %v449, %v657
      %v659 = vpop.f32.mrb[0].mxu0
      %v660 = vadd.f32 %v453, %v659
      %661 = vdwg.mxu0
      %662 = vmatprep.subr.bf16.mxu0 0
      %663 = vmatpush1.bf16.msra.mxu0 %v543
      %664 = vmatprep.subr.bf16.mxu0 0
      %665 = vmatpush1.bf16.msra.mxu0 %v546
      %666 = vmatprep.subr.bf16.mxu0 0
      %667 = vmatpush1.bf16.msra.mxu0 %v549
      %668 = vmatprep.subr.bf16.mxu0 0
      %669 = vmatpush1.bf16.msra.mxu0 %v552
      %670 = vmatprep.subr.bf16.mxu0 0
      %671 = vmatpush1.bf16.msra.mxu0 %v555
      %672 = vmatprep.subr.bf16.mxu0 0
      %673 = vmatpush1.bf16.msra.mxu0 %v558
      %674 = vmatprep.subr.bf16.mxu0 0
      %675 = vmatpush1.bf16.msra.mxu0 %v561
      %676 = vmatprep.subr.bf16.mxu0 0
      %677 = vmatpush1.bf16.msra.mxu0 %v564
      %678 = vmatprep.subr.bf16.mxu0 0
      %679 = vmatpush1.bf16.msra.mxu0 0
      %680 = vmatprep.subr.bf16.mxu0 0
      %681 = vmatpush1.bf16.msra.mxu0 0
      %682 = vmatprep.subr.bf16.mxu0 0
      %683 = vmatpush1.bf16.msra.mxu0 0
      %684 = vmatprep.subr.bf16.mxu0 0
      %685 = vmatpush1.bf16.msra.mxu0 0
      %686 = vmatprep.subr.bf16.mxu0 0
      %687 = vmatpush1.bf16.msra.mxu0 0
      %688 = vmatprep.subr.bf16.mxu0 0
      %689 = vmatpush1.bf16.msra.mxu0 0
      %690 = vmatprep.subr.bf16.mxu0 0
      %691 = vmatpush1.bf16.msra.mxu0 0
      %692 = vmatprep.subr.bf16.mxu0 0
      %693 = vmatpush1.bf16.msra.mxu0 0
      %694 = vmatprep.mubr.bf16.mxu0 0
      %695 = vmatmul.mubr.bf16.gmra.mrb[0].mxu0 %v408
      %v696 = vpop.f32.mrb[0].mxu0
      %v697 = vadd.f32 %v457, %v696
      %v698 = vpop.f32.mrb[0].mxu0
      %v699 = vpop.f32.mrb[0].mxu0
      %v700 = vadd.f32 %v457, %v699
      %v701 = vpop.f32.mrb[0].mxu0
      %702 = vmatprep.mubr.bf16.mxu0 0
      %703 = vmatmul.mubr.bf16.gmra.mrb[0].mxu0 %v409
      %v704 = vpop.f32.mrb[0].mxu0
      %v705 = vadd.f32 %v457, %v704
      %v706 = vpop.f32.mrb[0].mxu0
      %v707 = vpop.f32.mrb[0].mxu0
      %v708 = vadd.f32 %v457, %v707
      %v709 = vpop.f32.mrb[0].mxu0
      %710 = vmatprep.mubr.bf16.mxu0 0
      %711 = vmatmul.mubr.bf16.gmra.mrb[0].mxu0 %v410
      %v712 = vpop.f32.mrb[0].mxu0
      %v713 = vadd.f32 %v457, %v712
      %v714 = vpop.f32.mrb[0].mxu0
      %v715 = vpop.f32.mrb[0].mxu0
      %v716 = vadd.f32 %v457, %v715
      %v717 = vpop.f32.mrb[0].mxu0
      %718 = vmatprep.mubr.bf16.mxu0 0
      %719 = vmatmul.mubr.bf16.gmra.mrb[0].mxu0 %v411
      %v720 = vpop.f32.mrb[0].mxu0
      %v721 = vadd.f32 %v457, %v720
      %v722 = vpop.f32.mrb[0].mxu0
      %v723 = vpop.f32.mrb[0].mxu0
      %v724 = vadd.f32 %v457, %v723
      %v725 = vpop.f32.mrb[0].mxu0
      %726 = vdwg.mxu0
      %727 = vst [vmem:[#allocation3] sm:$0xff] %v624
      %728 = vst [vmem:[#allocation3 + $0x8] sm:$0xff] %v626
      %729 = vst [vmem:[#allocation3 + $0x10] sm:$0xff] %v697
      %730 = vst [vmem:[#allocation3 + $0x18] sm:$0xff] %v628
      %731 = vst [vmem:[#allocation3 + $0x20] sm:$0xff] %v630
      %732 = vst [vmem:[#allocation3 + $0x28] sm:$0xff] %v700
      %733 = vst [vmem:[#allocation3 + $0x30] sm:$0xff] %v634
      %734 = vst [vmem:[#allocation3 + $0x38] sm:$0xff] %v636
      %735 = vst [vmem:[#allocation3 + $0x40] sm:$0xff] %v705
      %736 = vst [vmem:[#allocation3 + $0x48] sm:$0xff] %v638
      %737 = vst [vmem:[#allocation3 + $0x50] sm:$0xff] %v640
      %738 = vst [vmem:[#allocation3 + $0x58] sm:$0xff] %v708
      %739 = vst [vmem:[#allocation3 + $0x60] sm:$0xff] %v644
      %740 = vst [vmem:[#allocation3 + $0x68] sm:$0xff] %v646
      %741 = vst [vmem:[#allocation3 + $0x70] sm:$0xff] %v713
      %742 = vst [vmem:[#allocation3 + $0x78] sm:$0xff] %v648
      %743 = vst [vmem:[#allocation3 + $0x80] sm:$0xff] %v650
      %744 = vst [vmem:[#allocation3 + $0x88] sm:$0xff] %v716
      %745 = vst [vmem:[#allocation3 + $0x90] sm:$0xff] %v654
      %746 = vst [vmem:[#allocation3 + $0x98] sm:$0xff] %v656
      %747 = vst [vmem:[#allocation3 + $0xa0] sm:$0xff] %v721
      %748 = vst [vmem:[#allocation3 + $0xa8] sm:$0xff] %v658
      %749 = vst [vmem:[#allocation3 + $0xb0] sm:$0xff] %v660
      %750 = vst [vmem:[#allocation3 + $0xb8] sm:$0xff] %v724
      %v751 = vld [vmem:[#allocation3] sm:$0xff]
      %v752 = vld [vmem:[#allocation3 + $0x8] sm:$0xff]
      %v753 = vld [vmem:[#allocation3 + $0x10] sm:$0xff]
      %v754 = vld [vmem:[%s348] sm:$0xff]
      %v755 = vld [vmem:[%s348 + $0x8] sm:$0xf]
      %v756 = vld [vmem:[%s348 + $0xc] sm:$0xff]
      %v757 = vld [vmem:[%s348 + $0x14] sm:$0xf]
      %v758 = vld [vmem:[%s348 + $0x18] sm:$0xff]
      %v759 = vld [vmem:[%s348 + $0x20] sm:$0xf]
      %v760 = vld [vmem:[%s348 + $0x24] sm:$0xff]
      %v761 = vld [vmem:[%s348 + $0x2c] sm:$0xf]
      %v762 = vld [vmem:[%s348 + $0x30] sm:$0xff]
      %v763 = vld [vmem:[%s348 + $0x38] sm:$0xf]
      %v764 = vld [vmem:[%s348 + $0x3c] sm:$0xff]
      %v765 = vld [vmem:[%s348 + $0x44] sm:$0xf]
      %v766 = vld [vmem:[%s348 + $0x48] sm:$0xff]
      %v767 = vld [vmem:[%s348 + $0x50] sm:$0xf]
      %v768 = vld [vmem:[%s348 + $0x54] sm:$0xff]
      %v769 = vld [vmem:[%s348 + $0x5c] sm:$0xf]
      %v770 = vld [vmem:[%s348 + $0x60] sm:$0xff]
      %v771 = vld [vmem:[%s348 + $0x68] sm:$0xf]
      %v772 = vld [vmem:[%s348 + $0x6c] sm:$0xff]
      %v773 = vld [vmem:[%s348 + $0x74] sm:$0xf]
      %v774 = vld [vmem:[%s348 + $0x78] sm:$0xff]
      %v775 = vld [vmem:[%s348 + $0x80] sm:$0xf]
      %v776 = vld [vmem:[%s348 + $0x84] sm:$0xff]
      %v777 = vld [vmem:[%s348 + $0x8c] sm:$0xf]
      %v778 = vld [vmem:[%s348 + $0x90] sm:$0xff]
      %v779 = vld [vmem:[%s348 + $0x98] sm:$0xf]
      %v780 = vld [vmem:[%s348 + $0x9c] sm:$0xff]
      %v781 = vld [vmem:[%s348 + $0xa4] sm:$0xf]
      %v782 = vld [vmem:[%s348 + $0xa8] sm:$0xff]
      %v783 = vld [vmem:[%s348 + $0xb0] sm:$0xf]
      %v784 = vld [vmem:[%s348 + $0xb4] sm:$0xff]
      %v785 = vld [vmem:[%s348 + $0xbc] sm:$0xf]
      %v818 = vunpack.c.l.b16 %v754
      %v819 = vunpack.c.h.b16 %v754
      %v820 = vunpack.c.l.b16 %v755
      %v821 = vunpack.c.l.b16 %v756
      %v822 = vunpack.c.h.b16 %v756
      %v823 = vunpack.c.l.b16 %v757
      %v824 = vunpack.c.l.b16 %v758
      %v825 = vunpack.c.h.b16 %v758
      %v826 = vunpack.c.l.b16 %v759
      %v827 = vunpack.c.l.b16 %v760
      %v828 = vunpack.c.h.b16 %v760
      %v829 = vunpack.c.l.b16 %v761
      %v830 = vunpack.c.l.b16 %v762
      %v831 = vunpack.c.h.b16 %v762
      %v832 = vunpack.c.l.b16 %v763
      %v833 = vunpack.c.l.b16 %v764
      %v834 = vunpack.c.h.b16 %v764
      %v835 = vunpack.c.l.b16 %v765
      %v836 = vunpack.c.l.b16 %v766
      %v837 = vunpack.c.h.b16 %v766
      %v838 = vunpack.c.l.b16 %v767
      %v839 = vunpack.c.l.b16 %v768
      %v840 = vunpack.c.h.b16 %v768
      %v841 = vunpack.c.l.b16 %v769
      %v842 = vunpack.c.l.b16 %v770
      %v843 = vunpack.c.h.b16 %v770
      %v844 = vunpack.c.l.b16 %v771
      %v845 = vunpack.c.l.b16 %v772
      %v846 = vunpack.c.h.b16 %v772
      %v847 = vunpack.c.l.b16 %v773
      %v848 = vunpack.c.l.b16 %v774
      %v849 = vunpack.c.h.b16 %v774
      %v850 = vunpack.c.l.b16 %v775
      %v851 = vunpack.c.l.b16 %v776
      %v852 = vunpack.c.h.b16 %v776
      %v853 = vunpack.c.l.b16 %v777
      %v854 = vunpack.c.l.b16 %v778
      %v855 = vunpack.c.h.b16 %v778
      %v856 = vunpack.c.l.b16 %v779
      %v857 = vunpack.c.l.b16 %v780
      %v858 = vunpack.c.h.b16 %v780
      %v859 = vunpack.c.l.b16 %v781
      %v860 = vunpack.c.l.b16 %v782
      %v861 = vunpack.c.h.b16 %v782
      %v862 = vunpack.c.l.b16 %v783
      %v863 = vunpack.c.l.b16 %v784
      %v864 = vunpack.c.h.b16 %v784
      %v865 = vunpack.c.l.b16 %v785
      %v866 = vpack.c.b16 %v821, %v818
      %v867 = vpack.c.b16 %v822, %v819
      %v868 = vpack.c.b16 %v823, %v820
      %v869 = vpack.c.b16 %v827, %v824
      %v870 = vpack.c.b16 %v828, %v825
      %v871 = vpack.c.b16 %v829, %v826
      %v872 = vpack.c.b16 %v833, %v830
      %v873 = vpack.c.b16 %v834, %v831
      %v874 = vpack.c.b16 %v835, %v832
      %v875 = vpack.c.b16 %v839, %v836
      %v876 = vpack.c.b16 %v840, %v837
      %v877 = vpack.c.b16 %v841, %v838
      %v878 = vpack.c.b16 %v845, %v842
      %v879 = vpack.c.b16 %v846, %v843
      %v880 = vpack.c.b16 %v847, %v844
      %v881 = vpack.c.b16 %v851, %v848
      %v882 = vpack.c.b16 %v852, %v849
      %v883 = vpack.c.b16 %v853, %v850
      %v884 = vpack.c.b16 %v857, %v854
      %v885 = vpack.c.b16 %v858, %v855
      %v886 = vpack.c.b16 %v859, %v856
      %v887 = vpack.c.b16 %v863, %v860
      %v888 = vpack.c.b16 %v864, %v861
      %v889 = vpack.c.b16 %v865, %v862
      %914 = vmatprep.subr.bf16.mxu0 %v867
      %915 = vmatpush1.bf16.msra.mxu0 %v866
      %916 = vmatprep.subr.bf16.mxu0 %v870
      %917 = vmatpush1.bf16.msra.mxu0 %v869
      %918 = vmatprep.subr.bf16.mxu0 %v873
      %919 = vmatpush1.bf16.msra.mxu0 %v872
      %920 = vmatprep.subr.bf16.mxu0 %v876
      %921 = vmatpush1.bf16.msra.mxu0 %v875
      %922 = vmatprep.subr.bf16.mxu0 %v879
      %923 = vmatpush1.bf16.msra.mxu0 %v878
      %924 = vmatprep.subr.bf16.mxu0 %v882
      %925 = vmatpush1.bf16.msra.mxu0 %v881
      %926 = vmatprep.subr.bf16.mxu0 %v885
      %927 = vmatpush1.bf16.msra.mxu0 %v884
      %928 = vmatprep.subr.bf16.mxu0 %v888
      %929 = vmatpush1.bf16.msra.mxu0 %v887
      %930 = vmatprep.subr.bf16.mxu0 0
      %931 = vmatpush1.bf16.msra.mxu0 0
      %932 = vmatprep.subr.bf16.mxu0 0
      %933 = vmatpush1.bf16.msra.mxu0 0
      %934 = vmatprep.subr.bf16.mxu0 0
      %935 = vmatpush1.bf16.msra.mxu0 0
      %936 = vmatprep.subr.bf16.mxu0 0
      %937 = vmatpush1.bf16.msra.mxu0 0
      %938 = vmatprep.subr.bf16.mxu0 0
      %939 = vmatpush1.bf16.msra.mxu0 0
      %940 = vmatprep.subr.bf16.mxu0 0
      %941 = vmatpush1.bf16.msra.mxu0 0
      %942 = vmatprep.subr.bf16.mxu0 0
      %943 = vmatpush1.bf16.msra.mxu0 0
      %944 = vmatprep.subr.bf16.mxu0 0
      %945 = vmatpush1.bf16.msra.mxu0 0
      %946 = vmatprep.mubr.bf16.mxu0 0
      %947 = vmatmul.mubr.bf16.gmra.mrb[0].mxu0 0
      %v948 = vpop.f32.mrb[0].mxu0
      %v949 = vadd.f32 0.0, %v948
      %v950 = vpop.f32.mrb[0].mxu0
      %v951 = vadd.f32 0.0, %v950
      %v952 = vpop.f32.mrb[0].mxu0
      %v953 = vpop.f32.mrb[0].mxu0
      %954 = vdwg.mxu0
      %955 = vmatprep.subr.bf16.mxu0 0
      %956 = vmatpush1.bf16.msra.mxu0 %v868
      %957 = vmatprep.subr.bf16.mxu0 0
      %958 = vmatpush1.bf16.msra.mxu0 %v871
      %959 = vmatprep.subr.bf16.mxu0 0
      %960 = vmatpush1.bf16.msra.mxu0 %v874
      %961 = vmatprep.subr.bf16.mxu0 0
      %962 = vmatpush1.bf16.msra.mxu0 %v877
      %963 = vmatprep.subr.bf16.mxu0 0
      %964 = vmatpush1.bf16.msra.mxu0 %v880
      %965 = vmatprep.subr.bf16.mxu0 0
      %966 = vmatpush1.bf16.msra.mxu0 %v883
      %967 = vmatprep.subr.bf16.mxu0 0
      %968 = vmatpush1.bf16.msra.mxu0 %v886
      %969 = vmatprep.subr.bf16.mxu0 0
      %970 = vmatpush1.bf16.msra.mxu0 %v889
      %971 = vmatprep.subr.bf16.mxu0 0
      %972 = vmatpush1.bf16.msra.mxu0 0
      %973 = vmatprep.subr.bf16.mxu0 0
      %974 = vmatpush1.bf16.msra.mxu0 0
      %975 = vmatprep.subr.bf16.mxu0 0
      %976 = vmatpush1.bf16.msra.mxu0 0
      %977 = vmatprep.subr.bf16.mxu0 0
      %978 = vmatpush1.bf16.msra.mxu0 0
      %979 = vmatprep.subr.bf16.mxu0 0
      %980 = vmatpush1.bf16.msra.mxu0 0
      %981 = vmatprep.subr.bf16.mxu0 0
      %982 = vmatpush1.bf16.msra.mxu0 0
      %983 = vmatprep.subr.bf16.mxu0 0
      %984 = vmatpush1.bf16.msra.mxu0 0
      %985 = vmatprep.subr.bf16.mxu0 0
      %986 = vmatpush1.bf16.msra.mxu0 0
      %987 = vmatprep.mubr.bf16.mxu0 0
      %988 = vmatmul.mubr.bf16.gmra.mrb[0].mxu0 0
      %v989 = vpop.f32.mrb[0].mxu0
      %v990 = vadd.f32 0.0, %v989
      %v991 = vpop.f32.mrb[0].mxu0
      %v992 = vpop.f32.mrb[0].mxu0
      %v993 = vpop.f32.mrb[0].mxu0
      %994 = vdwg.mxu0
      %v995 = vadd.f32 %v751, %v949
      %v996 = vxor.u32 %v995, 2147483648
      %v997 = vmul.f32 %v996, 1.442695
      %v998 = vpow.pop %v997
      %v999 = vadd.f32 %v998, 1.0
      %v1000 = vrcp.pop %v999
      %v1001 = vmul.f32 1.0, %v1000
      %v1002 = vadd.f32 %v752, %v951
      %v1003 = vxor.u32 %v1002, 2147483648
      %v1004 = vmul.f32 %v1003, 1.442695
      %v1005 = vpow.pop %v1004
      %v1006 = vadd.f32 %v1005, 1.0
      %v1007 = vrcp.pop %v1006
      %v1008 = vmul.f32 1.0, %v1007
      %v1009 = vadd.f32 %v990, %v366
      %v1010 = vmul.f32 %v1001, %v1009
      %v1011 = vadd.f32 %v753, %v1010
      %v1012 = vtanh.pop %v1011
      %v1013 = vsub.f32 1.0, %v1008
      %v1014 = vmul.f32 %v1013, %v1012
      %v1015 = vmul.f32 %v1008, 0.0
      %v1016 = vadd.f32 %v1014, %v1015
      %v1017 = vpack.c.bf16 %v1016, %v1016
      %1018 = vst [vmem:[#allocation2] sm:$0xf] %v1017
      %v1019 = vld [vmem:[#allocation3 + $0x18] sm:$0xff]
      %v1020 = vld [vmem:[#allocation3 + $0x20] sm:$0xff]
      %v1021 = vld [vmem:[#allocation3 + $0x28] sm:$0xff]
      %v1022 = vld [vmem:[%s348] sm:$0xff]
      %v1023 = vld [vmem:[%s348 + $0x8] sm:$0xf]
      %v1024 = vld [vmem:[%s348 + $0xc] sm:$0xff]
      %v1025 = vld [vmem:[%s348 + $0x14] sm:$0xf]
      %v1026 = vld [vmem:[%s348 + $0x18] sm:$0xff]
      %v1027 = vld [vmem:[%s348 + $0x20] sm:$0xf]
      %v1028 = vld [vmem:[%s348 + $0x24] sm:$0xff]
      %v1029 = vld [vmem:[%s348 + $0x2c] sm:$0xf]
      %v1030 = vld [vmem:[%s348 + $0x30] sm:$0xff]
      %v1031 = vld [vmem:[%s348 + $0x38] sm:$0xf]
      %v1032 = vld [vmem:[%s348 + $0x3c] sm:$0xff]
      %v1033 = vld [vmem:[%s348 + $0x44] sm:$0xf]
      %v1034 = vld [vmem:[%s348 + $0x48] sm:$0xff]
      %v1035 = vld [vmem:[%s348 + $0x50] sm:$0xf]
      %v1036 = vld [vmem:[%s348 + $0x54] sm:$0xff]
      %v1037 = vld [vmem:[%s348 + $0x5c] sm:$0xf]
      %v1038 = vld [vmem:[%s348 + $0x60] sm:$0xff]
      %v1039 = vld [vmem:[%s348 + $0x68] sm:$0xf]
      %v1040 = vld [vmem:[%s348 + $0x6c] sm:$0xff]
      %v1041 = vld [vmem:[%s348 + $0x74] sm:$0xf]
      %v1042 = vld [vmem:[%s348 + $0x78] sm:$0xff]
      %v1043 = vld [vmem:[%s348 + $0x80] sm:$0xf]
      %v1044 = vld [vmem:[%s348 + $0x84] sm:$0xff]
      %v1045 = vld [vmem:[%s348 + $0x8c] sm:$0xf]
      %v1046 = vld [vmem:[%s348 + $0x90] sm:$0xff]
      %v1047 = vld [vmem:[%s348 + $0x98] sm:$0xf]
      %v1048 = vld [vmem:[%s348 + $0x9c] sm:$0xff]
      %v1049 = vld [vmem:[%s348 + $0xa4] sm:$0xf]
      %v1050 = vld [vmem:[%s348 + $0xa8] sm:$0xff]
      %v1051 = vld [vmem:[%s348 + $0xb0] sm:$0xf]
      %v1052 = vld [vmem:[%s348 + $0xb4] sm:$0xff]
      %v1053 = vld [vmem:[%s348 + $0xbc] sm:$0xf]
      %v1086 = vunpack.c.l.b16 %v1022
      %v1087 = vunpack.c.h.b16 %v1022
      %v1088 = vunpack.c.l.b16 %v1023
      %v1089 = vunpack.c.l.b16 %v1024
      %v1090 = vunpack.c.h.b16 %v1024
      %v1091 = vunpack.c.l.b16 %v1025
      %v1092 = vunpack.c.l.b16 %v1026
      %v1093 = vunpack.c.h.b16 %v1026
      %v1094 = vunpack.c.l.b16 %v1027
      %v1095 = vunpack.c.l.b16 %v1028
      %v1096 = vunpack.c.h.b16 %v1028
      %v1097 = vunpack.c.l.b16 %v1029
      %v1098 = vunpack.c.l.b16 %v1030
      %v1099 = vunpack.c.h.b16 %v1030
      %v1100 = vunpack.c.l.b16 %v1031
      %v1101 = vunpack.c.l.b16 %v1032
      %v1102 = vunpack.c.h.b16 %v1032
      %v1103 = vunpack.c.l.b16 %v1033
      %v1104 = vunpack.c.l.b16 %v1034
      %v1105 = vunpack.c.h.b16 %v1034
      %v1106 = vunpack.c.l.b16 %v1035
      %v1107 = vunpack.c.l.b16 %v1036
      %v1108 = vunpack.c.h.b16 %v1036
      %v1109 = vunpack.c.l.b16 %v1037
      %v1110 = vunpack.c.l.b16 %v1038
      %v1111 = vunpack.c.h.b16 %v1038
      %v1112 = vunpack.c.l.b16 %v1039
      %v1113 = vunpack.c.l.b16 %v1040
      %v1114 = vunpack.c.h.b16 %v1040
      %v1115 = vunpack.c.l.b16 %v1041
      %v1116 = vunpack.c.l.b16 %v1042
      %v1117 = vunpack.c.h.b16 %v1042
      %v1118 = vunpack.c.l.b16 %v1043
      %v1119 = vunpack.c.l.b16 %v1044
      %v1120 = vunpack.c.h.b16 %v1044
      %v1121 = vunpack.c.l.b16 %v1045
      %v1122 = vunpack.c.l.b16 %v1046
      %v1123 = vunpack.c.h.b16 %v1046
      %v1124 = vunpack.c.l.b16 %v1047
      %v1125 = vunpack.c.l.b16 %v1048
      %v1126 = vunpack.c.h.b16 %v1048
      %v1127 = vunpack.c.l.b16 %v1049
      %v1128 = vunpack.c.l.b16 %v1050
      %v1129 = vunpack.c.h.b16 %v1050
      %v1130 = vunpack.c.l.b16 %v1051
      %v1131 = vunpack.c.l.b16 %v1052
      %v1132 = vunpack.c.h.b16 %v1052
      %v1133 = vunpack.c.l.b16 %v1053
      %v1134 = vpack.c.b16 %v1089, %v1086
      %v1135 = vpack.c.b16 %v1090, %v1087
      %v1136 = vpack.c.b16 %v1091, %v1088
      %v1137 = vpack.c.b16 %v1095, %v1092
      %v1138 = vpack.c.b16 %v1096, %v1093
      %v1139 = vpack.c.b16 %v1097, %v1094
      %v1140 = vpack.c.b16 %v1101, %v1098
      %v1141 = vpack.c.b16 %v1102, %v1099
      %v1142 = vpack.c.b16 %v1103, %v1100
      %v1143 = vpack.c.b16 %v1107, %v1104
      %v1144 = vpack.c.b16 %v1108, %v1105
      %v1145 = vpack.c.b16 %v1109, %v1106
      %v1146 = vpack.c.b16 %v1113, %v1110
      %v1147 = vpack.c.b16 %v1114, %v1111
      %v1148 = vpack.c.b16 %v1115, %v1112
      %v1149 = vpack.c.b16 %v1119, %v1116
      %v1150 = vpack.c.b16 %v1120, %v1117
      %v1151 = vpack.c.b16 %v1121, %v1118
      %v1152 = vpack.c.b16 %v1125, %v1122
      %v1153 = vpack.c.b16 %v1126, %v1123
      %v1154 = vpack.c.b16 %v1127, %v1124
      %v1155 = vpack.c.b16 %v1131, %v1128
      %v1156 = vpack.c.b16 %v1132, %v1129
      %v1157 = vpack.c.b16 %v1133, %v1130
      %1182 = vmatprep.subr.bf16.mxu0 %v1135
      %1183 = vmatpush1.bf16.msra.mxu0 %v1134
      %1184 = vmatprep.subr.bf16.mxu0 %v1138
      %1185 = vmatpush1.bf16.msra.mxu0 %v1137
      %1186 = vmatprep.subr.bf16.mxu0 %v1141
      %1187 = vmatpush1.bf16.msra.mxu0 %v1140
      %1188 = vmatprep.subr.bf16.mxu0 %v1144
      %1189 = vmatpush1.bf16.msra.mxu0 %v1143
      %1190 = vmatprep.subr.bf16.mxu0 %v1147
      %1191 = vmatpush1.bf16.msra.mxu0 %v1146
      %1192 = vmatprep.subr.bf16.mxu0 %v1150
      %1193 = vmatpush1.bf16.msra.mxu0 %v1149
      %1194 = vmatprep.subr.bf16.mxu0 %v1153
      %1195 = vmatpush1.bf16.msra.mxu0 %v1152
      %1196 = vmatprep.subr.bf16.mxu0 %v1156
      %1197 = vmatpush1.bf16.msra.mxu0 %v1155
      %1198 = vmatprep.subr.bf16.mxu0 0
      %1199 = vmatpush1.bf16.msra.mxu0 0
      %1200 = vmatprep.subr.bf16.mxu0 0
      %1201 = vmatpush1.bf16.msra.mxu0 0
      %1202 = vmatprep.subr.bf16.mxu0 0
      %1203 = vmatpush1.bf16.msra.mxu0 0
      %1204 = vmatprep.subr.bf16.mxu0 0
      %1205 = vmatpush1.bf16.msra.mxu0 0
      %1206 = vmatprep.subr.bf16.mxu0 0
      %1207 = vmatpush1.bf16.msra.mxu0 0
      %1208 = vmatprep.subr.bf16.mxu0 0
      %1209 = vmatpush1.bf16.msra.mxu0 0
      %1210 = vmatprep.subr.bf16.mxu0 0
      %1211 = vmatpush1.bf16.msra.mxu0 0
      %1212 = vmatprep.subr.bf16.mxu0 0
      %1213 = vmatpush1.bf16.msra.mxu0 0
      %1214 = vmatprep.mubr.bf16.mxu0 0
      %1215 = vmatmul.mubr.bf16.gmra.mrb[0].mxu0 %v1017
      %v1216 = vpop.f32.mrb[0].mxu0
      %v1217 = vadd.f32 0.0, %v1216
      %v1218 = vpop.f32.mrb[0].mxu0
      %v1219 = vadd.f32 0.0, %v1218
      %v1220 = vpop.f32.mrb[0].mxu0
      %v1221 = vpop.f32.mrb[0].mxu0
      %1222 = vdwg.mxu0
      %1223 = vmatprep.subr.bf16.mxu0 0
      %1224 = vmatpush1.bf16.msra.mxu0 %v1136
      %1225 = vmatprep.subr.bf16.mxu0 0
      %1226 = vmatpush1.bf16.msra.mxu0 %v1139
      %1227 = vmatprep.subr.bf16.mxu0 0
      %1228 = vmatpush1.bf16.msra.mxu0 %v1142
      %1229 = vmatprep.subr.bf16.mxu0 0
      %1230 = vmatpush1.bf16.msra.mxu0 %v1145
      %1231 = vmatprep.subr.bf16.mxu0 0
      %1232 = vmatpush1.bf16.msra.mxu0 %v1148
      %1233 = vmatprep.subr.bf16.mxu0 0
      %1234 = vmatpush1.bf16.msra.mxu0 %v1151
      %1235 = vmatprep.subr.bf16.mxu0 0
      %1236 = vmatpush1.bf16.msra.mxu0 %v1154
      %1237 = vmatprep.subr.bf16.mxu0 0
      %1238 = vmatpush1.bf16.msra.mxu0 %v1157
      %1239 = vmatprep.subr.bf16.mxu0 0
      %1240 = vmatpush1.bf16.msra.mxu0 0
      %1241 = vmatprep.subr.bf16.mxu0 0
      %1242 = vmatpush1.bf16.msra.mxu0 0
      %1243 = vmatprep.subr.bf16.mxu0 0
      %1244 = vmatpush1.bf16.msra.mxu0 0
      %1245 = vmatprep.subr.bf16.mxu0 0
      %1246 = vmatpush1.bf16.msra.mxu0 0
      %1247 = vmatprep.subr.bf16.mxu0 0
      %1248 = vmatpush1.bf16.msra.mxu0 0
      %1249 = vmatprep.subr.bf16.mxu0 0
      %1250 = vmatpush1.bf16.msra.mxu0 0
      %1251 = vmatprep.subr.bf16.mxu0 0
      %1252 = vmatpush1.bf16.msra.mxu0 0
      %1253 = vmatprep.subr.bf16.mxu0 0
      %1254 = vmatpush1.bf16.msra.mxu0 0
      %1255 = vmatprep.mubr.bf16.mxu0 0
      %1256 = vmatmul.mubr.bf16.gmra.mrb[0].mxu0 %v1017
      %v1257 = vpop.f32.mrb[0].mxu0
      %v1258 = vadd.f32 0.0, %v1257
      %v1259 = vpop.f32.mrb[0].mxu0
      %v1260 = vpop.f32.mrb[0].mxu0
      %v1261 = vpop.f32.mrb[0].mxu0
      %1262 = vdwg.mxu0
      %v1263 = vadd.f32 %v1019, %v1217
      %v1264 = vxor.u32 %v1263, 2147483648
      %v1265 = vmul.f32 %v1264, 1.442695
      %v1266 = vpow.pop %v1265
      %v1267 = vadd.f32 %v1266, 1.0
      %v1268 = vrcp.pop %v1267
      %v1269 = vmul.f32 1.0, %v1268
      %v1270 = vadd.f32 %v1020, %v1219
      %v1271 = vxor.u32 %v1270, 2147483648
      %v1272 = vmul.f32 %v1271, 1.442695
      %v1273 = vpow.pop %v1272
      %v1274 = vadd.f32 %v1273, 1.0
      %v1275 = vrcp.pop %v1274
      %v1276 = vmul.f32 1.0, %v1275
      %v1277 = vadd.f32 %v1258, %v366
      %v1278 = vmul.f32 %v1269, %v1277
      %v1279 = vadd.f32 %v1021, %v1278
      %v1280 = vtanh.pop %v1279
      %v1281 = vsub.f32 1.0, %v1276
      %v1282 = vmul.f32 %v1281, %v1280
      %v1283 = vmul.f32 %v1276, %v1016
      %v1284 = vadd.f32 %v1282, %v1283
      %v1285 = vpack.c.bf16 %v1284, %v1284
      %v1287 = vrot.slane %v1285, 4
      %1289 = vst [vmem:[#allocation2] sm:$0xf0] %v1287
      %v1290 = vld [vmem:[#allocation3 + $0x30] sm:$0xff]
      %v1291 = vld [vmem:[#allocation3 + $0x38] sm:$0xff]
      %v1292 = vld [vmem:[#allocation3 + $0x40] sm:$0xff]
      %v1293 = vld [vmem:[%s348] sm:$0xff]
      %v1294 = vld [vmem:[%s348 + $0x8] sm:$0xf]
      %v1295 = vld [vmem:[%s348 + $0xc] sm:$0xff]
      %v1296 = vld [vmem:[%s348 + $0x14] sm:$0xf]
      %v1297 = vld [vmem:[%s348 + $0x18] sm:$0xff]
      %v1298 = vld [vmem:[%s348 + $0x20] sm:$0xf]
      %v1299 = vld [vmem:[%s348 + $0x24] sm:$0xff]
      %v1300 = vld [vmem:[%s348 + $0x2c] sm:$0xf]
      %v1301 = vld [vmem:[%s348 + $0x30] sm:$0xff]
      %v1302 = vld [vmem:[%s348 + $0x38] sm:$0xf]
      %v1303 = vld [vmem:[%s348 + $0x3c] sm:$0xff]
      %v1304 = vld [vmem:[%s348 + $0x44] sm:$0xf]
      %v1305 = vld [vmem:[%s348 + $0x48] sm:$0xff]
      %v1306 = vld [vmem:[%s348 + $0x50] sm:$0xf]
      %v1307 = vld [vmem:[%s348 + $0x54] sm:$0xff]
      %v1308 = vld [vmem:[%s348 + $0x5c] sm:$0xf]
      %v1309 = vld [vmem:[%s348 + $0x60] sm:$0xff]
      %v1310 = vld [vmem:[%s348 + $0x68] sm:$0xf]
      %v1311 = vld [vmem:[%s348 + $0x6c] sm:$0xff]
      %v1312 = vld [vmem:[%s348 + $0x74] sm:$0xf]
      %v1313 = vld [vmem:[%s348 + $0x78] sm:$0xff]
      %v1314 = vld [vmem:[%s348 + $0x80] sm:$0xf]
      %v1315 = vld [vmem:[%s348 + $0x84] sm:$0xff]
      %v1316 = vld [vmem:[%s348 + $0x8c] sm:$0xf]
      %v1317 = vld [vmem:[%s348 + $0x90] sm:$0xff]
      %v1318 = vld [vmem:[%s348 + $0x98] sm:$0xf]
      %v1319 = vld [vmem:[%s348 + $0x9c] sm:$0xff]
      %v1320 = vld [vmem:[%s348 + $0xa4] sm:$0xf]
      %v1321 = vld [vmem:[%s348 + $0xa8] sm:$0xff]
      %v1322 = vld [vmem:[%s348 + $0xb0] sm:$0xf]
      %v1323 = vld [vmem:[%s348 + $0xb4] sm:$0xff]
      %v1324 = vld [vmem:[%s348 + $0xbc] sm:$0xf]
      %v1357 = vunpack.c.l.b16 %v1293
      %v1358 = vunpack.c.h.b16 %v1293
      %v1359 = vunpack.c.l.b16 %v1294
      %v1360 = vunpack.c.l.b16 %v1295
      %v1361 = vunpack.c.h.b16 %v1295
      %v1362 = vunpack.c.l.b16 %v1296
      %v1363 = vunpack.c.l.b16 %v1297
      %v1364 = vunpack.c.h.b16 %v1297
      %v1365 = vunpack.c.l.b16 %v1298
      %v1366 = vunpack.c.l.b16 %v1299
      %v1367 = vunpack.c.h.b16 %v1299
      %v1368 = vunpack.c.l.b16 %v1300
      %v1369 = vunpack.c.l.b16 %v1301
      %v1370 = vunpack.c.h.b16 %v1301
      %v1371 = vunpack.c.l.b16 %v1302
      %v1372 = vunpack.c.l.b16 %v1303
      %v1373 = vunpack.c.h.b16 %v1303
      %v1374 = vunpack.c.l.b16 %v1304
      %v1375 = vunpack.c.l.b16 %v1305
      %v1376 = vunpack.c.h.b16 %v1305
      %v1377 = vunpack.c.l.b16 %v1306
      %v1378 = vunpack.c.l.b16 %v1307
      %v1379 = vunpack.c.h.b16 %v1307
      %v1380 = vunpack.c.l.b16 %v1308
      %v1381 = vunpack.c.l.b16 %v1309
      %v1382 = vunpack.c.h.b16 %v1309
      %v1383 = vunpack.c.l.b16 %v1310
      %v1384 = vunpack.c.l.b16 %v1311
      %v1385 = vunpack.c.h.b16 %v1311
      %v1386 = vunpack.c.l.b16 %v1312
      %v1387 = vunpack.c.l.b16 %v1313
      %v1388 = vunpack.c.h.b16 %v1313
      %v1389 = vunpack.c.l.b16 %v1314
      %v1390 = vunpack.c.l.b16 %v1315
      %v1391 = vunpack.c.h.b16 %v1315
      %v1392 = vunpack.c.l.b16 %v1316
      %v1393 = vunpack.c.l.b16 %v1317
      %v1394 = vunpack.c.h.b16 %v1317
      %v1395 = vunpack.c.l.b16 %v1318
      %v1396 = vunpack.c.l.b16 %v1319
      %v1397 = vunpack.c.h.b16 %v1319
      %v1398 = vunpack.c.l.b16 %v1320
      %v1399 = vunpack.c.l.b16 %v1321
      %v1400 = vunpack.c.h.b16 %v1321
      %v1401 = vunpack.c.l.b16 %v1322
      %v1402 = vunpack.c.l.b16 %v1323
      %v1403 = vunpack.c.h.b16 %v1323
      %v1404 = vunpack.c.l.b16 %v1324
      %v1405 = vpack.c.b16 %v1360, %v1357
      %v1406 = vpack.c.b16 %v1361, %v1358
      %v1407 = vpack.c.b16 %v1362, %v1359
      %v1408 = vpack.c.b16 %v1366, %v1363
      %v1409 = vpack.c.b16 %v1367, %v1364
      %v1410 = vpack.c.b16 %v1368, %v1365
      %v1411 = vpack.c.b16 %v1372, %v1369
      %v1412 = vpack.c.b16 %v1373, %v1370
      %v1413 = vpack.c.b16 %v1374, %v1371
      %v1414 = vpack.c.b16 %v1378, %v1375
      %v1415 = vpack.c.b16 %v1379, %v1376
      %v1416 = vpack.c.b16 %v1380, %v1377
      %v1417 = vpack.c.b16 %v1384, %v1381
      %v1418 = vpack.c.b16 %v1385, %v1382
      %v1419 = vpack.c.b16 %v1386, %v1383
      %v1420 = vpack.c.b16 %v1390, %v1387
      %v1421 = vpack.c.b16 %v1391, %v1388
      %v1422 = vpack.c.b16 %v1392, %v1389
      %v1423 = vpack.c.b16 %v1396, %v1393
      %v1424 = vpack.c.b16 %v1397, %v1394
      %v1425 = vpack.c.b16 %v1398, %v1395
      %v1426 = vpack.c.b16 %v1402, %v1399
      %v1427 = vpack.c.b16 %v1403, %v1400
      %v1428 = vpack.c.b16 %v1404, %v1401
      %1453 = vmatprep.subr.bf16.mxu0 %v1406
      %1454 = vmatpush1.bf16.msra.mxu0 %v1405
      %1455 = vmatprep.subr.bf16.mxu0 %v1409
      %1456 = vmatpush1.bf16.msra.mxu0 %v1408
      %1457 = vmatprep.subr.bf16.mxu0 %v1412
      %1458 = vmatpush1.bf16.msra.mxu0 %v1411
      %1459 = vmatprep.subr.bf16.mxu0 %v1415
      %1460 = vmatpush1.bf16.msra.mxu0 %v1414
      %1461 = vmatprep.subr.bf16.mxu0 %v1418
      %1462 = vmatpush1.bf16.msra.mxu0 %v1417
      %1463 = vmatprep.subr.bf16.mxu0 %v1421
      %1464 = vmatpush1.bf16.msra.mxu0 %v1420
      %1465 = vmatprep.subr.bf16.mxu0 %v1424
      %1466 = vmatpush1.bf16.msra.mxu0 %v1423
      %1467 = vmatprep.subr.bf16.mxu0 %v1427
      %1468 = vmatpush1.bf16.msra.mxu0 %v1426
      %1469 = vmatprep.subr.bf16.mxu0 0
      %1470 = vmatpush1.bf16.msra.mxu0 0
      %1471 = vmatprep.subr.bf16.mxu0 0
      %1472 = vmatpush1.bf16.msra.mxu0 0
      %1473 = vmatprep.subr.bf16.mxu0 0
      %1474 = vmatpush1.bf16.msra.mxu0 0
      %1475 = vmatprep.subr.bf16.mxu0 0
      %1476 = vmatpush1.bf16.msra.mxu0 0
      %1477 = vmatprep.subr.bf16.mxu0 0
      %1478 = vmatpush1.bf16.msra.mxu0 0
      %1479 = vmatprep.subr.bf16.mxu0 0
      %1480 = vmatpush1.bf16.msra.mxu0 0
      %1481 = vmatprep.subr.bf16.mxu0 0
      %1482 = vmatpush1.bf16.msra.mxu0 0
      %1483 = vmatprep.subr.bf16.mxu0 0
      %1484 = vmatpush1.bf16.msra.mxu0 0
      %1485 = vmatprep.mubr.bf16.mxu0 0
      %1486 = vmatmul.mubr.bf16.gmra.mrb[0].mxu0 %v1285
      %v1487 = vpop.f32.mrb[0].mxu0
      %v1488 = vadd.f32 0.0, %v1487
      %v1489 = vpop.f32.mrb[0].mxu0
      %v1490 = vadd.f32 0.0, %v1489
      %v1491 = vpop.f32.mrb[0].mxu0
      %v1492 = vpop.f32.mrb[0].mxu0
      %1493 = vdwg.mxu0
      %1494 = vmatprep.subr.bf16.mxu0 0
      %1495 = vmatpush1.bf16.msra.mxu0 %v1407
      %1496 = vmatprep.subr.bf16.mxu0 0
      %1497 = vmatpush1.bf16.msra.mxu0 %v1410
      %1498 = vmatprep.subr.bf16.mxu0 0
      %1499 = vmatpush1.bf16.msra.mxu0 %v1413
      %1500 = vmatprep.subr.bf16.mxu0 0
      %1501 = vmatpush1.bf16.msra.mxu0 %v1416
      %1502 = vmatprep.subr.bf16.mxu0 0
      %1503 = vmatpush1.bf16.msra.mxu0 %v1419
      %1504 = vmatprep.subr.bf16.mxu0 0
      %1505 = vmatpush1.bf16.msra.mxu0 %v1422
      %1506 = vmatprep.subr.bf16.mxu0 0
      %1507 = vmatpush1.bf16.msra.mxu0 %v1425
      %1508 = vmatprep.subr.bf16.mxu0 0
      %1509 = vmatpush1.bf16.msra.mxu0 %v1428
      %1510 = vmatprep.subr.bf16.mxu0 0
      %1511 = vmatpush1.bf16.msra.mxu0 0
      %1512 = vmatprep.subr.bf16.mxu0 0
      %1513 = vmatpush1.bf16.msra.mxu0 0
      %1514 = vmatprep.subr.bf16.mxu0 0
      %1515 = vmatpush1.bf16.msra.mxu0 0
      %1516 = vmatprep.subr.bf16.mxu0 0
      %1517 = vmatpush1.bf16.msra.mxu0 0
      %1518 = vmatprep.subr.bf16.mxu0 0
      %1519 = vmatpush1.bf16.msra.mxu0 0
      %1520 = vmatprep.subr.bf16.mxu0 0
      %1521 = vmatpush1.bf16.msra.mxu0 0
      %1522 = vmatprep.subr.bf16.mxu0 0
      %1523 = vmatpush1.bf16.msra.mxu0 0
      %1524 = vmatprep.subr.bf16.mxu0 0
      %1525 = vmatpush1.bf16.msra.mxu0 0
      %1526 = vmatprep.mubr.bf16.mxu0 0
      %1527 = vmatmul.mubr.bf16.gmra.mrb[0].mxu0 %v1285
      %v1528 = vpop.f32.mrb[0].mxu0
      %v1529 = vadd.f32 0.0, %v1528
      %v1530 = vpop.f32.mrb[0].mxu0
      %v1531 = vpop.f32.mrb[0].mxu0
      %v1532 = vpop.f32.mrb[0].mxu0
      %1533 = vdwg.mxu0
      %v1534 = vadd.f32 %v1290, %v1488
      %v1535 = vxor.u32 %v1534, 2147483648
      %v1536 = vmul.f32 %v1535, 1.442695
      %v1537 = vpow.pop %v1536
      %v1538 = vadd.f32 %v1537, 1.0
      %v1539 = vrcp.pop %v1538
      %v1540 = vmul.f32 1.0, %v1539
      %v1541 = vadd.f32 %v1291, %v1490
      %v1542 = vxor.u32 %v1541, 2147483648
      %v1543 = vmul.f32 %v1542, 1.442695
      %v1544 = vpow.pop %v1543
      %v1545 = vadd.f32 %v1544, 1.0
      %v1546 = vrcp.pop %v1545
      %v1547 = vmul.f32 1.0, %v1546
      %v1548 = vadd.f32 %v1529, %v366
      %v1549 = vmul.f32 %v1540, %v1548
      %v1550 = vadd.f32 %v1292, %v1549
      %v1551 = vtanh.pop %v1550
      %v1552 = vsub.f32 1.0, %v1547
      %v1553 = vmul.f32 %v1552, %v1551
      %v1554 = vmul.f32 %v1547, %v1284
      %v1555 = vadd.f32 %v1553, %v1554
      %v1556 = vpack.c.bf16 %v1555, %v1555
      %1557 = vst [vmem:[#allocation2 + $0x8] sm:$0xf] %v1556
      %v1558 = vld [vmem:[#allocation3 + $0x48] sm:$0xff]
      %v1559 = vld [vmem:[#allocation3 + $0x50] sm:$0xff]
      %v1560 = vld [vmem:[#allocation3 + $0x58] sm:$0xff]
      %v1561 = vld [vmem:[%s348] sm:$0xff]
      %v1562 = vld [vmem:[%s348 + $0x8] sm:$0xf]
      %v1563 = vld [vmem:[%s348 + $0xc] sm:$0xff]
      %v1564 = vld [vmem:[%s348 + $0x14] sm:$0xf]
      %v1565 = vld [vmem:[%s348 + $0x18] sm:$0xff]
      %v1566 = vld [vmem:[%s348 + $0x20] sm:$0xf]
      %v1567 = vld [vmem:[%s348 + $0x24] sm:$0xff]
      %v1568 = vld [vmem:[%s348 + $0x2c] sm:$0xf]
      %v1569 = vld [vmem:[%s348 + $0x30] sm:$0xff]
      %v1570 = vld [vmem:[%s348 + $0x38] sm:$0xf]
      %v1571 = vld [vmem:[%s348 + $0x3c] sm:$0xff]
      %v1572 = vld [vmem:[%s348 + $0x44] sm:$0xf]
      %v1573 = vld [vmem:[%s348 + $0x48] sm:$0xff]
      %v1574 = vld [vmem:[%s348 + $0x50] sm:$0xf]
      %v1575 = vld [vmem:[%s348 + $0x54] sm:$0xff]
      %v1576 = vld [vmem:[%s348 + $0x5c] sm:$0xf]
      %v1577 = vld [vmem:[%s348 + $0x60] sm:$0xff]
      %v1578 = vld [vmem:[%s348 + $0x68] sm:$0xf]
      %v1579 = vld [vmem:[%s348 + $0x6c] sm:$0xff]
      %v1580 = vld [vmem:[%s348 + $0x74] sm:$0xf]
      %v1581 = vld [vmem:[%s348 + $0x78] sm:$0xff]
      %v1582 = vld [vmem:[%s348 + $0x80] sm:$0xf]
      %v1583 = vld [vmem:[%s348 + $0x84] sm:$0xff]
      %v1584 = vld [vmem:[%s348 + $0x8c] sm:$0xf]
      %v1585 = vld [vmem:[%s348 + $0x90] sm:$0xff]
      %v1586 = vld [vmem:[%s348 + $0x98] sm:$0xf]
      %v1587 = vld [vmem:[%s348 + $0x9c] sm:$0xff]
      %v1588 = vld [vmem:[%s348 + $0xa4] sm:$0xf]
      %v1589 = vld [vmem:[%s348 + $0xa8] sm:$0xff]
      %v1590 = vld [vmem:[%s348 + $0xb0] sm:$0xf]
      %v1591 = vld [vmem:[%s348 + $0xb4] sm:$0xff]
      %v1592 = vld [vmem:[%s348 + $0xbc] sm:$0xf]
      %v1625 = vunpack.c.l.b16 %v1561
      %v1626 = vunpack.c.h.b16 %v1561
      %v1627 = vunpack.c.l.b16 %v1562
      %v1628 = vunpack.c.l.b16 %v1563
      %v1629 = vunpack.c.h.b16 %v1563
      %v1630 = vunpack.c.l.b16 %v1564
      %v1631 = vunpack.c.l.b16 %v1565
      %v1632 = vunpack.c.h.b16 %v1565
      %v1633 = vunpack.c.l.b16 %v1566
      %v1634 = vunpack.c.l.b16 %v1567
      %v1635 = vunpack.c.h.b16 %v1567
      %v1636 = vunpack.c.l.b16 %v1568
      %v1637 = vunpack.c.l.b16 %v1569
      %v1638 = vunpack.c.h.b16 %v1569
      %v1639 = vunpack.c.l.b16 %v1570
      %v1640 = vunpack.c.l.b16 %v1571
      %v1641 = vunpack.c.h.b16 %v1571
      %v1642 = vunpack.c.l.b16 %v1572
      %v1643 = vunpack.c.l.b16 %v1573
      %v1644 = vunpack.c.h.b16 %v1573
      %v1645 = vunpack.c.l.b16 %v1574
      %v1646 = vunpack.c.l.b16 %v1575
      %v1647 = vunpack.c.h.b16 %v1575
      %v1648 = vunpack.c.l.b16 %v1576
      %v1649 = vunpack.c.l.b16 %v1577
      %v1650 = vunpack.c.h.b16 %v1577
      %v1651 = vunpack.c.l.b16 %v1578
      %v1652 = vunpack.c.l.b16 %v1579
      %v1653 = vunpack.c.h.b16 %v1579
      %v1654 = vunpack.c.l.b16 %v1580
      %v1655 = vunpack.c.l.b16 %v1581
      %v1656 = vunpack.c.h.b16 %v1581
      %v1657 = vunpack.c.l.b16 %v1582
      %v1658 = vunpack.c.l.b16 %v1583
      %v1659 = vunpack.c.h.b16 %v1583
      %v1660 = vunpack.c.l.b16 %v1584
      %v1661 = vunpack.c.l.b16 %v1585
      %v1662 = vunpack.c.h.b16 %v1585
      %v1663 = vunpack.c.l.b16 %v1586
      %v1664 = vunpack.c.l.b16 %v1587
      %v1665 = vunpack.c.h.b16 %v1587
      %v1666 = vunpack.c.l.b16 %v1588
      %v1667 = vunpack.c.l.b16 %v1589
      %v1668 = vunpack.c.h.b16 %v1589
      %v1669 = vunpack.c.l.b16 %v1590
      %v1670 = vunpack.c.l.b16 %v1591
      %v1671 = vunpack.c.h.b16 %v1591
      %v1672 = vunpack.c.l.b16 %v1592
      %v1673 = vpack.c.b16 %v1628, %v1625
      %v1674 = vpack.c.b16 %v1629, %v1626
      %v1675 = vpack.c.b16 %v1630, %v1627
      %v1676 = vpack.c.b16 %v1634, %v1631
      %v1677 = vpack.c.b16 %v1635, %v1632
      %v1678 = vpack.c.b16 %v1636, %v1633
      %v1679 = vpack.c.b16 %v1640, %v1637
      %v1680 = vpack.c.b16 %v1641, %v1638
      %v1681 = vpack.c.b16 %v1642, %v1639
      %v1682 = vpack.c.b16 %v1646, %v1643
      %v1683 = vpack.c.b16 %v1647, %v1644
      %v1684 = vpack.c.b16 %v1648, %v1645
      %v1685 = vpack.c.b16 %v1652, %v1649
      %v1686 = vpack.c.b16 %v1653, %v1650
      %v1687 = vpack.c.b16 %v1654, %v1651
      %v1688 = vpack.c.b16 %v1658, %v1655
      %v1689 = vpack.c.b16 %v1659, %v1656
      %v1690 = vpack.c.b16 %v1660, %v1657
      %v1691 = vpack.c.b16 %v1664, %v1661
      %v1692 = vpack.c.b16 %v1665, %v1662
      %v1693 = vpack.c.b16 %v1666, %v1663
      %v1694 = vpack.c.b16 %v1670, %v1667
      %v1695 = vpack.c.b16 %v1671, %v1668
      %v1696 = vpack.c.b16 %v1672, %v1669
      %1721 = vmatprep.subr.bf16.mxu0 %v1674
      %1722 = vmatpush1.bf16.msra.mxu0 %v1673
      %1723 = vmatprep.subr.bf16.mxu0 %v1677
      %1724 = vmatpush1.bf16.msra.mxu0 %v1676
      %1725 = vmatprep.subr.bf16.mxu0 %v1680
      %1726 = vmatpush1.bf16.msra.mxu0 %v1679
      %1727 = vmatprep.subr.bf16.mxu0 %v1683
      %1728 = vmatpush1.bf16.msra.mxu0 %v1682
      %1729 = vmatprep.subr.bf16.mxu0 %v1686
      %1730 = vmatpush1.bf16.msra.mxu0 %v1685
      %1731 = vmatprep.subr.bf16.mxu0 %v1689
      %1732 = vmatpush1.bf16.msra.mxu0 %v1688
      %1733 = vmatprep.subr.bf16.mxu0 %v1692
      %1734 = vmatpush1.bf16.msra.mxu0 %v1691
      %1735 = vmatprep.subr.bf16.mxu0 %v1695
      %1736 = vmatpush1.bf16.msra.mxu0 %v1694
      %1737 = vmatprep.subr.bf16.mxu0 0
      %1738 = vmatpush1.bf16.msra.mxu0 0
      %1739 = vmatprep.subr.bf16.mxu0 0
      %1740 = vmatpush1.bf16.msra.mxu0 0
      %1741 = vmatprep.subr.bf16.mxu0 0
      %1742 = vmatpush1.bf16.msra.mxu0 0
      %1743 = vmatprep.subr.bf16.mxu0 0
      %1744 = vmatpush1.bf16.msra.mxu0 0
      %1745 = vmatprep.subr.bf16.mxu0 0
      %1746 = vmatpush1.bf16.msra.mxu0 0
      %1747 = vmatprep.subr.bf16.mxu0 0
      %1748 = vmatpush1.bf16.msra.mxu0 0
      %1749 = vmatprep.subr.bf16.mxu0 0
      %1750 = vmatpush1.bf16.msra.mxu0 0
      %1751 = vmatprep.subr.bf16.mxu0 0
      %1752 = vmatpush1.bf16.msra.mxu0 0
      %1753 = vmatprep.mubr.bf16.mxu0 0
      %1754 = vmatmul.mubr.bf16.gmra.mrb[0].mxu0 %v1556
      %v1755 = vpop.f32.mrb[0].mxu0
      %v1756 = vadd.f32 0.0, %v1755
      %v1757 = vpop.f32.mrb[0].mxu0
      %v1758 = vadd.f32 0.0, %v1757
      %v1759 = vpop.f32.mrb[0].mxu0
      %v1760 = vpop.f32.mrb[0].mxu0
      %1761 = vdwg.mxu0
      %1762 = vmatprep.subr.bf16.mxu0 0
      %1763 = vmatpush1.bf16.msra.mxu0 %v1675
      %1764 = vmatprep.subr.bf16.mxu0 0
      %1765 = vmatpush1.bf16.msra.mxu0 %v1678
      %1766 = vmatprep.subr.bf16.mxu0 0
      %1767 = vmatpush1.bf16.msra.mxu0 %v1681
      %1768 = vmatprep.subr.bf16.mxu0 0
      %1769 = vmatpush1.bf16.msra.mxu0 %v1684
      %1770 = vmatprep.subr.bf16.mxu0 0
      %1771 = vmatpush1.bf16.msra.mxu0 %v1687
      %1772 = vmatprep.subr.bf16.mxu0 0
      %1773 = vmatpush1.bf16.msra.mxu0 %v1690
      %1774 = vmatprep.subr.bf16.mxu0 0
      %1775 = vmatpush1.bf16.msra.mxu0 %v1693
      %1776 = vmatprep.subr.bf16.mxu0 0
      %1777 = vmatpush1.bf16.msra.mxu0 %v1696
      %1778 = vmatprep.subr.bf16.mxu0 0
      %1779 = vmatpush1.bf16.msra.mxu0 0
      %1780 = vmatprep.subr.bf16.mxu0 0
      %1781 = vmatpush1.bf16.msra.mxu0 0
      %1782 = vmatprep.subr.bf16.mxu0 0
      %1783 = vmatpush1.bf16.msra.mxu0 0
      %1784 = vmatprep.subr.bf16.mxu0 0
      %1785 = vmatpush1.bf16.msra.mxu0 0
      %1786 = vmatprep.subr.bf16.mxu0 0
      %1787 = vmatpush1.bf16.msra.mxu0 0
      %1788 = vmatprep.subr.bf16.mxu0 0
      %1789 = vmatpush1.bf16.msra.mxu0 0
      %1790 = vmatprep.subr.bf16.mxu0 0
      %1791 = vmatpush1.bf16.msra.mxu0 0
      %1792 = vmatprep.subr.bf16.mxu0 0
      %1793 = vmatpush1.bf16.msra.mxu0 0
      %1794 = vmatprep.mubr.bf16.mxu0 0
      %1795 = vmatmul.mubr.bf16.gmra.mrb[0].mxu0 %v1556
      %v1796 = vpop.f32.mrb[0].mxu0
      %v1797 = vadd.f32 0.0, %v1796
      %v1798 = vpop.f32.mrb[0].mxu0
      %v1799 = vpop.f32.mrb[0].mxu0
      %v1800 = vpop.f32.mrb[0].mxu0
      %1801 = vdwg.mxu0
      %v1802 = vadd.f32 %v1558, %v1756
      %v1803 = vxor.u32 %v1802, 2147483648
      %v1804 = vmul.f32 %v1803, 1.442695
      %v1805 = vpow.pop %v1804
      %v1806 = vadd.f32 %v1805, 1.0
      %v1807 = vrcp.pop %v1806
      %v1808 = vmul.f32 1.0, %v1807
      %v1809 = vadd.f32 %v1559, %v1758
      %v1810 = vxor.u32 %v1809, 2147483648
      %v1811 = vmul.f32 %v1810, 1.442695
      %v1812 = vpow.pop %v1811
      %v1813 = vadd.f32 %v1812, 1.0
      %v1814 = vrcp.pop %v1813
      %v1815 = vmul.f32 1.0, %v1814
      %v1816 = vadd.f32 %v1797, %v366
      %v1817 = vmul.f32 %v1808, %v1816
      %v1818 = vadd.f32 %v1560, %v1817
      %v1819 = vtanh.pop %v1818
      %v1820 = vsub.f32 1.0, %v1815
      %v1821 = vmul.f32 %v1820, %v1819
      %v1822 = vmul.f32 %v1815, %v1555
      %v1823 = vadd.f32 %v1821, %v1822
      %v1824 = vpack.c.bf16 %v1823, %v1823
      %v1826 = vrot.slane %v1824, 4
      %1828 = vst [vmem:[#allocation2 + $0x8] sm:$0xf0] %v1826
      %v1829 = vld [vmem:[#allocation3 + $0x60] sm:$0xff]
      %v1830 = vld [vmem:[#allocation3 + $0x68] sm:$0xff]
      %v1831 = vld [vmem:[#allocation3 + $0x70] sm:$0xff]
      %v1832 = vld [vmem:[%s348] sm:$0xff]
      %v1833 = vld [vmem:[%s348 + $0x8] sm:$0xf]
      %v1834 = vld [vmem:[%s348 + $0xc] sm:$0xff]
      %v1835 = vld [vmem:[%s348 + $0x14] sm:$0xf]
      %v1836 = vld [vmem:[%s348 + $0x18] sm:$0xff]
      %v1837 = vld [vmem:[%s348 + $0x20] sm:$0xf]
      %v1838 = vld [vmem:[%s348 + $0x24] sm:$0xff]
      %v1839 = vld [vmem:[%s348 + $0x2c] sm:$0xf]
      %v1840 = vld [vmem:[%s348 + $0x30] sm:$0xff]
      %v1841 = vld [vmem:[%s348 + $0x38] sm:$0xf]
      %v1842 = vld [vmem:[%s348 + $0x3c] sm:$0xff]
      %v1843 = vld [vmem:[%s348 + $0x44] sm:$0xf]
      %v1844 = vld [vmem:[%s348 + $0x48] sm:$0xff]
      %v1845 = vld [vmem:[%s348 + $0x50] sm:$0xf]
      %v1846 = vld [vmem:[%s348 + $0x54] sm:$0xff]
      %v1847 = vld [vmem:[%s348 + $0x5c] sm:$0xf]
      %v1848 = vld [vmem:[%s348 + $0x60] sm:$0xff]
      %v1849 = vld [vmem:[%s348 + $0x68] sm:$0xf]
      %v1850 = vld [vmem:[%s348 + $0x6c] sm:$0xff]
      %v1851 = vld [vmem:[%s348 + $0x74] sm:$0xf]
      %v1852 = vld [vmem:[%s348 + $0x78] sm:$0xff]
      %v1853 = vld [vmem:[%s348 + $0x80] sm:$0xf]
      %v1854 = vld [vmem:[%s348 + $0x84] sm:$0xff]
      %v1855 = vld [vmem:[%s348 + $0x8c] sm:$0xf]
      %v1856 = vld [vmem:[%s348 + $0x90] sm:$0xff]
      %v1857 = vld [vmem:[%s348 + $0x98] sm:$0xf]
      %v1858 = vld [vmem:[%s348 + $0x9c] sm:$0xff]
      %v1859 = vld [vmem:[%s348 + $0xa4] sm:$0xf]
      %v1860 = vld [vmem:[%s348 + $0xa8] sm:$0xff]
      %v1861 = vld [vmem:[%s348 + $0xb0] sm:$0xf]
      %v1862 = vld [vmem:[%s348 + $0xb4] sm:$0xff]
      %v1863 = vld [vmem:[%s348 + $0xbc] sm:$0xf]
      %v1896 = vunpack.c.l.b16 %v1832
      %v1897 = vunpack.c.h.b16 %v1832
      %v1898 = vunpack.c.l.b16 %v1833
      %v1899 = vunpack.c.l.b16 %v1834
      %v1900 = vunpack.c.h.b16 %v1834
      %v1901 = vunpack.c.l.b16 %v1835
      %v1902 = vunpack.c.l.b16 %v1836
      %v1903 = vunpack.c.h.b16 %v1836
      %v1904 = vunpack.c.l.b16 %v1837
      %v1905 = vunpack.c.l.b16 %v1838
      %v1906 = vunpack.c.h.b16 %v1838
      %v1907 = vunpack.c.l.b16 %v1839
      %v1908 = vunpack.c.l.b16 %v1840
      %v1909 = vunpack.c.h.b16 %v1840
      %v1910 = vunpack.c.l.b16 %v1841
      %v1911 = vunpack.c.l.b16 %v1842
      %v1912 = vunpack.c.h.b16 %v1842
      %v1913 = vunpack.c.l.b16 %v1843
      %v1914 = vunpack.c.l.b16 %v1844
      %v1915 = vunpack.c.h.b16 %v1844
      %v1916 = vunpack.c.l.b16 %v1845
      %v1917 = vunpack.c.l.b16 %v1846
      %v1918 = vunpack.c.h.b16 %v1846
      %v1919 = vunpack.c.l.b16 %v1847
      %v1920 = vunpack.c.l.b16 %v1848
      %v1921 = vunpack.c.h.b16 %v1848
      %v1922 = vunpack.c.l.b16 %v1849
      %v1923 = vunpack.c.l.b16 %v1850
      %v1924 = vunpack.c.h.b16 %v1850
      %v1925 = vunpack.c.l.b16 %v1851
      %v1926 = vunpack.c.l.b16 %v1852
      %v1927 = vunpack.c.h.b16 %v1852
      %v1928 = vunpack.c.l.b16 %v1853
      %v1929 = vunpack.c.l.b16 %v1854
      %v1930 = vunpack.c.h.b16 %v1854
      %v1931 = vunpack.c.l.b16 %v1855
      %v1932 = vunpack.c.l.b16 %v1856
      %v1933 = vunpack.c.h.b16 %v1856
      %v1934 = vunpack.c.l.b16 %v1857
      %v1935 = vunpack.c.l.b16 %v1858
      %v1936 = vunpack.c.h.b16 %v1858
      %v1937 = vunpack.c.l.b16 %v1859
      %v1938 = vunpack.c.l.b16 %v1860
      %v1939 = vunpack.c.h.b16 %v1860
      %v1940 = vunpack.c.l.b16 %v1861
      %v1941 = vunpack.c.l.b16 %v1862
      %v1942 = vunpack.c.h.b16 %v1862
      %v1943 = vunpack.c.l.b16 %v1863
      %v1944 = vpack.c.b16 %v1899, %v1896
      %v1945 = vpack.c.b16 %v1900, %v1897
      %v1946 = vpack.c.b16 %v1901, %v1898
      %v1947 = vpack.c.b16 %v1905, %v1902
      %v1948 = vpack.c.b16 %v1906, %v1903
      %v1949 = vpack.c.b16 %v1907, %v1904
      %v1950 = vpack.c.b16 %v1911, %v1908
      %v1951 = vpack.c.b16 %v1912, %v1909
      %v1952 = vpack.c.b16 %v1913, %v1910
      %v1953 = vpack.c.b16 %v1917, %v1914
      %v1954 = vpack.c.b16 %v1918, %v1915
      %v1955 = vpack.c.b16 %v1919, %v1916
      %v1956 = vpack.c.b16 %v1923, %v1920
      %v1957 = vpack.c.b16 %v1924, %v1921
      %v1958 = vpack.c.b16 %v1925, %v1922
      %v1959 = vpack.c.b16 %v1929, %v1926
      %v1960 = vpack.c.b16 %v1930, %v1927
      %v1961 = vpack.c.b16 %v1931, %v1928
      %v1962 = vpack.c.b16 %v1935, %v1932
      %v1963 = vpack.c.b16 %v1936, %v1933
      %v1964 = vpack.c.b16 %v1937, %v1934
      %v1965 = vpack.c.b16 %v1941, %v1938
      %v1966 = vpack.c.b16 %v1942, %v1939
      %v1967 = vpack.c.b16 %v1943, %v1940
      %1992 = vmatprep.subr.bf16.mxu0 %v1945
      %1993 = vmatpush1.bf16.msra.mxu0 %v1944
      %1994 = vmatprep.subr.bf16.mxu0 %v1948
      %1995 = vmatpush1.bf16.msra.mxu0 %v1947
      %1996 = vmatprep.subr.bf16.mxu0 %v1951
      %1997 = vmatpush1.bf16.msra.mxu0 %v1950
      %1998 = vmatprep.subr.bf16.mxu0 %v1954
      %1999 = vmatpush1.bf16.msra.mxu0 %v1953
      %2000 = vmatprep.subr.bf16.mxu0 %v1957
      %2001 = vmatpush1.bf16.msra.mxu0 %v1956
      %2002 = vmatprep.subr.bf16.mxu0 %v1960
      %2003 = vmatpush1.bf16.msra.mxu0 %v1959
      %2004 = vmatprep.subr.bf16.mxu0 %v1963
      %2005 = vmatpush1.bf16.msra.mxu0 %v1962
      %2006 = vmatprep.subr.bf16.mxu0 %v1966
      %2007 = vmatpush1.bf16.msra.mxu0 %v1965
      %2008 = vmatprep.subr.bf16.mxu0 0
      %2009 = vmatpush1.bf16.msra.mxu0 0
      %2010 = vmatprep.subr.bf16.mxu0 0
      %2011 = vmatpush1.bf16.msra.mxu0 0
      %2012 = vmatprep.subr.bf16.mxu0 0
      %2013 = vmatpush1.bf16.msra.mxu0 0
      %2014 = vmatprep.subr.bf16.mxu0 0
      %2015 = vmatpush1.bf16.msra.mxu0 0
      %2016 = vmatprep.subr.bf16.mxu0 0
      %2017 = vmatpush1.bf16.msra.mxu0 0
      %2018 = vmatprep.subr.bf16.mxu0 0
      %2019 = vmatpush1.bf16.msra.mxu0 0
      %2020 = vmatprep.subr.bf16.mxu0 0
      %2021 = vmatpush1.bf16.msra.mxu0 0
      %2022 = vmatprep.subr.bf16.mxu0 0
      %2023 = vmatpush1.bf16.msra.mxu0 0
      %2024 = vmatprep.mubr.bf16.mxu0 0
      %2025 = vmatmul.mubr.bf16.gmra.mrb[0].mxu0 %v1824
      %v2026 = vpop.f32.mrb[0].mxu0
      %v2027 = vadd.f32 0.0, %v2026
      %v2028 = vpop.f32.mrb[0].mxu0
      %v2029 = vadd.f32 0.0, %v2028
      %v2030 = vpop.f32.mrb[0].mxu0
      %v2031 = vpop.f32.mrb[0].mxu0
      %2032 = vdwg.mxu0
      %2033 = vmatprep.subr.bf16.mxu0 0
      %2034 = vmatpush1.bf16.msra.mxu0 %v1946
      %2035 = vmatprep.subr.bf16.mxu0 0
      %2036 = vmatpush1.bf16.msra.mxu0 %v1949
      %2037 = vmatprep.subr.bf16.mxu0 0
      %2038 = vmatpush1.bf16.msra.mxu0 %v1952
      %2039 = vmatprep.subr.bf16.mxu0 0
      %2040 = vmatpush1.bf16.msra.mxu0 %v1955
      %2041 = vmatprep.subr.bf16.mxu0 0
      %2042 = vmatpush1.bf16.msra.mxu0 %v1958
      %2043 = vmatprep.subr.bf16.mxu0 0
      %2044 = vmatpush1.bf16.msra.mxu0 %v1961
      %2045 = vmatprep.subr.bf16.mxu0 0
      %2046 = vmatpush1.bf16.msra.mxu0 %v1964
      %2047 = vmatprep.subr.bf16.mxu0 0
      %2048 = vmatpush1.bf16.msra.mxu0 %v1967
      %2049 = vmatprep.subr.bf16.mxu0 0
      %2050 = vmatpush1.bf16.msra.mxu0 0
      %2051 = vmatprep.subr.bf16.mxu0 0
      %2052 = vmatpush1.bf16.msra.mxu0 0
      %2053 = vmatprep.subr.bf16.mxu0 0
      %2054 = vmatpush1.bf16.msra.mxu0 0
      %2055 = vmatprep.subr.bf16.mxu0 0
      %2056 = vmatpush1.bf16.msra.mxu0 0
      %2057 = vmatprep.subr.bf16.mxu0 0
      %2058 = vmatpush1.bf16.msra.mxu0 0
      %2059 = vmatprep.subr.bf16.mxu0 0
      %2060 = vmatpush1.bf16.msra.mxu0 0
      %2061 = vmatprep.subr.bf16.mxu0 0
      %2062 = vmatpush1.bf16.msra.mxu0 0
      %2063 = vmatprep.subr.bf16.mxu0 0
      %2064 = vmatpush1.bf16.msra.mxu0 0
      %2065 = vmatprep.mubr.bf16.mxu0 0
      %2066 = vmatmul.mubr.bf16.gmra.mrb[0].mxu0 %v1824
      %v2067 = vpop.f32.mrb[0].mxu0
      %v2068 = vadd.f32 0.0, %v2067
      %v2069 = vpop.f32.mrb[0].mxu0
      %v2070 = vpop.f32.mrb[0].mxu0
      %v2071 = vpop.f32.mrb[0].mxu0
      %2072 = vdwg.mxu0
      %v2073 = vadd.f32 %v1829, %v2027
      %v2074 = vxor.u32 %v2073, 2147483648
      %v2075 = vmul.f32 %v2074, 1.442695
      %v2076 = vpow.pop %v2075
      %v2077 = vadd.f32 %v2076, 1.0
      %v2078 = vrcp.pop %v2077
      %v2079 = vmul.f32 1.0, %v2078
      %v2080 = vadd.f32 %v1830, %v2029
      %v2081 = vxor.u32 %v2080, 2147483648
      %v2082 = vmul.f32 %v2081, 1.442695
      %v2083 = vpow.pop %v2082
      %v2084 = vadd.f32 %v2083, 1.0
      %v2085 = vrcp.pop %v2084
      %v2086 = vmul.f32 1.0, %v2085
      %v2087 = vadd.f32 %v2068, %v366
      %v2088 = vmul.f32 %v2079, %v2087
      %v2089 = vadd.f32 %v1831, %v2088
      %v2090 = vtanh.pop %v2089
      %v2091 = vsub.f32 1.0, %v2086
      %v2092 = vmul.f32 %v2091, %v2090
      %v2093 = vmul.f32 %v2086, %v1823
      %v2094 = vadd.f32 %v2092, %v2093
      %v2095 = vpack.c.bf16 %v2094, %v2094
      %2096 = vst [vmem:[#allocation2 + $0x10] sm:$0xf] %v2095
      %v2097 = vld [vmem:[#allocation3 + $0x78] sm:$0xff]
      %v2098 = vld [vmem:[#allocation3 + $0x80] sm:$0xff]
      %v2099 = vld [vmem:[#allocation3 + $0x88] sm:$0xff]
      %v2100 = vld [vmem:[%s348] sm:$0xff]
      %v2101 = vld [vmem:[%s348 + $0x8] sm:$0xf]
      %v2102 = vld [vmem:[%s348 + $0xc] sm:$0xff]
      %v2103 = vld [vmem:[%s348 + $0x14] sm:$0xf]
      %v2104 = vld [vmem:[%s348 + $0x18] sm:$0xff]
      %v2105 = vld [vmem:[%s348 + $0x20] sm:$0xf]
      %v2106 = vld [vmem:[%s348 + $0x24] sm:$0xff]
      %v2107 = vld [vmem:[%s348 + $0x2c] sm:$0xf]
      %v2108 = vld [vmem:[%s348 + $0x30] sm:$0xff]
      %v2109 = vld [vmem:[%s348 + $0x38] sm:$0xf]
      %v2110 = vld [vmem:[%s348 + $0x3c] sm:$0xff]
      %v2111 = vld [vmem:[%s348 + $0x44] sm:$0xf]
      %v2112 = vld [vmem:[%s348 + $0x48] sm:$0xff]
      %v2113 = vld [vmem:[%s348 + $0x50] sm:$0xf]
      %v2114 = vld [vmem:[%s348 + $0x54] sm:$0xff]
      %v2115 = vld [vmem:[%s348 + $0x5c] sm:$0xf]
      %v2116 = vld [vmem:[%s348 + $0x60] sm:$0xff]
      %v2117 = vld [vmem:[%s348 + $0x68] sm:$0xf]
      %v2118 = vld [vmem:[%s348 + $0x6c] sm:$0xff]
      %v2119 = vld [vmem:[%s348 + $0x74] sm:$0xf]
      %v2120 = vld [vmem:[%s348 + $0x78] sm:$0xff]
      %v2121 = vld [vmem:[%s348 + $0x80] sm:$0xf]
      %v2122 = vld [vmem:[%s348 + $0x84] sm:$0xff]
      %v2123 = vld [vmem:[%s348 + $0x8c] sm:$0xf]
      %v2124 = vld [vmem:[%s348 + $0x90] sm:$0xff]
      %v2125 = vld [vmem:[%s348 + $0x98] sm:$0xf]
      %v2126 = vld [vmem:[%s348 + $0x9c] sm:$0xff]
      %v2127 = vld [vmem:[%s348 + $0xa4] sm:$0xf]
      %v2128 = vld [vmem:[%s348 + $0xa8] sm:$0xff]
      %v2129 = vld [vmem:[%s348 + $0xb0] sm:$0xf]
      %v2130 = vld [vmem:[%s348 + $0xb4] sm:$0xff]
      %v2131 = vld [vmem:[%s348 + $0xbc] sm:$0xf]
      %v2164 = vunpack.c.l.b16 %v2100
      %v2165 = vunpack.c.h.b16 %v2100
      %v2166 = vunpack.c.l.b16 %v2101
      %v2167 = vunpack.c.l.b16 %v2102
      %v2168 = vunpack.c.h.b16 %v2102
      %v2169 = vunpack.c.l.b16 %v2103
      %v2170 = vunpack.c.l.b16 %v2104
      %v2171 = vunpack.c.h.b16 %v2104
      %v2172 = vunpack.c.l.b16 %v2105
      %v2173 = vunpack.c.l.b16 %v2106
      %v2174 = vunpack.c.h.b16 %v2106
      %v2175 = vunpack.c.l.b16 %v2107
      %v2176 = vunpack.c.l.b16 %v2108
      %v2177 = vunpack.c.h.b16 %v2108
      %v2178 = vunpack.c.l.b16 %v2109
      %v2179 = vunpack.c.l.b16 %v2110
      %v2180 = vunpack.c.h.b16 %v2110
      %v2181 = vunpack.c.l.b16 %v2111
      %v2182 = vunpack.c.l.b16 %v2112
      %v2183 = vunpack.c.h.b16 %v2112
      %v2184 = vunpack.c.l.b16 %v2113
      %v2185 = vunpack.c.l.b16 %v2114
      %v2186 = vunpack.c.h.b16 %v2114
      %v2187 = vunpack.c.l.b16 %v2115
      %v2188 = vunpack.c.l.b16 %v2116
      %v2189 = vunpack.c.h.b16 %v2116
      %v2190 = vunpack.c.l.b16 %v2117
      %v2191 = vunpack.c.l.b16 %v2118
      %v2192 = vunpack.c.h.b16 %v2118
      %v2193 = vunpack.c.l.b16 %v2119
      %v2194 = vunpack.c.l.b16 %v2120
      %v2195 = vunpack.c.h.b16 %v2120
      %v2196 = vunpack.c.l.b16 %v2121
      %v2197 = vunpack.c.l.b16 %v2122
      %v2198 = vunpack.c.h.b16 %v2122
      %v2199 = vunpack.c.l.b16 %v2123
      %v2200 = vunpack.c.l.b16 %v2124
      %v2201 = vunpack.c.h.b16 %v2124
      %v2202 = vunpack.c.l.b16 %v2125
      %v2203 = vunpack.c.l.b16 %v2126
      %v2204 = vunpack.c.h.b16 %v2126
      %v2205 = vunpack.c.l.b16 %v2127
      %v2206 = vunpack.c.l.b16 %v2128
      %v2207 = vunpack.c.h.b16 %v2128
      %v2208 = vunpack.c.l.b16 %v2129
      %v2209 = vunpack.c.l.b16 %v2130
      %v2210 = vunpack.c.h.b16 %v2130
      %v2211 = vunpack.c.l.b16 %v2131
      %v2212 = vpack.c.b16 %v2167, %v2164
      %v2213 = vpack.c.b16 %v2168, %v2165
      %v2214 = vpack.c.b16 %v2169, %v2166
      %v2215 = vpack.c.b16 %v2173, %v2170
      %v2216 = vpack.c.b16 %v2174, %v2171
      %v2217 = vpack.c.b16 %v2175, %v2172
      %v2218 = vpack.c.b16 %v2179, %v2176
      %v2219 = vpack.c.b16 %v2180, %v2177
      %v2220 = vpack.c.b16 %v2181, %v2178
      %v2221 = vpack.c.b16 %v2185, %v2182
      %v2222 = vpack.c.b16 %v2186, %v2183
      %v2223 = vpack.c.b16 %v2187, %v2184
      %v2224 = vpack.c.b16 %v2191, %v2188
      %v2225 = vpack.c.b16 %v2192, %v2189
      %v2226 = vpack.c.b16 %v2193, %v2190
      %v2227 = vpack.c.b16 %v2197, %v2194
      %v2228 = vpack.c.b16 %v2198, %v2195
      %v2229 = vpack.c.b16 %v2199, %v2196
      %v2230 = vpack.c.b16 %v2203, %v2200
      %v2231 = vpack.c.b16 %v2204, %v2201
      %v2232 = vpack.c.b16 %v2205, %v2202
      %v2233 = vpack.c.b16 %v2209, %v2206
      %v2234 = vpack.c.b16 %v2210, %v2207
      %v2235 = vpack.c.b16 %v2211, %v2208
      %2260 = vmatprep.subr.bf16.mxu0 %v2213
      %2261 = vmatpush1.bf16.msra.mxu0 %v2212
      %2262 = vmatprep.subr.bf16.mxu0 %v2216
      %2263 = vmatpush1.bf16.msra.mxu0 %v2215
      %2264 = vmatprep.subr.bf16.mxu0 %v2219
      %2265 = vmatpush1.bf16.msra.mxu0 %v2218
      %2266 = vmatprep.subr.bf16.mxu0 %v2222
      %2267 = vmatpush1.bf16.msra.mxu0 %v2221
      %2268 = vmatprep.subr.bf16.mxu0 %v2225
      %2269 = vmatpush1.bf16.msra.mxu0 %v2224
      %2270 = vmatprep.subr.bf16.mxu0 %v2228
      %2271 = vmatpush1.bf16.msra.mxu0 %v2227
      %2272 = vmatprep.subr.bf16.mxu0 %v2231
      %2273 = vmatpush1.bf16.msra.mxu0 %v2230
      %2274 = vmatprep.subr.bf16.mxu0 %v2234
      %2275 = vmatpush1.bf16.msra.mxu0 %v2233
      %2276 = vmatprep.subr.bf16.mxu0 0
      %2277 = vmatpush1.bf16.msra.mxu0 0
      %2278 = vmatprep.subr.bf16.mxu0 0
      %2279 = vmatpush1.bf16.msra.mxu0 0
      %2280 = vmatprep.subr.bf16.mxu0 0
      %2281 = vmatpush1.bf16.msra.mxu0 0
      %2282 = vmatprep.subr.bf16.mxu0 0
      %2283 = vmatpush1.bf16.msra.mxu0 0
      %2284 = vmatprep.subr.bf16.mxu0 0
      %2285 = vmatpush1.bf16.msra.mxu0 0
      %2286 = vmatprep.subr.bf16.mxu0 0
      %2287 = vmatpush1.bf16.msra.mxu0 0
      %2288 = vmatprep.subr.bf16.mxu0 0
      %2289 = vmatpush1.bf16.msra.mxu0 0
      %2290 = vmatprep.subr.bf16.mxu0 0
      %2291 = vmatpush1.bf16.msra.mxu0 0
      %2292 = vmatprep.mubr.bf16.mxu0 0
      %2293 = vmatmul.mubr.bf16.gmra.mrb[0].mxu0 %v2095
      %v2294 = vpop.f32.mrb[0].mxu0
      %v2295 = vadd.f32 0.0, %v2294
      %v2296 = vpop.f32.mrb[0].mxu0
      %v2297 = vadd.f32 0.0, %v2296
      %v2298 = vpop.f32.mrb[0].mxu0
      %v2299 = vpop.f32.mrb[0].mxu0
      %2300 = vdwg.mxu0
      %2301 = vmatprep.subr.bf16.mxu0 0
      %2302 = vmatpush1.bf16.msra.mxu0 %v2214
      %2303 = vmatprep.subr.bf16.mxu0 0
      %2304 = vmatpush1.bf16.msra.mxu0 %v2217
      %2305 = vmatprep.subr.bf16.mxu0 0
      %2306 = vmatpush1.bf16.msra.mxu0 %v2220
      %2307 = vmatprep.subr.bf16.mxu0 0
      %2308 = vmatpush1.bf16.msra.mxu0 %v2223
      %2309 = vmatprep.subr.bf16.mxu0 0
      %2310 = vmatpush1.bf16.msra.mxu0 %v2226
      %2311 = vmatprep.subr.bf16.mxu0 0
      %2312 = vmatpush1.bf16.msra.mxu0 %v2229
      %2313 = vmatprep.subr.bf16.mxu0 0
      %2314 = vmatpush1.bf16.msra.mxu0 %v2232
      %2315 = vmatprep.subr.bf16.mxu0 0
      %2316 = vmatpush1.bf16.msra.mxu0 %v2235
      %2317 = vmatprep.subr.bf16.mxu0 0
      %2318 = vmatpush1.bf16.msra.mxu0 0
      %2319 = vmatprep.subr.bf16.mxu0 0
      %2320 = vmatpush1.bf16.msra.mxu0 0
      %2321 = vmatprep.subr.bf16.mxu0 0
      %2322 = vmatpush1.bf16.msra.mxu0 0
      %2323 = vmatprep.subr.bf16.mxu0 0
      %2324 = vmatpush1.bf16.msra.mxu0 0
      %2325 = vmatprep.subr.bf16.mxu0 0
      %2326 = vmatpush1.bf16.msra.mxu0 0
      %2327 = vmatprep.subr.bf16.mxu0 0
      %2328 = vmatpush1.bf16.msra.mxu0 0
      %2329 = vmatprep.subr.bf16.mxu0 0
      %2330 = vmatpush1.bf16.msra.mxu0 0
      %2331 = vmatprep.subr.bf16.mxu0 0
      %2332 = vmatpush1.bf16.msra.mxu0 0
      %2333 = vmatprep.mubr.bf16.mxu0 0
      %2334 = vmatmul.mubr.bf16.gmra.mrb[0].mxu0 %v2095
      %v2335 = vpop.f32.mrb[0].mxu0
      %v2336 = vadd.f32 0.0, %v2335
      %v2337 = vpop.f32.mrb[0].mxu0
      %v2338 = vpop.f32.mrb[0].mxu0
      %v2339 = vpop.f32.mrb[0].mxu0
      %2340 = vdwg.mxu0
      %v2341 = vadd.f32 %v2097, %v2295
      %v2342 = vxor.u32 %v2341, 2147483648
      %v2343 = vmul.f32 %v2342, 1.442695
      %v2344 = vpow.pop %v2343
      %v2345 = vadd.f32 %v2344, 1.0
      %v2346 = vrcp.pop %v2345
      %v2347 = vmul.f32 1.0, %v2346
      %v2348 = vadd.f32 %v2098, %v2297
      %v2349 = vxor.u32 %v2348, 2147483648
      %v2350 = vmul.f32 %v2349, 1.442695
      %v2351 = vpow.pop %v2350
      %v2352 = vadd.f32 %v2351, 1.0
      %v2353 = vrcp.pop %v2352
      %v2354 = vmul.f32 1.0, %v2353
      %v2355 = vadd.f32 %v2336, %v366
      %v2356 = vmul.f32 %v2347, %v2355
      %v2357 = vadd.f32 %v2099, %v2356
      %v2358 = vtanh.pop %v2357
      %v2359 = vsub.f32 1.0, %v2354
      %v2360 = vmul.f32 %v2359, %v2358
      %v2361 = vmul.f32 %v2354, %v2094
      %v2362 = vadd.f32 %v2360, %v2361
      %v2363 = vpack.c.bf16 %v2362, %v2362
      %v2365 = vrot.slane %v2363, 4
      %2367 = vst [vmem:[#allocation2 + $0x10] sm:$0xf0] %v2365
      %v2368 = vld [vmem:[#allocation3 + $0x90] sm:$0xff]
      %v2369 = vld [vmem:[#allocation3 + $0x98] sm:$0xff]
      %v2370 = vld [vmem:[#allocation3 + $0xa0] sm:$0xff]
      %v2371 = vld [vmem:[%s348] sm:$0xff]
      %v2372 = vld [vmem:[%s348 + $0x8] sm:$0xf]
      %v2373 = vld [vmem:[%s348 + $0xc] sm:$0xff]
      %v2374 = vld [vmem:[%s348 + $0x14] sm:$0xf]
      %v2375 = vld [vmem:[%s348 + $0x18] sm:$0xff]
      %v2376 = vld [vmem:[%s348 + $0x20] sm:$0xf]
      %v2377 = vld [vmem:[%s348 + $0x24] sm:$0xff]
      %v2378 = vld [vmem:[%s348 + $0x2c] sm:$0xf]
      %v2379 = vld [vmem:[%s348 + $0x30] sm:$0xff]
      %v2380 = vld [vmem:[%s348 + $0x38] sm:$0xf]
      %v2381 = vld [vmem:[%s348 + $0x3c] sm:$0xff]
      %v2382 = vld [vmem:[%s348 + $0x44] sm:$0xf]
      %v2383 = vld [vmem:[%s348 + $0x48] sm:$0xff]
      %v2384 = vld [vmem:[%s348 + $0x50] sm:$0xf]
      %v2385 = vld [vmem:[%s348 + $0x54] sm:$0xff]
      %v2386 = vld [vmem:[%s348 + $0x5c] sm:$0xf]
      %v2387 = vld [vmem:[%s348 + $0x60] sm:$0xff]
      %v2388 = vld [vmem:[%s348 + $0x68] sm:$0xf]
      %v2389 = vld [vmem:[%s348 + $0x6c] sm:$0xff]
      %v2390 = vld [vmem:[%s348 + $0x74] sm:$0xf]
      %v2391 = vld [vmem:[%s348 + $0x78] sm:$0xff]
      %v2392 = vld [vmem:[%s348 + $0x80] sm:$0xf]
      %v2393 = vld [vmem:[%s348 + $0x84] sm:$0xff]
      %v2394 = vld [vmem:[%s348 + $0x8c] sm:$0xf]
      %v2395 = vld [vmem:[%s348 + $0x90] sm:$0xff]
      %v2396 = vld [vmem:[%s348 + $0x98] sm:$0xf]
      %v2397 = vld [vmem:[%s348 + $0x9c] sm:$0xff]
      %v2398 = vld [vmem:[%s348 + $0xa4] sm:$0xf]
      %v2399 = vld [vmem:[%s348 + $0xa8] sm:$0xff]
      %v2400 = vld [vmem:[%s348 + $0xb0] sm:$0xf]
      %v2401 = vld [vmem:[%s348 + $0xb4] sm:$0xff]
      %v2402 = vld [vmem:[%s348 + $0xbc] sm:$0xf]
      %v2435 = vunpack.c.l.b16 %v2371
      %v2436 = vunpack.c.h.b16 %v2371
      %v2437 = vunpack.c.l.b16 %v2372
      %v2438 = vunpack.c.l.b16 %v2373
      %v2439 = vunpack.c.h.b16 %v2373
      %v2440 = vunpack.c.l.b16 %v2374
      %v2441 = vunpack.c.l.b16 %v2375
      %v2442 = vunpack.c.h.b16 %v2375
      %v2443 = vunpack.c.l.b16 %v2376
      %v2444 = vunpack.c.l.b16 %v2377
      %v2445 = vunpack.c.h.b16 %v2377
      %v2446 = vunpack.c.l.b16 %v2378
      %v2447 = vunpack.c.l.b16 %v2379
      %v2448 = vunpack.c.h.b16 %v2379
      %v2449 = vunpack.c.l.b16 %v2380
      %v2450 = vunpack.c.l.b16 %v2381
      %v2451 = vunpack.c.h.b16 %v2381
      %v2452 = vunpack.c.l.b16 %v2382
      %v2453 = vunpack.c.l.b16 %v2383
      %v2454 = vunpack.c.h.b16 %v2383
      %v2455 = vunpack.c.l.b16 %v2384
      %v2456 = vunpack.c.l.b16 %v2385
      %v2457 = vunpack.c.h.b16 %v2385
      %v2458 = vunpack.c.l.b16 %v2386
      %v2459 = vunpack.c.l.b16 %v2387
      %v2460 = vunpack.c.h.b16 %v2387
      %v2461 = vunpack.c.l.b16 %v2388
      %v2462 = vunpack.c.l.b16 %v2389
      %v2463 = vunpack.c.h.b16 %v2389
      %v2464 = vunpack.c.l.b16 %v2390
      %v2465 = vunpack.c.l.b16 %v2391
      %v2466 = vunpack.c.h.b16 %v2391
      %v2467 = vunpack.c.l.b16 %v2392
      %v2468 = vunpack.c.l.b16 %v2393
      %v2469 = vunpack.c.h.b16 %v2393
      %v2470 = vunpack.c.l.b16 %v2394
      %v2471 = vunpack.c.l.b16 %v2395
      %v2472 = vunpack.c.h.b16 %v2395
      %v2473 = vunpack.c.l.b16 %v2396
      %v2474 = vunpack.c.l.b16 %v2397
      %v2475 = vunpack.c.h.b16 %v2397
      %v2476 = vunpack.c.l.b16 %v2398
      %v2477 = vunpack.c.l.b16 %v2399
      %v2478 = vunpack.c.h.b16 %v2399
      %v2479 = vunpack.c.l.b16 %v2400
      %v2480 = vunpack.c.l.b16 %v2401
      %v2481 = vunpack.c.h.b16 %v2401
      %v2482 = vunpack.c.l.b16 %v2402
      %v2483 = vpack.c.b16 %v2438, %v2435
      %v2484 = vpack.c.b16 %v2439, %v2436
      %v2485 = vpack.c.b16 %v2440, %v2437
      %v2486 = vpack.c.b16 %v2444, %v2441
      %v2487 = vpack.c.b16 %v2445, %v2442
      %v2488 = vpack.c.b16 %v2446, %v2443
      %v2489 = vpack.c.b16 %v2450, %v2447
      %v2490 = vpack.c.b16 %v2451, %v2448
      %v2491 = vpack.c.b16 %v2452, %v2449
      %v2492 = vpack.c.b16 %v2456, %v2453
      %v2493 = vpack.c.b16 %v2457, %v2454
      %v2494 = vpack.c.b16 %v2458, %v2455
      %v2495 = vpack.c.b16 %v2462, %v2459
      %v2496 = vpack.c.b16 %v2463, %v2460
      %v2497 = vpack.c.b16 %v2464, %v2461
      %v2498 = vpack.c.b16 %v2468, %v2465
      %v2499 = vpack.c.b16 %v2469, %v2466
      %v2500 = vpack.c.b16 %v2470, %v2467
      %v2501 = vpack.c.b16 %v2474, %v2471
      %v2502 = vpack.c.b16 %v2475, %v2472
      %v2503 = vpack.c.b16 %v2476, %v2473
      %v2504 = vpack.c.b16 %v2480, %v2477
      %v2505 = vpack.c.b16 %v2481, %v2478
      %v2506 = vpack.c.b16 %v2482, %v2479
      %2531 = vmatprep.subr.bf16.mxu0 %v2484
      %2532 = vmatpush1.bf16.msra.mxu0 %v2483
      %2533 = vmatprep.subr.bf16.mxu0 %v2487
      %2534 = vmatpush1.bf16.msra.mxu0 %v2486
      %2535 = vmatprep.subr.bf16.mxu0 %v2490
      %2536 = vmatpush1.bf16.msra.mxu0 %v2489
      %2537 = vmatprep.subr.bf16.mxu0 %v2493
      %2538 = vmatpush1.bf16.msra.mxu0 %v2492
      %2539 = vmatprep.subr.bf16.mxu0 %v2496
      %2540 = vmatpush1.bf16.msra.mxu0 %v2495
      %2541 = vmatprep.subr.bf16.mxu0 %v2499
      %2542 = vmatpush1.bf16.msra.mxu0 %v2498
      %2543 = vmatprep.subr.bf16.mxu0 %v2502
      %2544 = vmatpush1.bf16.msra.mxu0 %v2501
      %2545 = vmatprep.subr.bf16.mxu0 %v2505
      %2546 = vmatpush1.bf16.msra.mxu0 %v2504
      %2547 = vmatprep.subr.bf16.mxu0 0
      %2548 = vmatpush1.bf16.msra.mxu0 0
      %2549 = vmatprep.subr.bf16.mxu0 0
      %2550 = vmatpush1.bf16.msra.mxu0 0
      %2551 = vmatprep.subr.bf16.mxu0 0
      %2552 = vmatpush1.bf16.msra.mxu0 0
      %2553 = vmatprep.subr.bf16.mxu0 0
      %2554 = vmatpush1.bf16.msra.mxu0 0
      %2555 = vmatprep.subr.bf16.mxu0 0
      %2556 = vmatpush1.bf16.msra.mxu0 0
      %2557 = vmatprep.subr.bf16.mxu0 0
      %2558 = vmatpush1.bf16.msra.mxu0 0
      %2559 = vmatprep.subr.bf16.mxu0 0
      %2560 = vmatpush1.bf16.msra.mxu0 0
      %2561 = vmatprep.subr.bf16.mxu0 0
      %2562 = vmatpush1.bf16.msra.mxu0 0
      %2563 = vmatprep.mubr.bf16.mxu0 0
      %2564 = vmatmul.mubr.bf16.gmra.mrb[0].mxu0 %v2363
      %v2565 = vpop.f32.mrb[0].mxu0
      %v2566 = vadd.f32 0.0, %v2565
      %v2567 = vpop.f32.mrb[0].mxu0
      %v2568 = vadd.f32 0.0, %v2567
      %v2569 = vpop.f32.mrb[0].mxu0
      %v2570 = vpop.f32.mrb[0].mxu0
      %2571 = vdwg.mxu0
      %2572 = vmatprep.subr.bf16.mxu0 0
      %2573 = vmatpush1.bf16.msra.mxu0 %v2485
      %2574 = vmatprep.subr.bf16.mxu0 0
      %2575 = vmatpush1.bf16.msra.mxu0 %v2488
      %2576 = vmatprep.subr.bf16.mxu0 0
      %2577 = vmatpush1.bf16.msra.mxu0 %v2491
      %2578 = vmatprep.subr.bf16.mxu0 0
      %2579 = vmatpush1.bf16.msra.mxu0 %v2494
      %2580 = vmatprep.subr.bf16.mxu0 0
      %2581 = vmatpush1.bf16.msra.mxu0 %v2497
      %2582 = vmatprep.subr.bf16.mxu0 0
      %2583 = vmatpush1.bf16.msra.mxu0 %v2500
      %2584 = vmatprep.subr.bf16.mxu0 0
      %2585 = vmatpush1.bf16.msra.mxu0 %v2503
      %2586 = vmatprep.subr.bf16.mxu0 0
      %2587 = vmatpush1.bf16.msra.mxu0 %v2506
      %2588 = vmatprep.subr.bf16.mxu0 0
      %2589 = vmatpush1.bf16.msra.mxu0 0
      %2590 = vmatprep.subr.bf16.mxu0 0
      %2591 = vmatpush1.bf16.msra.mxu0 0
      %2592 = vmatprep.subr.bf16.mxu0 0
      %2593 = vmatpush1.bf16.msra.mxu0 0
      %2594 = vmatprep.subr.bf16.mxu0 0
      %2595 = vmatpush1.bf16.msra.mxu0 0
      %2596 = vmatprep.subr.bf16.mxu0 0
      %2597 = vmatpush1.bf16.msra.mxu0 0
      %2598 = vmatprep.subr.bf16.mxu0 0
      %2599 = vmatpush1.bf16.msra.mxu0 0
      %2600 = vmatprep.subr.bf16.mxu0 0
      %2601 = vmatpush1.bf16.msra.mxu0 0
      %2602 = vmatprep.subr.bf16.mxu0 0
      %2603 = vmatpush1.bf16.msra.mxu0 0
      %2604 = vmatprep.mubr.bf16.mxu0 0
      %2605 = vmatmul.mubr.bf16.gmra.mrb[0].mxu0 %v2363
      %v2606 = vpop.f32.mrb[0].mxu0
      %v2607 = vadd.f32 0.0, %v2606
      %v2608 = vpop.f32.mrb[0].mxu0
      %v2609 = vpop.f32.mrb[0].mxu0
      %v2610 = vpop.f32.mrb[0].mxu0
      %2611 = vdwg.mxu0
      %v2612 = vadd.f32 %v2368, %v2566
      %v2613 = vxor.u32 %v2612, 2147483648
      %v2614 = vmul.f32 %v2613, 1.442695
      %v2615 = vpow.pop %v2614
      %v2616 = vadd.f32 %v2615, 1.0
      %v2617 = vrcp.pop %v2616
      %v2618 = vmul.f32 1.0, %v2617
      %v2619 = vadd.f32 %v2369, %v2568
      %v2620 = vxor.u32 %v2619, 2147483648
      %v2621 = vmul.f32 %v2620, 1.442695
      %v2622 = vpow.pop %v2621
      %v2623 = vadd.f32 %v2622, 1.0
      %v2624 = vrcp.pop %v2623
      %v2625 = vmul.f32 1.0, %v2624
      %v2626 = vadd.f32 %v2607, %v366
      %v2627 = vmul.f32 %v2618, %v2626
      %v2628 = vadd.f32 %v2370, %v2627
      %v2629 = vtanh.pop %v2628
      %v2630 = vsub.f32 1.0, %v2625
      %v2631 = vmul.f32 %v2630, %v2629
      %v2632 = vmul.f32 %v2625, %v2362
      %v2633 = vadd.f32 %v2631, %v2632
      %v2634 = vpack.c.bf16 %v2633, %v2633
      %2635 = vst [vmem:[#allocation2 + $0x18] sm:$0xf] %v2634
      %v2636 = vld [vmem:[#allocation3 + $0xa8] sm:$0xff]
      %v2637 = vld [vmem:[#allocation3 + $0xb0] sm:$0xff]
      %v2638 = vld [vmem:[#allocation3 + $0xb8] sm:$0xff]
      %v2639 = vld [vmem:[%s348] sm:$0xff]
      %v2640 = vld [vmem:[%s348 + $0x8] sm:$0xf]
      %v2641 = vld [vmem:[%s348 + $0xc] sm:$0xff]
      %v2642 = vld [vmem:[%s348 + $0x14] sm:$0xf]
      %v2643 = vld [vmem:[%s348 + $0x18] sm:$0xff]
      %v2644 = vld [vmem:[%s348 + $0x20] sm:$0xf]
      %v2645 = vld [vmem:[%s348 + $0x24] sm:$0xff]
      %v2646 = vld [vmem:[%s348 + $0x2c] sm:$0xf]
      %v2647 = vld [vmem:[%s348 + $0x30] sm:$0xff]
      %v2648 = vld [vmem:[%s348 + $0x38] sm:$0xf]
      %v2649 = vld [vmem:[%s348 + $0x3c] sm:$0xff]
      %v2650 = vld [vmem:[%s348 + $0x44] sm:$0xf]
      %v2651 = vld [vmem:[%s348 + $0x48] sm:$0xff]
      %v2652 = vld [vmem:[%s348 + $0x50] sm:$0xf]
      %v2653 = vld [vmem:[%s348 + $0x54] sm:$0xff]
      %v2654 = vld [vmem:[%s348 + $0x5c] sm:$0xf]
      %v2655 = vld [vmem:[%s348 + $0x60] sm:$0xff]
      %v2656 = vld [vmem:[%s348 + $0x68] sm:$0xf]
      %v2657 = vld [vmem:[%s348 + $0x6c] sm:$0xff]
      %v2658 = vld [vmem:[%s348 + $0x74] sm:$0xf]
      %v2659 = vld [vmem:[%s348 + $0x78] sm:$0xff]
      %v2660 = vld [vmem:[%s348 + $0x80] sm:$0xf]
      %v2661 = vld [vmem:[%s348 + $0x84] sm:$0xff]
      %v2662 = vld [vmem:[%s348 + $0x8c] sm:$0xf]
      %v2663 = vld [vmem:[%s348 + $0x90] sm:$0xff]
      %v2664 = vld [vmem:[%s348 + $0x98] sm:$0xf]
      %v2665 = vld [vmem:[%s348 + $0x9c] sm:$0xff]
      %v2666 = vld [vmem:[%s348 + $0xa4] sm:$0xf]
      %v2667 = vld [vmem:[%s348 + $0xa8] sm:$0xff]
      %v2668 = vld [vmem:[%s348 + $0xb0] sm:$0xf]
      %v2669 = vld [vmem:[%s348 + $0xb4] sm:$0xff]
      %v2670 = vld [vmem:[%s348 + $0xbc] sm:$0xf]
      %v2703 = vunpack.c.l.b16 %v2639
      %v2704 = vunpack.c.h.b16 %v2639
      %v2705 = vunpack.c.l.b16 %v2640
      %v2706 = vunpack.c.l.b16 %v2641
      %v2707 = vunpack.c.h.b16 %v2641
      %v2708 = vunpack.c.l.b16 %v2642
      %v2709 = vunpack.c.l.b16 %v2643
      %v2710 = vunpack.c.h.b16 %v2643
      %v2711 = vunpack.c.l.b16 %v2644
      %v2712 = vunpack.c.l.b16 %v2645
      %v2713 = vunpack.c.h.b16 %v2645
      %v2714 = vunpack.c.l.b16 %v2646
      %v2715 = vunpack.c.l.b16 %v2647
      %v2716 = vunpack.c.h.b16 %v2647
      %v2717 = vunpack.c.l.b16 %v2648
      %v2718 = vunpack.c.l.b16 %v2649
      %v2719 = vunpack.c.h.b16 %v2649
      %v2720 = vunpack.c.l.b16 %v2650
      %v2721 = vunpack.c.l.b16 %v2651
      %v2722 = vunpack.c.h.b16 %v2651
      %v2723 = vunpack.c.l.b16 %v2652
      %v2724 = vunpack.c.l.b16 %v2653
      %v2725 = vunpack.c.h.b16 %v2653
      %v2726 = vunpack.c.l.b16 %v2654
      %v2727 = vunpack.c.l.b16 %v2655
      %v2728 = vunpack.c.h.b16 %v2655
      %v2729 = vunpack.c.l.b16 %v2656
      %v2730 = vunpack.c.l.b16 %v2657
      %v2731 = vunpack.c.h.b16 %v2657
      %v2732 = vunpack.c.l.b16 %v2658
      %v2733 = vunpack.c.l.b16 %v2659
      %v2734 = vunpack.c.h.b16 %v2659
      %v2735 = vunpack.c.l.b16 %v2660
      %v2736 = vunpack.c.l.b16 %v2661
      %v2737 = vunpack.c.h.b16 %v2661
      %v2738 = vunpack.c.l.b16 %v2662
      %v2739 = vunpack.c.l.b16 %v2663
      %v2740 = vunpack.c.h.b16 %v2663
      %v2741 = vunpack.c.l.b16 %v2664
      %v2742 = vunpack.c.l.b16 %v2665
      %v2743 = vunpack.c.h.b16 %v2665
      %v2744 = vunpack.c.l.b16 %v2666
      %v2745 = vunpack.c.l.b16 %v2667
      %v2746 = vunpack.c.h.b16 %v2667
      %v2747 = vunpack.c.l.b16 %v2668
      %v2748 = vunpack.c.l.b16 %v2669
      %v2749 = vunpack.c.h.b16 %v2669
      %v2750 = vunpack.c.l.b16 %v2670
      %v2751 = vpack.c.b16 %v2706, %v2703
      %v2752 = vpack.c.b16 %v2707, %v2704
      %v2753 = vpack.c.b16 %v2708, %v2705
      %v2754 = vpack.c.b16 %v2712, %v2709
      %v2755 = vpack.c.b16 %v2713, %v2710
      %v2756 = vpack.c.b16 %v2714, %v2711
      %v2757 = vpack.c.b16 %v2718, %v2715
      %v2758 = vpack.c.b16 %v2719, %v2716
      %v2759 = vpack.c.b16 %v2720, %v2717
      %v2760 = vpack.c.b16 %v2724, %v2721
      %v2761 = vpack.c.b16 %v2725, %v2722
      %v2762 = vpack.c.b16 %v2726, %v2723
      %v2763 = vpack.c.b16 %v2730, %v2727
      %v2764 = vpack.c.b16 %v2731, %v2728
      %v2765 = vpack.c.b16 %v2732, %v2729
      %v2766 = vpack.c.b16 %v2736, %v2733
      %v2767 = vpack.c.b16 %v2737, %v2734
      %v2768 = vpack.c.b16 %v2738, %v2735
      %v2769 = vpack.c.b16 %v2742, %v2739
      %v2770 = vpack.c.b16 %v2743, %v2740
      %v2771 = vpack.c.b16 %v2744, %v2741
      %v2772 = vpack.c.b16 %v2748, %v2745
      %v2773 = vpack.c.b16 %v2749, %v2746
      %v2774 = vpack.c.b16 %v2750, %v2747
      %2799 = vmatprep.subr.bf16.mxu0 %v2752
      %2800 = vmatpush1.bf16.msra.mxu0 %v2751
      %2801 = vmatprep.subr.bf16.mxu0 %v2755
      %2802 = vmatpush1.bf16.msra.mxu0 %v2754
      %2803 = vmatprep.subr.bf16.mxu0 %v2758
      %2804 = vmatpush1.bf16.msra.mxu0 %v2757
      %2805 = vmatprep.subr.bf16.mxu0 %v2761
      %2806 = vmatpush1.bf16.msra.mxu0 %v2760
      %2807 = vmatprep.subr.bf16.mxu0 %v2764
      %2808 = vmatpush1.bf16.msra.mxu0 %v2763
      %2809 = vmatprep.subr.bf16.mxu0 %v2767
      %2810 = vmatpush1.bf16.msra.mxu0 %v2766
      %2811 = vmatprep.subr.bf16.mxu0 %v2770
      %2812 = vmatpush1.bf16.msra.mxu0 %v2769
      %2813 = vmatprep.subr.bf16.mxu0 %v2773
      %2814 = vmatpush1.bf16.msra.mxu0 %v2772
      %2815 = vmatprep.subr.bf16.mxu0 0
      %2816 = vmatpush1.bf16.msra.mxu0 0
      %2817 = vmatprep.subr.bf16.mxu0 0
      %2818 = vmatpush1.bf16.msra.mxu0 0
      %2819 = vmatprep.subr.bf16.mxu0 0
      %2820 = vmatpush1.bf16.msra.mxu0 0
      %2821 = vmatprep.subr.bf16.mxu0 0
      %2822 = vmatpush1.bf16.msra.mxu0 0
      %2823 = vmatprep.subr.bf16.mxu0 0
      %2824 = vmatpush1.bf16.msra.mxu0 0
      %2825 = vmatprep.subr.bf16.mxu0 0
      %2826 = vmatpush1.bf16.msra.mxu0 0
      %2827 = vmatprep.subr.bf16.mxu0 0
      %2828 = vmatpush1.bf16.msra.mxu0 0
      %2829 = vmatprep.subr.bf16.mxu0 0
      %2830 = vmatpush1.bf16.msra.mxu0 0
      %2831 = vmatprep.mubr.bf16.mxu0 0
      %2832 = vmatmul.mubr.bf16.gmra.mrb[0].mxu0 %v2634
      %v2833 = vpop.f32.mrb[0].mxu0
      %v2834 = vadd.f32 0.0, %v2833
      %v2835 = vpop.f32.mrb[0].mxu0
      %v2836 = vadd.f32 0.0, %v2835
      %v2837 = vpop.f32.mrb[0].mxu0
      %v2838 = vpop.f32.mrb[0].mxu0
      %2839 = vdwg.mxu0
      %2840 = vmatprep.subr.bf16.mxu0 0
      %2841 = vmatpush1.bf16.msra.mxu0 %v2753
      %2842 = vmatprep.subr.bf16.mxu0 0
      %2843 = vmatpush1.bf16.msra.mxu0 %v2756
      %2844 = vmatprep.subr.bf16.mxu0 0
      %2845 = vmatpush1.bf16.msra.mxu0 %v2759
      %2846 = vmatprep.subr.bf16.mxu0 0
      %2847 = vmatpush1.bf16.msra.mxu0 %v2762
      %2848 = vmatprep.subr.bf16.mxu0 0
      %2849 = vmatpush1.bf16.msra.mxu0 %v2765
      %2850 = vmatprep.subr.bf16.mxu0 0
      %2851 = vmatpush1.bf16.msra.mxu0 %v2768
      %2852 = vmatprep.subr.bf16.mxu0 0
      %2853 = vmatpush1.bf16.msra.mxu0 %v2771
      %2854 = vmatprep.subr.bf16.mxu0 0
      %2855 = vmatpush1.bf16.msra.mxu0 %v2774
      %2856 = vmatprep.subr.bf16.mxu0 0
      %2857 = vmatpush1.bf16.msra.mxu0 0
      %2858 = vmatprep.subr.bf16.mxu0 0
      %2859 = vmatpush1.bf16.msra.mxu0 0
      %2860 = vmatprep.subr.bf16.mxu0 0
      %2861 = vmatpush1.bf16.msra.mxu0 0
      %2862 = vmatprep.subr.bf16.mxu0 0
      %2863 = vmatpush1.bf16.msra.mxu0 0
      %2864 = vmatprep.subr.bf16.mxu0 0
      %2865 = vmatpush1.bf16.msra.mxu0 0
      %2866 = vmatprep.subr.bf16.mxu0 0
      %2867 = vmatpush1.bf16.msra.mxu0 0
      %2868 = vmatprep.subr.bf16.mxu0 0
      %2869 = vmatpush1.bf16.msra.mxu0 0
      %2870 = vmatprep.subr.bf16.mxu0 0
      %2871 = vmatpush1.bf16.msra.mxu0 0
      %2872 = vmatprep.mubr.bf16.mxu0 0
      %2873 = vmatmul.mubr.bf16.gmra.mrb[0].mxu0 %v2634
      %v2874 = vpop.f32.mrb[0].mxu0
      %v2875 = vadd.f32 0.0, %v2874
      %v2876 = vpop.f32.mrb[0].mxu0
      %v2877 = vpop.f32.mrb[0].mxu0
      %v2878 = vpop.f32.mrb[0].mxu0
      %2879 = vdwg.mxu0
      %v2880 = vadd.f32 %v2636, %v2834
      %v2881 = vxor.u32 %v2880, 2147483648
      %v2882 = vmul.f32 %v2881, 1.442695
      %v2883 = vpow.pop %v2882
      %v2884 = vadd.f32 %v2883, 1.0
      %v2885 = vrcp.pop %v2884
      %v2886 = vmul.f32 1.0, %v2885
      %v2887 = vadd.f32 %v2637, %v2836
      %v2888 = vxor.u32 %v2887, 2147483648
      %v2889 = vmul.f32 %v2888, 1.442695
      %v2890 = vpow.pop %v2889
      %v2891 = vadd.f32 %v2890, 1.0
      %v2892 = vrcp.pop %v2891
      %v2893 = vmul.f32 1.0, %v2892
      %v2894 = vadd.f32 %v2875, %v366
      %v2895 = vmul.f32 %v2886, %v2894
      %v2896 = vadd.f32 %v2638, %v2895
      %v2897 = vtanh.pop %v2896
      %v2898 = vsub.f32 1.0, %v2893
      %v2899 = vmul.f32 %v2898, %v2897
      %v2900 = vmul.f32 %v2893, %v2633
      %v2901 = vadd.f32 %v2899, %v2900
      %v2902 = vpack.c.bf16 %v2901, %v2901
      %v2904 = vrot.slane %v2902, 4
      %2906 = vst [vmem:[#allocation2 + $0x18] sm:$0xf0] %v2904
      %p2907 = scmp.eq.s32.totalorder %s23, 1
      // Predicated region
      $region53: #{gru_model_forward.1} parent=47 // pred_check
        %p2908 = pneg %p2907
      $region54: #{gru_model_forward.1} parent=47 // pred_check_branch
        %2910 = sbr.rel (%p2908) target = $region56
      $region55: #{gru_model_forward.1} parent=47 // pred_region
        %v2911 = vld [vmem:[%s5] sm:$0xf]
        %v2912 = vld [vmem:[%s5 + $0x4] sm:$0xf]
        %v2913 = vld [vmem:[%s5 + $0x8] sm:$0xf]
        %v2914 = vld [vmem:[%s5 + $0xc] sm:$0xf]
        %v2915 = vld [vmem:[%s5 + $0x10] sm:$0xf]
        %v2916 = vld [vmem:[%s5 + $0x14] sm:$0xf]
        %v2917 = vld [vmem:[%s5 + $0x18] sm:$0xf]
        %v2918 = vld [vmem:[%s5 + $0x1c] sm:$0xf]
        %v2919 = vld [vmem:[%s5 + $0x20] sm:$0xf]
        %v2920 = vld [vmem:[%s5 + $0x24] sm:$0xf]
        %v2921 = vld [vmem:[%s5 + $0x28] sm:$0xf]
        %v2922 = vld [vmem:[%s5 + $0x2c] sm:$0xf]
        %v2923 = vld [vmem:[%s5 + $0x30] sm:$0xf]
        %v2924 = vld [vmem:[%s5 + $0x34] sm:$0xf]
        %v2925 = vld [vmem:[%s5 + $0x38] sm:$0xf]
        %v2926 = vld [vmem:[%s5 + $0x3c] sm:$0xf]
        %v2927 = vld [vmem:[%s6] sm:$0x1]
        %v2929 = vlaneseq
        %v2930 = vshrl.u32 %v2929, 7
        %v2931 = vsub.s32 0, %v2930
        %v2932 = vrot.slane %v2927, %v2931
        %v2950 = vunpack.c.l.b16 %v2911
        %v2951 = vunpack.c.l.b16 %v2912
        %v2952 = vunpack.c.l.b16 %v2913
        %v2953 = vunpack.c.l.b16 %v2914
        %v2954 = vunpack.c.l.b16 %v2915
        %v2955 = vunpack.c.l.b16 %v2916
        %v2956 = vunpack.c.l.b16 %v2917
        %v2957 = vunpack.c.l.b16 %v2918
        %v2958 = vunpack.c.l.b16 %v2919
        %v2959 = vunpack.c.l.b16 %v2920
        %v2960 = vunpack.c.l.b16 %v2921
        %v2961 = vunpack.c.l.b16 %v2922
        %v2962 = vunpack.c.l.b16 %v2923
        %v2963 = vunpack.c.l.b16 %v2924
        %v2964 = vunpack.c.l.b16 %v2925
        %v2965 = vunpack.c.l.b16 %v2926
        %v2966 = vpack.c.b16 %v2951, %v2950
        %v2967 = vpack.c.b16 %v2953, %v2952
        %v2968 = vpack.c.b16 %v2955, %v2954
        %v2969 = vpack.c.b16 %v2957, %v2956
        %v2970 = vpack.c.b16 %v2959, %v2958
        %v2971 = vpack.c.b16 %v2961, %v2960
        %v2972 = vpack.c.b16 %v2963, %v2962
        %v2973 = vpack.c.b16 %v2965, %v2964
        %2982 = vmatprep.subr.bf16.mxu0 0
        %2983 = vmatpush1.bf16.msra.mxu0 %v2966
        %2984 = vmatprep.subr.bf16.mxu0 0
        %2985 = vmatpush1.bf16.msra.mxu0 %v2967
        %2986 = vmatprep.subr.bf16.mxu0 0
        %2987 = vmatpush1.bf16.msra.mxu0 %v2968
        %2988 = vmatprep.subr.bf16.mxu0 0
        %2989 = vmatpush1.bf16.msra.mxu0 %v2969
        %2990 = vmatprep.subr.bf16.mxu0 0
        %2991 = vmatpush1.bf16.msra.mxu0 %v2970
        %2992 = vmatprep.subr.bf16.mxu0 0
        %2993 = vmatpush1.bf16.msra.mxu0 %v2971
        %2994 = vmatprep.subr.bf16.mxu0 0
        %2995 = vmatpush1.bf16.msra.mxu0 %v2972
        %2996 = vmatprep.subr.bf16.mxu0 0
        %2997 = vmatpush1.bf16.msra.mxu0 %v2973
        %2998 = vmatprep.subr.bf16.mxu0 0
        %2999 = vmatpush1.bf16.msra.mxu0 0
        %3000 = vmatprep.subr.bf16.mxu0 0
        %3001 = vmatpush1.bf16.msra.mxu0 0
        %3002 = vmatprep.subr.bf16.mxu0 0
        %3003 = vmatpush1.bf16.msra.mxu0 0
        %3004 = vmatprep.subr.bf16.mxu0 0
        %3005 = vmatpush1.bf16.msra.mxu0 0
        %3006 = vmatprep.subr.bf16.mxu0 0
        %3007 = vmatpush1.bf16.msra.mxu0 0
        %3008 = vmatprep.subr.bf16.mxu0 0
        %3009 = vmatpush1.bf16.msra.mxu0 0
        %3010 = vmatprep.subr.bf16.mxu0 0
        %3011 = vmatpush1.bf16.msra.mxu0 0
        %3012 = vmatprep.subr.bf16.mxu0 0
        %3013 = vmatpush1.bf16.msra.mxu0 0
        %3014 = vmatprep.mubr.bf16.mxu0 0
        %3015 = vmatmul.mubr.bf16.gmra.mrb[0].mxu0 %v2902
        %v3016 = vpop.f32.mrb[0].mxu0
        %v3017 = vadd.f32 %v2932, %v3016
        %v3018 = vpop.f32.mrb[0].mxu0
        %v3019 = vpop.f32.mrb[0].mxu0
        %v3020 = vpop.f32.mrb[0].mxu0
        %3021 = vdwg.mxu0
        %3022 = vst [vmem:[%s359] sm:$0xff] %v3017
      $region56: #{gru_model_forward.1} parent=47 // pred_fallthru
        _
      %p3023 = scmp.lt.s32.totalorder %s22, 0
      %s3024 = scalar_select %p3023, %s22, 0
      %s3025 = smul.addr %s3024, 8
      %s3026 = scalar_lea.vmem %s7, %s3025
      // Predicated region
      $region57: #{gru_model_forward.1} parent=47 // pred_check
        %p3027 = pneg %p220
      $region58: #{gru_model_forward.1} parent=47 // pred_check_branch
        %3029 = sbr.rel (%p3027) target = $region60
      $region59: #{gru_model_forward.1} parent=47 // pred_region
        _
      $region60: #{gru_model_forward.1} parent=47 // pred_fallthru
        _
      // Predicated region
      $region61: #{gru_model_forward.1} parent=47 // pred_check
        %p3030 = pneg %p220
      $region62: #{gru_model_forward.1} parent=47 // pred_check_branch
        %3032 = sbr.rel (%p3030) target = $region64
      $region63: #{gru_model_forward.1} parent=47 // pred_region
        %p3033 = scmp.lt.s32.totalorder %s22, 0
        %s3034 = scalar_select %p3033, %s22, 0
        %s3035 = smul.addr %s3034, 8
        %s3036 = scalar_lea.vmem %s7, %s3035
      $region64: #{gru_model_forward.1} parent=47 // pred_fallthru
        _
    $region48: #{gru_model_forward.1} parent=5 // pred_fallthru
      _
    %p3037 = scmp.le.s32.totalorder 2, %s13
    // Predicated region
    $region65: #{gru_model_forward.1} parent=5 // pred_check
      %p3038 = pneg %p3037
    $region66: #{gru_model_forward.1} parent=5 // pred_check_branch
      %3040 = sbr.rel (%p3038) target = $region68
    $region67: #{gru_model_forward.1} parent=5 // pred_region
      %s3041 = ssub.s32 %s13, 2
    $region68: #{gru_model_forward.1} parent=5 // pred_fallthru
      _
  $region6: #{gru_model_forward.1} parent=0 // loop_footer
    %s17 = sadd.s32 1, %s13
  $region7: #{gru_model_forward.1} parent=0 // loop_footer_branch
    %12 = sbr.rel target = $region3
  $region8: #{gru_model_forward.1} parent=0 // loop_exit
    _

</llo_original>
